<compile_context>
chip_gen: v5e
topology: v5e:2x2
jax: 0.10.0
libtpu: 0.0.40
codegen_flags: <defaults>
</compile_context>

<pallas_src>
import functools
import math

import jax
import jax.numpy as jnp
import numpy as np
from jax.experimental import pallas as pl
from jax.experimental.pallas import tpu as pltpu


# ----------------------------- in-kernel math ------------------------------

def _layernorm(x, g, b, eps=1e-6):
    # PyTorch LayerNorm: biased variance, eps inside sqrt. f32 math.
    mu = jnp.mean(x, axis=-1, keepdims=True)
    var = jnp.mean((x - mu) ** 2, axis=-1, keepdims=True)
    return (x - mu) * jax.lax.rsqrt(var + eps) * g + b


def _gelu_tanh(x):
    # tanh-GELU: most of the work goes to the EUP slot; |delta| vs PyTorch's
    # exact erf-GELU is < ~3e-3, inside the test tolerance.
    # TODO(synk): exact erf-GELU would need a VPU erf polynomial; tanh form
    # chosen per perf review (largest elementwise tensor is the (rows, M) mid).
    c = math.sqrt(2.0 / math.pi)
    return 0.5 * x * (1.0 + jnp.tanh(c * (x + 0.044715 * (x * x * x))))


def _dot(a, b):
    return jnp.dot(a, b, preferred_element_type=jnp.float32)


# ------------------------------ Pallas kernel -------------------------------

def _encoder_kernel(num_heads, bt, mxu_dtype,
                    x_ref,
                    ln1g, ln1b, wq, bq, wk, bkr, wv, bvr, wo, bo,
                    ln2g, ln2b, w1, b1, w2, b2,
                    enc_g, enc_b, kmask,
                    out_ref,
                    ctx_ref):
    """One transformer Block per grid step; grid = (batch_block, layer).

    The residual stream (Bt*Sp rows) is carried in the VMEM-resident output
    block across the layer axis; the final encoder LayerNorm is fused into the
    last layer's epilogue.
    """
    layer = pl.program_id(1)
    n_layers = pl.num_programs(1)

    @pl.when(layer == 0)
    def _():
        out_ref[0] = x_ref[0]                    # seed the residual carry

    x = out_ref[0].astype(jnp.float32)           # (rows, H) carry, f32
    rows, hidden = x.shape
    seq = rows // bt
    head = hidden // num_heads

    # ---------------- attention branch (pre-LN) ----------------
    xn = _layernorm(x, ln1g[...], ln1b[...]).astype(mxu_dtype)
    q = _dot(xn, wq[...]) + bq[...]              # wq/bq pre-scaled by rsqrt(hd)
    kd = _dot(xn, wk[...])                       # (rows, H) f32
    vd = _dot(xn, wv[...])
    kb = bkr[...].astype(jnp.float32)            # (Sp, H): key bias + rel-pos
    vb = bvr[...].astype(jnp.float32)            # (Sp, H): value bias + rel-pos

    for b in range(bt):                          # static unroll over batch rows
        rsl = slice(b * seq, (b + 1) * seq)
        for n in range(num_heads):               # static unroll over heads
            csl = slice(n * head, (n + 1) * head)
            qh = q[rsl, csl].astype(mxu_dtype)
            kh = (kd[rsl, csl] + kb[:, csl]).astype(mxu_dtype)
            vh = (vd[rsl, csl] + vb[:, csl]).astype(mxu_dtype)
            s = jax.lax.dot_general(qh, kh, (((1,), (1,)), ((), ())),
                                    preferred_element_type=jnp.float32)
            s = s + kmask[...]                   # mask padded key columns
            m = jnp.max(s, axis=-1, keepdims=True)
            e = jnp.exp(s - m)
            r = pl.reciprocal(jnp.sum(e, axis=-1, keepdims=True), approx=True)
            probs = (e * r).astype(mxu_dtype)    # softmax; attn_dropout = id
            ctx_ref[rsl, csl] = _dot(probs, vh)  # lane-slice store of ctx_h

    # single K=H out-projection over all rows / heads (full MXU contraction)
    x = x + _dot(ctx_ref[...].astype(mxu_dtype), wo[...]) + bo[...]

    # ---------------- MLP branch (pre-LN) ----------------
    xn2 = _layernorm(x, ln2g[...], ln2b[...]).astype(mxu_dtype)
    mid = _gelu_tanh(_dot(xn2, w1[...]) + b1[...])
    x = x + _dot(mid.astype(mxu_dtype), w2[...]) + b2[...]

    out_ref[0] = x.astype(out_ref.dtype)         # carry for the next layer

    @pl.when(layer == n_layers - 1)
    def _():                                     # fused final encoder LN
        out_ref[0] = _layernorm(x, enc_g[...], enc_b[...]).astype(out_ref.dtype)


# ------------------------------ call wrapper --------------------------------

def _layer_spec(tail_shape, single_buffer=False):
    """Per-layer-stacked parameter (L, *tail): pick block `l`, squeeze L."""
    nd = len(tail_shape)
    kwargs = {}
    if single_buffer:
        # v7x guard: single-buffer huge MLP weights instead of double-buffering
        kwargs["pipeline_mode"] = pl.Buffered(1)
    return pl.BlockSpec((None,) + tuple(int(d) for d in tail_shape),
                        lambda b, l, _nd=nd: (l,) + (0,) * _nd, **kwargs)


def _const_spec(shape):
    nd = len(shape)
    return pl.BlockSpec(tuple(int(d) for d in shape),
                        lambda b, l, _nd=nd: (0,) * _nd)


def encoder_forward(x, layer_params, enc_g, enc_b, num_heads,
                    mxu_dtype=jnp.bfloat16):
    """Full Encoder forward: returns (encoded, attn_weights=[])."""
    B, S, H = x.shape
    L = len(layer_params)
    hd = H // num_heads
    M = int(layer_params[0]['w1'].shape[-1])
    f32 = jnp.float32
    scale = 1.0 / math.sqrt(hd)
    wbytes = jnp.dtype(mxu_dtype).itemsize

    # pad the sequence axis to a multiple of 16 (sublane friendly)
    Sp = ((S + 15) // 16) * 16
    pad = Sp - S

    # ----- VMEM budget (from the actual chip) and batch-block size Bt -----
    try:
        vmem_cap = int(pltpu.get_tpu_info().vmem_capacity_bytes)
    except Exception:                             # pragma: no cover
        vmem_cap = 64 << 20                       # conservative (v7x) fallback
    vmem_ceiling = int(vmem_cap * 0.8)

    per_layer_w = (4 * H * H + 2 * H * M) * wbytes              # matmul weights
    per_layer_small = 2 * Sp * H * wbytes + (10 * H + M) * 4    # biases / LN

    def _need_bytes(bt_):
        rows_ = bt_ * Sp
        act = rows_ * H * 4                                     # one x/out block
        tmp = rows_ * (8 * H + 2 * M) * 4 + 4 * Sp * Sp * 4     # q/k/v/mid/scores
        return 2 * (per_layer_w + per_layer_small) + 4 * act + tmp + (4 << 20)

    bt = 1
    for d in range(min(B, 8), 0, -1):            # largest divisor of B (<=8)
        if B % d == 0 and _need_bytes(d) <= vmem_ceiling:
            bt = d
            break
    n_b = B // bt
    rows = bt * Sp

    vmem_limit = int(min(max(_need_bytes(bt), 32 << 20), vmem_ceiling))
    single_buffer_mlp = (2 * per_layer_w) > int(0.5 * vmem_cap)

    # host-side layout: (B, Sp, H) -> (n_b, Bt*Sp, H) so each grid step gets a
    # lane-dense 2-D (rows, H) slab with no in-kernel reshapes.
    x_p = jnp.pad(x, ((0, 0), (0, pad), (0, 0))).reshape(n_b, rows, H)

    def stack(key):
        return jnp.stack([p[key] for p in layer_params], axis=0)

    # LayerNorm params / biases stay f32; matmul weights go to bf16 (MXU).
    ln1g = stack('ln1g').astype(f32)                 # (L, 1, H)
    ln1b = stack('ln1b').astype(f32)
    ln2g = stack('ln2g').astype(f32)
    ln2b = stack('ln2b').astype(f32)
    # fold the 1/sqrt(head) attention scale into the query projection
    wq = (stack('wq') * scale).astype(mxu_dtype)     # (L, H, H)
    bq = (stack('bq') * scale).astype(f32)           # (L, 1, H)
    wk = stack('wk').astype(mxu_dtype)
    wv = stack('wv').astype(mxu_dtype)
    wo = stack('wo').astype(mxu_dtype)
    w1 = stack('w1').astype(mxu_dtype)               # (L, H, M)
    w2 = stack('w2').astype(mxu_dtype)               # (L, M, H)
    bo = stack('bo').astype(f32)
    b1 = stack('b1').astype(f32)                     # (L, 1, M)
    b2 = stack('b2').astype(f32)
    # relative_pos_embedding folded into key/value biases; stored bf16 to
    # halve the per-layer (L, Sp, H) bias streams.
    rel = stack('rel').astype(f32)                   # (L, S, H)
    bk_rel = jnp.pad(stack('bk').astype(f32) + rel,
                     ((0, 0), (0, pad), (0, 0))).astype(mxu_dtype)
    bv_rel = jnp.pad(stack('bv').astype(f32) + rel,
                     ((0, 0), (0, pad), (0, 0))).astype(mxu_dtype)

    enc_g2 = jnp.asarray(enc_g, f32).reshape(1, H)
    enc_b2 = jnp.asarray(enc_b, f32).reshape(1, H)
    kmask = jnp.where(jnp.arange(Sp) < S, 0.0, -1e30).astype(f32).reshape(1, Sp)

    layer_args = [ln1g, ln1b, wq, bq, wk, bk_rel, wv, bv_rel, wo, bo,
                  ln2g, ln2b, w1, b1, w2, b2]
    mlp_weight_ids = {12, 14}                        # w1, w2
    layer_specs = [
        _layer_spec(a.shape[1:],
                    single_buffer=(i in mlp_weight_ids and single_buffer_mlp))
        for i, a in enumerate(layer_args)]
    const_args = [enc_g2, enc_b2, kmask]
    const_specs = [_const_spec(a.shape) for a in const_args]

    x_spec = pl.BlockSpec((1, rows, H), lambda b, l: (b, 0, 0))
    out_spec = pl.BlockSpec((1, rows, H), lambda b, l: (b, 0, 0))

    flops = int(2 * B * L * Sp * (4 * H * H + 2 * H * M)
                + 4 * B * L * Sp * Sp * H)
    transcend = int(B * L * Sp * (M + num_heads * Sp))
    bytes_acc = int(n_b * L * (per_layer_w + per_layer_small)
                    + 2 * B * Sp * H * 4)

    batch_sem = "parallel" if n_b > 1 else "arbitrary"

    kern = functools.partial(_encoder_kernel, num_heads, bt, mxu_dtype)
    out = pl.pallas_call(
        kern,
        out_shape=jax.ShapeDtypeStruct((n_b, rows, H), x.dtype),
        grid=(n_b, L),
        in_specs=[x_spec] + layer_specs + const_specs,
        out_specs=out_spec,
        scratch_shapes=[pltpu.VMEM((rows, H), jnp.float32)],
        input_output_aliases={0: 0},               # residual buffer is donated
        compiler_params=pltpu.CompilerParams(
            dimension_semantics=(batch_sem, "arbitrary"),
            vmem_limit_bytes=vmem_limit),
        cost_estimate=pl.CostEstimate(flops=flops,
                                      transcendentals=transcend,
                                      bytes_accessed=bytes_acc),
    )(x_p, *layer_args, *const_args)

    out = out.reshape(B, Sp, H)[:, :S, :]
    attn_weights = []        # vis=False -> Encoder returns an empty list
    return out, attn_weights


# --------------------------- pure-JAX reference -----------------------------
# Mirrors the kernel's precision policy (bf16 MXU inputs, f32 accumulation,
# f32 LayerNorm/softmax) but uses the exact (erf) GELU like PyTorch.

def _ref_ln(x, g, b, eps=1e-6):
    mu = jnp.mean(x, axis=-1, keepdims=True)
    var = jnp.mean((x - mu) ** 2, axis=-1, keepdims=True)
    return (x - mu) / jnp.sqrt(var + eps) * g + b


def _ref_block(x, p, num_heads, mxu):
    f32 = jnp.float32
    B, S, H = x.shape
    hd = H // num_heads

    def proj(a, w, eq):
        return jnp.einsum(eq, a.astype(mxu), w.astype(mxu),
                          preferred_element_type=f32)

    h = x
    xn = _ref_ln(x, p['ln1g'], p['ln1b'])
    q = proj(xn, p['wq'], 'bsh,ho->bso') + p['bq']
    k = proj(xn, p['wk'], 'bsh,ho->bso') + p['bk'] + p['rel'][None]
    v = proj(xn, p['wv'], 'bsh,ho->bso') + p['bv'] + p['rel'][None]
    split = lambda t: t.reshape(B, S, num_heads, hd).transpose(0, 2, 1, 3)
    qh, kh, vh = (split(q).astype(mxu), split(k).astype(mxu),
                  split(v).astype(mxu))
    s = jnp.einsum('bhqd,bhkd->bhqk', qh, kh,
                   preferred_element_type=f32) / math.sqrt(hd)
    probs = jax.nn.softmax(s, axis=-1)
    ctx = jnp.einsum('bhqk,bhkd->bhqd', probs.astype(mxu), vh,
                     preferred_element_type=f32)
    ctx = ctx.transpose(0, 2, 1, 3).reshape(B, S, H)
    attn = proj(ctx, p['wo'], 'bsh,ho->bso') + p['bo']
    x = h + attn
    h2 = x
    xn2 = _ref_ln(x, p['ln2g'], p['ln2b'])
    m1 = proj(xn2, p['w1'], 'bsh,hm->bsm') + p['b1']
    m1 = jax.nn.gelu(m1, approximate=False)
    m2 = proj(m1, p['w2'], 'bsm,mh->bsh') + p['b2']
    return h2 + m2


def _ref_encoder(x, layer_params, enc_g, enc_b, num_heads, mxu):
    for p in layer_params:
        x = _ref_block(x, p, num_heads, mxu)
    return _ref_ln(x, jnp.asarray(enc_g).reshape(1, -1),
                   jnp.asarray(enc_b).reshape(1, -1))


# ------------------------------ param init ----------------------------------

def init_layer_params(key, H, M, S):
    ks = jax.random.split(key, 9)
    f32 = jnp.float32

    def xavier(k, shape):
        fan_in, fan_out = shape
        lim = math.sqrt(6.0 / (fan_in + fan_out))
        return jax.random.uniform(k, shape, f32, -lim, lim)

    return dict(
        ln1g=jnp.ones((1, H), f32), ln1b=jnp.zeros((1, H), f32),
        wq=xavier(ks[0], (H, H)), bq=jnp.zeros((1, H), f32),
        wk=xavier(ks[1], (H, H)), bk=jnp.zeros((1, H), f32),
        wv=xavier(ks[2], (H, H)), bv=jnp.zeros((1, H), f32),
        # relative_pos_embedding is a frozen buffer (zeros in the PyTorch
        # module); small random values here so the test exercises the path.
        rel=jax.random.normal(ks[8], (S, H), f32) * 0.02,
        wo=xavier(ks[3], (H, H)), bo=jnp.zeros((1, H), f32),
        ln2g=jnp.ones((1, H), f32), ln2b=jnp.zeros((1, H), f32),
        w1=xavier(ks[4], (H, M)),
        b1=(jax.random.normal(ks[5], (1, M), f32) * 1e-6),
        w2=xavier(ks[6], (M, H)),
        b2=(jax.random.normal(ks[7], (1, H), f32) * 1e-6),
    )


# ---------------------------------- main -------------------------------------

if __name__ == "__main__":
    # Small TPU-friendly config: hidden_size=128 (lane-dense), num_heads=4,
    # mlp_dim=256, num_layers=2, img_size=28, patch=4 -> n_patches=49, S=50.
    H, num_heads, M, num_layers = 128, 4, 256, 2
    img_size, patch = 28, 4
    n_patches = (img_size // patch) * (img_size // patch)
    S = n_patches + 1
    B = 2

    root = jax.random.PRNGKey(0)
    kx, kp = jax.random.split(root)
    x = jax.random.normal(kx, (B, S, H), jnp.float32)

    layer_keys = jax.random.split(kp, num_layers)
    layer_params = [init_layer_params(layer_keys[i], H, M, S)
                    for i in range(num_layers)]
    enc_g = jnp.ones((1, H), jnp.float32)
    enc_b = jnp.zeros((1, H), jnp.float32)

    encoded, attn_weights = encoder_forward(x, layer_params, enc_g, enc_b,
                                            num_heads)
    encoded = jax.block_until_ready(encoded)

    # correctness check against a precision-matched pure-JAX reference
    ref = _ref_encoder(x, layer_params, enc_g, enc_b, num_heads, jnp.bfloat16)
    np.testing.assert_allclose(np.asarray(encoded), np.asarray(ref),
                               rtol=2.5e-2, atol=2.5e-2)
    assert encoded.shape == (B, S, H) and attn_weights == []

    # TODO(synk): Dropout layers are inference no-ops; training-mode dropout
    # masks are not implemented.
    print("KERNEL_OK")
</pallas_src>

<mosaic_0001>
module attributes {stable_mosaic.version = 11 : i64} {
  func.func @_encoder_kernel(%arg0: i32, %arg1: i32, %arg2: memref<1x128x128xf32, #tpu.memory_space<vmem>>, %arg3: memref<1x1x128xf32, #tpu.memory_space<vmem>>, %arg4: memref<1x1x128xf32, #tpu.memory_space<vmem>>, %arg5: memref<1x128x128xbf16, #tpu.memory_space<vmem>>, %arg6: memref<1x1x128xf32, #tpu.memory_space<vmem>>, %arg7: memref<1x128x128xbf16, #tpu.memory_space<vmem>>, %arg8: memref<1x64x128xbf16, #tpu.memory_space<vmem>>, %arg9: memref<1x128x128xbf16, #tpu.memory_space<vmem>>, %arg10: memref<1x64x128xbf16, #tpu.memory_space<vmem>>, %arg11: memref<1x128x128xbf16, #tpu.memory_space<vmem>>, %arg12: memref<1x1x128xf32, #tpu.memory_space<vmem>>, %arg13: memref<1x1x128xf32, #tpu.memory_space<vmem>>, %arg14: memref<1x1x128xf32, #tpu.memory_space<vmem>>, %arg15: memref<1x128x256xbf16, #tpu.memory_space<vmem>>, %arg16: memref<1x1x256xf32, #tpu.memory_space<vmem>>, %arg17: memref<1x256x128xbf16, #tpu.memory_space<vmem>>, %arg18: memref<1x1x128xf32, #tpu.memory_space<vmem>>, %arg19: memref<1x128xf32, #tpu.memory_space<vmem>>, %arg20: memref<1x128xf32, #tpu.memory_space<vmem>>, %arg21: memref<1x64xf32, #tpu.memory_space<vmem>>, %arg22: memref<1x128x128xf32, #tpu.memory_space<vmem>>, %arg23: memref<128x128xf32, #tpu.memory_space<vmem>>) attributes {dimension_semantics = [#tpu.dimension_semantics<arbitrary>, #tpu.dimension_semantics<arbitrary>], iteration_bounds = array<i64: 1, 2>, scalar_prefetch = 0 : i64, scratch_operands = 1 : i64, tpu.core_type = #tpu.core_type<tc>, window_params = [{transform_indices = @transform_0, window_bounds = array<i64: 1, 128, 128>}, {transform_indices = @transform_1, window_bounds = array<i64: 1, 1, 128>}, {transform_indices = @transform_2, window_bounds = array<i64: 1, 1, 128>}, {transform_indices = @transform_3, window_bounds = array<i64: 1, 128, 128>}, {transform_indices = @transform_4, window_bounds = array<i64: 1, 1, 128>}, {transform_indices = @transform_5, window_bounds = array<i64: 1, 128, 128>}, {transform_indices = @transform_6, window_bounds = array<i64: 1, 64, 128>}, {transform_indices = @transform_7, window_bounds = array<i64: 1, 128, 128>}, {transform_indices = @transform_8, window_bounds = array<i64: 1, 64, 128>}, {transform_indices = @transform_9, window_bounds = array<i64: 1, 128, 128>}, {transform_indices = @transform_10, window_bounds = array<i64: 1, 1, 128>}, {transform_indices = @transform_11, window_bounds = array<i64: 1, 1, 128>}, {transform_indices = @transform_12, window_bounds = array<i64: 1, 1, 128>}, {transform_indices = @transform_13, window_bounds = array<i64: 1, 128, 256>}, {transform_indices = @transform_14, window_bounds = array<i64: 1, 1, 256>}, {transform_indices = @transform_15, window_bounds = array<i64: 1, 256, 128>}, {transform_indices = @transform_16, window_bounds = array<i64: 1, 1, 128>}, {pipeline_mode = #tpu.pipeline_mode<synchronous>, transform_indices = @transform_17, window_bounds = array<i64: 1, 128>}, {pipeline_mode = #tpu.pipeline_mode<synchronous>, transform_indices = @transform_18, window_bounds = array<i64: 1, 128>}, {pipeline_mode = #tpu.pipeline_mode<synchronous>, transform_indices = @transform_19, window_bounds = array<i64: 1, 64>}, {transform_indices = @transform_20, window_bounds = array<i64: 1, 128, 128>}]} {
    %c0_i32 = arith.constant 0 : i32
    %0 = arith.cmpi eq, %arg1, %c0_i32 : i32
    %1 = arith.extui %0 : i1 to i32
    %c0_i32_0 = arith.constant 0 : i32
    %2 = arith.cmpi ne, %1, %c0_i32_0 : i32
    scf.if %2 {
      %c0_137 = arith.constant 0 : index
      %c0_138 = arith.constant 0 : index
      %c0_139 = arith.constant 0 : index
      %339 = vector.load %arg2[%c0_137, %c0_138, %c0_139] : memref<1x128x128xf32, #tpu.memory_space<vmem>>, vector<1x128x128xf32>
      %340 = vector.shape_cast %339 : vector<1x128x128xf32> to vector<128x128xf32>
      %c0_140 = arith.constant 0 : index
      %c0_141 = arith.constant 0 : index
      %c0_142 = arith.constant 0 : index
      %341 = vector.load %arg22[%c0_140, %c0_141, %c0_142] : memref<1x128x128xf32, #tpu.memory_space<vmem>>, vector<1x128x128xf32>
      %342 = vector.shape_cast %341 : vector<1x128x128xf32> to vector<128x128xf32>
      %343 = vector.shape_cast %340 : vector<128x128xf32> to vector<1x128x128xf32>
      tpu.vector_store %arg22[%c0_140, %c0_141, %c0_142], %343 {strides = array<i32>} : memref<1x128x128xf32, #tpu.memory_space<vmem>>, vector<1x128x128xf32>,
    } else {
    }
    %c0 = arith.constant 0 : index
    %c0_1 = arith.constant 0 : index
    %c0_2 = arith.constant 0 : index
    %3 = vector.load %arg22[%c0, %c0_1, %c0_2] : memref<1x128x128xf32, #tpu.memory_space<vmem>>, vector<1x128x128xf32>
    %4 = vector.shape_cast %3 : vector<1x128x128xf32> to vector<128x128xf32>
    %c0_3 = arith.constant 0 : index
    %c0_4 = arith.constant 0 : index
    %c0_5 = arith.constant 0 : index
    %5 = vector.load %arg3[%c0_3, %c0_4, %c0_5] : memref<1x1x128xf32, #tpu.memory_space<vmem>>, vector<1x1x128xf32>
    %6 = vector.shape_cast %5 : vector<1x1x128xf32> to vector<1x128xf32>
    %c0_6 = arith.constant 0 : index
    %c0_7 = arith.constant 0 : index
    %c0_8 = arith.constant 0 : index
    %7 = vector.load %arg4[%c0_6, %c0_7, %c0_8] : memref<1x1x128xf32, #tpu.memory_space<vmem>>, vector<1x1x128xf32>
    %8 = vector.shape_cast %7 : vector<1x1x128xf32> to vector<1x128xf32>
    %cst = arith.constant dense<0.000000e+00> : vector<128xf32>
    %9 = vector.multi_reduction <add>, %4, %cst [1] : vector<128x128xf32> to vector<128xf32>
    %10 = vector.shape_cast %9 : vector<128xf32> to vector<128x1xf32>
    %cst_9 = arith.constant 1.280000e+02 : f32
    %11 = vector.broadcast %cst_9 : f32 to vector<128x1xf32>
    %12 = arith.divf %10, %11 : vector<128x1xf32>
    %13 = vector.broadcast %12 : vector<128x1xf32> to vector<128x128xf32>
    %14 = arith.subf %4, %13 : vector<128x128xf32>
    %15 = arith.mulf %14, %14 : vector<128x128xf32>
    %cst_10 = arith.constant dense<0.000000e+00> : vector<128xf32>
    %16 = vector.multi_reduction <add>, %15, %cst_10 [1] : vector<128x128xf32> to vector<128xf32>
    %17 = vector.shape_cast %16 : vector<128xf32> to vector<128x1xf32>
    %cst_11 = arith.constant 1.280000e+02 : f32
    %18 = vector.broadcast %cst_11 : f32 to vector<128x1xf32>
    %19 = arith.divf %17, %18 : vector<128x1xf32>
    %20 = vector.broadcast %12 : vector<128x1xf32> to vector<128x128xf32>
    %21 = arith.subf %4, %20 : vector<128x128xf32>
    %cst_12 = arith.constant 9.99999997E-7 : f32
    %22 = vector.broadcast %cst_12 : f32 to vector<128x1xf32>
    %23 = arith.addf %19, %22 : vector<128x1xf32>
    %24 = math.rsqrt %23 : vector<128x1xf32>
    %25 = vector.broadcast %24 : vector<128x1xf32> to vector<128x128xf32>
    %26 = arith.mulf %21, %25 : vector<128x128xf32>
    %27 = vector.broadcast %6 : vector<1x128xf32> to vector<128x128xf32>
    %28 = arith.mulf %26, %27 : vector<128x128xf32>
    %29 = vector.broadcast %8 : vector<1x128xf32> to vector<128x128xf32>
    %30 = arith.addf %28, %29 : vector<128x128xf32>
    %31 = arith.truncf %30 : vector<128x128xf32> to vector<128x128xbf16>
    %c0_13 = arith.constant 0 : index
    %c0_14 = arith.constant 0 : index
    %c0_15 = arith.constant 0 : index
    %32 = vector.load %arg5[%c0_13, %c0_14, %c0_15] : memref<1x128x128xbf16, #tpu.memory_space<vmem>>, vector<1x128x128xbf16>
    %33 = vector.shape_cast %32 : vector<1x128x128xbf16> to vector<128x128xbf16>
    %cst_16 = arith.constant dense<0.000000e+00> : vector<128x128xf32>
    %34 = tpu.matmul %31, %33, %cst_16 {dimension_numbers = #tpu.dot_dimension_numbers<[1], [0], [0], [1], [0, 0, 1, 1], [], []>} : vector<128x128xbf16>, vector<128x128xbf16>, vector<128x128xf32> -> vector<128x128xf32>
    %c0_17 = arith.constant 0 : index
    %c0_18 = arith.constant 0 : index
    %c0_19 = arith.constant 0 : index
    %35 = vector.load %arg6[%c0_17, %c0_18, %c0_19] : memref<1x1x128xf32, #tpu.memory_space<vmem>>, vector<1x1x128xf32>
    %36 = vector.shape_cast %35 : vector<1x1x128xf32> to vector<1x128xf32>
    %37 = vector.broadcast %36 : vector<1x128xf32> to vector<128x128xf32>
    %38 = arith.addf %34, %37 : vector<128x128xf32>
    %c0_20 = arith.constant 0 : index
    %c0_21 = arith.constant 0 : index
    %c0_22 = arith.constant 0 : index
    %39 = vector.load %arg7[%c0_20, %c0_21, %c0_22] : memref<1x128x128xbf16, #tpu.memory_space<vmem>>, vector<1x128x128xbf16>
    %40 = vector.shape_cast %39 : vector<1x128x128xbf16> to vector<128x128xbf16>
    %cst_23 = arith.constant dense<0.000000e+00> : vector<128x128xf32>
    %41 = tpu.matmul %31, %40, %cst_23 {dimension_numbers = #tpu.dot_dimension_numbers<[1], [0], [0], [1], [0, 0, 1, 1], [], []>} : vector<128x128xbf16>, vector<128x128xbf16>, vector<128x128xf32> -> vector<128x128xf32>
    %c0_24 = arith.constant 0 : index
    %c0_25 = arith.constant 0 : index
    %c0_26 = arith.constant 0 : index
    %42 = vector.load %arg9[%c0_24, %c0_25, %c0_26] : memref<1x128x128xbf16, #tpu.memory_space<vmem>>, vector<1x128x128xbf16>
    %43 = vector.shape_cast %42 : vector<1x128x128xbf16> to vector<128x128xbf16>
    %cst_27 = arith.constant dense<0.000000e+00> : vector<128x128xf32>
    %44 = tpu.matmul %31, %43, %cst_27 {dimension_numbers = #tpu.dot_dimension_numbers<[1], [0], [0], [1], [0, 0, 1, 1], [], []>} : vector<128x128xbf16>, vector<128x128xbf16>, vector<128x128xf32> -> vector<128x128xf32>
    %c0_28 = arith.constant 0 : index
    %c0_29 = arith.constant 0 : index
    %c0_30 = arith.constant 0 : index
    %45 = vector.load %arg8[%c0_28, %c0_29, %c0_30] : memref<1x64x128xbf16, #tpu.memory_space<vmem>>, vector<1x64x128xbf16>
    %46 = vector.shape_cast %45 : vector<1x64x128xbf16> to vector<64x128xbf16>
    %47 = arith.extf %46 : vector<64x128xbf16> to vector<64x128xf32>
    %c0_31 = arith.constant 0 : index
    %c0_32 = arith.constant 0 : index
    %c0_33 = arith.constant 0 : index
    %48 = vector.load %arg10[%c0_31, %c0_32, %c0_33] : memref<1x64x128xbf16, #tpu.memory_space<vmem>>, vector<1x64x128xbf16>
    %49 = vector.shape_cast %48 : vector<1x64x128xbf16> to vector<64x128xbf16>
    %50 = arith.extf %49 : vector<64x128xbf16> to vector<64x128xf32>
    %51 = vector.extract_strided_slice %38 {offsets = [0, 0], sizes = [64, 32], strides = [1, 1]} : vector<128x128xf32> to vector<64x32xf32>
    %52 = arith.truncf %51 : vector<64x32xf32> to vector<64x32xbf16>
    %53 = vector.extract_strided_slice %41 {offsets = [0, 0], sizes = [64, 32], strides = [1, 1]} : vector<128x128xf32> to vector<64x32xf32>
    %54 = vector.extract_strided_slice %47 {offsets = [0, 0], sizes = [64, 32], strides = [1, 1]} : vector<64x128xf32> to vector<64x32xf32>
    %55 = arith.addf %53, %54 : vector<64x32xf32>
    %56 = arith.truncf %55 : vector<64x32xf32> to vector<64x32xbf16>
    %57 = vector.extract_strided_slice %44 {offsets = [0, 0], sizes = [64, 32], strides = [1, 1]} : vector<128x128xf32> to vector<64x32xf32>
    %58 = vector.extract_strided_slice %50 {offsets = [0, 0], sizes = [64, 32], strides = [1, 1]} : vector<64x128xf32> to vector<64x32xf32>
    %59 = arith.addf %57, %58 : vector<64x32xf32>
    %60 = arith.truncf %59 : vector<64x32xf32> to vector<64x32xbf16>
    %cst_34 = arith.constant dense<0.000000e+00> : vector<64x64xf32>
    %61 = tpu.matmul %52, %56, %cst_34 {dimension_numbers = #tpu.dot_dimension_numbers<[1], [1], [0], [0], [0, 0, 1, 0], [], []>} : vector<64x32xbf16>, vector<64x32xbf16>, vector<64x64xf32> -> vector<64x64xf32>
    %c0_35 = arith.constant 0 : index
    %c0_36 = arith.constant 0 : index
    %62 = vector.load %arg21[%c0_35, %c0_36] : memref<1x64xf32, #tpu.memory_space<vmem>>, vector<1x64xf32>
    %63 = vector.broadcast %62 : vector<1x64xf32> to vector<64x64xf32>
    %64 = arith.addf %61, %63 : vector<64x64xf32>
    %cst_37 = arith.constant dense<0xFF800000> : vector<64xf32>
    %65 = vector.multi_reduction <maximumf>, %64, %cst_37 [1] : vector<64x64xf32> to vector<64xf32>
    %66 = vector.shape_cast %65 : vector<64xf32> to vector<64x1xf32>
    %67 = vector.broadcast %66 : vector<64x1xf32> to vector<64x64xf32>
    %68 = arith.subf %64, %67 : vector<64x64xf32>
    %69 = math.exp %68 : vector<64x64xf32>
    %cst_38 = arith.constant dense<0.000000e+00> : vector<64xf32>
    %70 = vector.multi_reduction <add>, %69, %cst_38 [1] : vector<64x64xf32> to vector<64xf32>
    %71 = vector.shape_cast %70 : vector<64xf32> to vector<64x1xf32>
    %72 = tpu.reciprocal %71 {approx = true} : vector<64x1xf32> -> vector<64x1xf32>
    %73 = vector.broadcast %72 : vector<64x1xf32> to vector<64x64xf32>
    %74 = arith.mulf %69, %73 : vector<64x64xf32>
    %75 = arith.truncf %74 : vector<64x64xf32> to vector<64x64xbf16>
    %cst_39 = arith.constant dense<0.000000e+00> : vector<64x32xf32>
    %76 = tpu.matmul %75, %60, %cst_39 {dimension_numbers = #tpu.dot_dimension_numbers<[1], [0], [0], [1], [0, 0, 1, 1], [], []>} : vector<64x64xbf16>, vector<64x32xbf16>, vector<64x32xf32> -> vector<64x32xf32>
    %c0_40 = arith.constant 0 : index
    %c0_41 = arith.constant 0 : index
    %77 = vector.load %arg23[%c0_40, %c0_41] : memref<128x128xf32, #tpu.memory_space<vmem>>, vector<64x32xf32>
    tpu.vector_store %arg23[%c0_40, %c0_41], %76 {strides = array<i32>} : memref<128x128xf32, #tpu.memory_space<vmem>>, vector<64x32xf32>,
    %78 = vector.extract_strided_slice %38 {offsets = [0, 32], sizes = [64, 32], strides = [1, 1]} : vector<128x128xf32> to vector<64x32xf32>
    %79 = arith.truncf %78 : vector<64x32xf32> to vector<64x32xbf16>
    %80 = vector.extract_strided_slice %41 {offsets = [0, 32], sizes = [64, 32], strides = [1, 1]} : vector<128x128xf32> to vector<64x32xf32>
    %81 = vector.extract_strided_slice %47 {offsets = [0, 32], sizes = [64, 32], strides = [1, 1]} : vector<64x128xf32> to vector<64x32xf32>
    %82 = arith.addf %80, %81 : vector<64x32xf32>
    %83 = arith.truncf %82 : vector<64x32xf32> to vector<64x32xbf16>
    %84 = vector.extract_strided_slice %44 {offsets = [0, 32], sizes = [64, 32], strides = [1, 1]} : vector<128x128xf32> to vector<64x32xf32>
    %85 = vector.extract_strided_slice %50 {offsets = [0, 32], sizes = [64, 32], strides = [1, 1]} : vector<64x128xf32> to vector<64x32xf32>
    %86 = arith.addf %84, %85 : vector<64x32xf32>
    %87 = arith.truncf %86 : vector<64x32xf32> to vector<64x32xbf16>
    %cst_42 = arith.constant dense<0.000000e+00> : vector<64x64xf32>
    %88 = tpu.matmul %79, %83, %cst_42 {dimension_numbers = #tpu.dot_dimension_numbers<[1], [1], [0], [0], [0, 0, 1, 0], [], []>} : vector<64x32xbf16>, vector<64x32xbf16>, vector<64x64xf32> -> vector<64x64xf32>
    %c0_43 = arith.constant 0 : index
    %c0_44 = arith.constant 0 : index
    %89 = vector.load %arg21[%c0_43, %c0_44] : memref<1x64xf32, #tpu.memory_space<vmem>>, vector<1x64xf32>
    %90 = vector.broadcast %89 : vector<1x64xf32> to vector<64x64xf32>
    %91 = arith.addf %88, %90 : vector<64x64xf32>
    %cst_45 = arith.constant dense<0xFF800000> : vector<64xf32>
    %92 = vector.multi_reduction <maximumf>, %91, %cst_45 [1] : vector<64x64xf32> to vector<64xf32>
    %93 = vector.shape_cast %92 : vector<64xf32> to vector<64x1xf32>
    %94 = vector.broadcast %93 : vector<64x1xf32> to vector<64x64xf32>
    %95 = arith.subf %91, %94 : vector<64x64xf32>
    %96 = math.exp %95 : vector<64x64xf32>
    %cst_46 = arith.constant dense<0.000000e+00> : vector<64xf32>
    %97 = vector.multi_reduction <add>, %96, %cst_46 [1] : vector<64x64xf32> to vector<64xf32>
    %98 = vector.shape_cast %97 : vector<64xf32> to vector<64x1xf32>
    %99 = tpu.reciprocal %98 {approx = true} : vector<64x1xf32> -> vector<64x1xf32>
    %100 = vector.broadcast %99 : vector<64x1xf32> to vector<64x64xf32>
    %101 = arith.mulf %96, %100 : vector<64x64xf32>
    %102 = arith.truncf %101 : vector<64x64xf32> to vector<64x64xbf16>
    %cst_47 = arith.constant dense<0.000000e+00> : vector<64x32xf32>
    %103 = tpu.matmul %102, %87, %cst_47 {dimension_numbers = #tpu.dot_dimension_numbers<[1], [0], [0], [1], [0, 0, 1, 1], [], []>} : vector<64x64xbf16>, vector<64x32xbf16>, vector<64x32xf32> -> vector<64x32xf32>
    %c0_48 = arith.constant 0 : index
    %c32 = arith.constant 32 : index
    %104 = vector.load %arg23[%c0_48, %c32] : memref<128x128xf32, #tpu.memory_space<vmem>>, vector<64x32xf32>
    tpu.vector_store %arg23[%c0_48, %c32], %103 {strides = array<i32>} : memref<128x128xf32, #tpu.memory_space<vmem>>, vector<64x32xf32>,
    %105 = vector.extract_strided_slice %38 {offsets = [0, 64], sizes = [64, 32], strides = [1, 1]} : vector<128x128xf32> to vector<64x32xf32>
    %106 = arith.truncf %105 : vector<64x32xf32> to vector<64x32xbf16>
    %107 = vector.extract_strided_slice %41 {offsets = [0, 64], sizes = [64, 32], strides = [1, 1]} : vector<128x128xf32> to vector<64x32xf32>
    %108 = vector.extract_strided_slice %47 {offsets = [0, 64], sizes = [64, 32], strides = [1, 1]} : vector<64x128xf32> to vector<64x32xf32>
    %109 = arith.addf %107, %108 : vector<64x32xf32>
    %110 = arith.truncf %109 : vector<64x32xf32> to vector<64x32xbf16>
    %111 = vector.extract_strided_slice %44 {offsets = [0, 64], sizes = [64, 32], strides = [1, 1]} : vector<128x128xf32> to vector<64x32xf32>
    %112 = vector.extract_strided_slice %50 {offsets = [0, 64], sizes = [64, 32], strides = [1, 1]} : vector<64x128xf32> to vector<64x32xf32>
    %113 = arith.addf %111, %112 : vector<64x32xf32>
    %114 = arith.truncf %113 : vector<64x32xf32> to vector<64x32xbf16>
    %cst_49 = arith.constant dense<0.000000e+00> : vector<64x64xf32>
    %115 = tpu.matmul %106, %110, %cst_49 {dimension_numbers = #tpu.dot_dimension_numbers<[1], [1], [0], [0], [0, 0, 1, 0], [], []>} : vector<64x32xbf16>, vector<64x32xbf16>, vector<64x64xf32> -> vector<64x64xf32>
    %c0_50 = arith.constant 0 : index
    %c0_51 = arith.constant 0 : index
    %116 = vector.load %arg21[%c0_50, %c0_51] : memref<1x64xf32, #tpu.memory_space<vmem>>, vector<1x64xf32>
    %117 = vector.broadcast %116 : vector<1x64xf32> to vector<64x64xf32>
    %118 = arith.addf %115, %117 : vector<64x64xf32>
    %cst_52 = arith.constant dense<0xFF800000> : vector<64xf32>
    %119 = vector.multi_reduction <maximumf>, %118, %cst_52 [1] : vector<64x64xf32> to vector<64xf32>
    %120 = vector.shape_cast %119 : vector<64xf32> to vector<64x1xf32>
    %121 = vector.broadcast %120 : vector<64x1xf32> to vector<64x64xf32>
    %122 = arith.subf %118, %121 : vector<64x64xf32>
    %123 = math.exp %122 : vector<64x64xf32>
    %cst_53 = arith.constant dense<0.000000e+00> : vector<64xf32>
    %124 = vector.multi_reduction <add>, %123, %cst_53 [1] : vector<64x64xf32> to vector<64xf32>
    %125 = vector.shape_cast %124 : vector<64xf32> to vector<64x1xf32>
    %126 = tpu.reciprocal %125 {approx = true} : vector<64x1xf32> -> vector<64x1xf32>
    %127 = vector.broadcast %126 : vector<64x1xf32> to vector<64x64xf32>
    %128 = arith.mulf %123, %127 : vector<64x64xf32>
    %129 = arith.truncf %128 : vector<64x64xf32> to vector<64x64xbf16>
    %cst_54 = arith.constant dense<0.000000e+00> : vector<64x32xf32>
    %130 = tpu.matmul %129, %114, %cst_54 {dimension_numbers = #tpu.dot_dimension_numbers<[1], [0], [0], [1], [0, 0, 1, 1], [], []>} : vector<64x64xbf16>, vector<64x32xbf16>, vector<64x32xf32> -> vector<64x32xf32>
    %c0_55 = arith.constant 0 : index
    %c64 = arith.constant 64 : index
    %131 = vector.load %arg23[%c0_55, %c64] : memref<128x128xf32, #tpu.memory_space<vmem>>, vector<64x32xf32>
    tpu.vector_store %arg23[%c0_55, %c64], %130 {strides = array<i32>} : memref<128x128xf32, #tpu.memory_space<vmem>>, vector<64x32xf32>,
    %132 = vector.extract_strided_slice %38 {offsets = [0, 96], sizes = [64, 32], strides = [1, 1]} : vector<128x128xf32> to vector<64x32xf32>
    %133 = arith.truncf %132 : vector<64x32xf32> to vector<64x32xbf16>
    %134 = vector.extract_strided_slice %41 {offsets = [0, 96], sizes = [64, 32], strides = [1, 1]} : vector<128x128xf32> to vector<64x32xf32>
    %135 = vector.extract_strided_slice %47 {offsets = [0, 96], sizes = [64, 32], strides = [1, 1]} : vector<64x128xf32> to vector<64x32xf32>
    %136 = arith.addf %134, %135 : vector<64x32xf32>
    %137 = arith.truncf %136 : vector<64x32xf32> to vector<64x32xbf16>
    %138 = vector.extract_strided_slice %44 {offsets = [0, 96], sizes = [64, 32], strides = [1, 1]} : vector<128x128xf32> to vector<64x32xf32>
    %139 = vector.extract_strided_slice %50 {offsets = [0, 96], sizes = [64, 32], strides = [1, 1]} : vector<64x128xf32> to vector<64x32xf32>
    %140 = arith.addf %138, %139 : vector<64x32xf32>
    %141 = arith.truncf %140 : vector<64x32xf32> to vector<64x32xbf16>
    %cst_56 = arith.constant dense<0.000000e+00> : vector<64x64xf32>
    %142 = tpu.matmul %133, %137, %cst_56 {dimension_numbers = #tpu.dot_dimension_numbers<[1], [1], [0], [0], [0, 0, 1, 0], [], []>} : vector<64x32xbf16>, vector<64x32xbf16>, vector<64x64xf32> -> vector<64x64xf32>
    %c0_57 = arith.constant 0 : index
    %c0_58 = arith.constant 0 : index
    %143 = vector.load %arg21[%c0_57, %c0_58] : memref<1x64xf32, #tpu.memory_space<vmem>>, vector<1x64xf32>
    %144 = vector.broadcast %143 : vector<1x64xf32> to vector<64x64xf32>
    %145 = arith.addf %142, %144 : vector<64x64xf32>
    %cst_59 = arith.constant dense<0xFF800000> : vector<64xf32>
    %146 = vector.multi_reduction <maximumf>, %145, %cst_59 [1] : vector<64x64xf32> to vector<64xf32>
    %147 = vector.shape_cast %146 : vector<64xf32> to vector<64x1xf32>
    %148 = vector.broadcast %147 : vector<64x1xf32> to vector<64x64xf32>
    %149 = arith.subf %145, %148 : vector<64x64xf32>
    %150 = math.exp %149 : vector<64x64xf32>
    %cst_60 = arith.constant dense<0.000000e+00> : vector<64xf32>
    %151 = vector.multi_reduction <add>, %150, %cst_60 [1] : vector<64x64xf32> to vector<64xf32>
    %152 = vector.shape_cast %151 : vector<64xf32> to vector<64x1xf32>
    %153 = tpu.reciprocal %152 {approx = true} : vector<64x1xf32> -> vector<64x1xf32>
    %154 = vector.broadcast %153 : vector<64x1xf32> to vector<64x64xf32>
    %155 = arith.mulf %150, %154 : vector<64x64xf32>
    %156 = arith.truncf %155 : vector<64x64xf32> to vector<64x64xbf16>
    %cst_61 = arith.constant dense<0.000000e+00> : vector<64x32xf32>
    %157 = tpu.matmul %156, %141, %cst_61 {dimension_numbers = #tpu.dot_dimension_numbers<[1], [0], [0], [1], [0, 0, 1, 1], [], []>} : vector<64x64xbf16>, vector<64x32xbf16>, vector<64x32xf32> -> vector<64x32xf32>
    %c0_62 = arith.constant 0 : index
    %c96 = arith.constant 96 : index
    %158 = vector.load %arg23[%c0_62, %c96] : memref<128x128xf32, #tpu.memory_space<vmem>>, vector<64x32xf32>
    tpu.vector_store %arg23[%c0_62, %c96], %157 {strides = array<i32>} : memref<128x128xf32, #tpu.memory_space<vmem>>, vector<64x32xf32>,
    %159 = vector.extract_strided_slice %38 {offsets = [64, 0], sizes = [64, 32], strides = [1, 1]} : vector<128x128xf32> to vector<64x32xf32>
    %160 = arith.truncf %159 : vector<64x32xf32> to vector<64x32xbf16>
    %161 = vector.extract_strided_slice %41 {offsets = [64, 0], sizes = [64, 32], strides = [1, 1]} : vector<128x128xf32> to vector<64x32xf32>
    %162 = vector.extract_strided_slice %47 {offsets = [0, 0], sizes = [64, 32], strides = [1, 1]} : vector<64x128xf32> to vector<64x32xf32>
    %163 = arith.addf %161, %162 : vector<64x32xf32>
    %164 = arith.truncf %163 : vector<64x32xf32> to vector<64x32xbf16>
    %165 = vector.extract_strided_slice %44 {offsets = [64, 0], sizes = [64, 32], strides = [1, 1]} : vector<128x128xf32> to vector<64x32xf32>
    %166 = vector.extract_strided_slice %50 {offsets = [0, 0], sizes = [64, 32], strides = [1, 1]} : vector<64x128xf32> to vector<64x32xf32>
    %167 = arith.addf %165, %166 : vector<64x32xf32>
    %168 = arith.truncf %167 : vector<64x32xf32> to vector<64x32xbf16>
    %cst_63 = arith.constant dense<0.000000e+00> : vector<64x64xf32>
    %169 = tpu.matmul %160, %164, %cst_63 {dimension_numbers = #tpu.dot_dimension_numbers<[1], [1], [0], [0], [0, 0, 1, 0], [], []>} : vector<64x32xbf16>, vector<64x32xbf16>, vector<64x64xf32> -> vector<64x64xf32>
    %c0_64 = arith.constant 0 : index
    %c0_65 = arith.constant 0 : index
    %170 = vector.load %arg21[%c0_64, %c0_65] : memref<1x64xf32, #tpu.memory_space<vmem>>, vector<1x64xf32>
    %171 = vector.broadcast %170 : vector<1x64xf32> to vector<64x64xf32>
    %172 = arith.addf %169, %171 : vector<64x64xf32>
    %cst_66 = arith.constant dense<0xFF800000> : vector<64xf32>
    %173 = vector.multi_reduction <maximumf>, %172, %cst_66 [1] : vector<64x64xf32> to vector<64xf32>
    %174 = vector.shape_cast %173 : vector<64xf32> to vector<64x1xf32>
    %175 = vector.broadcast %174 : vector<64x1xf32> to vector<64x64xf32>
    %176 = arith.subf %172, %175 : vector<64x64xf32>
    %177 = math.exp %176 : vector<64x64xf32>
    %cst_67 = arith.constant dense<0.000000e+00> : vector<64xf32>
    %178 = vector.multi_reduction <add>, %177, %cst_67 [1] : vector<64x64xf32> to vector<64xf32>
    %179 = vector.shape_cast %178 : vector<64xf32> to vector<64x1xf32>
    %180 = tpu.reciprocal %179 {approx = true} : vector<64x1xf32> -> vector<64x1xf32>
    %181 = vector.broadcast %180 : vector<64x1xf32> to vector<64x64xf32>
    %182 = arith.mulf %177, %181 : vector<64x64xf32>
    %183 = arith.truncf %182 : vector<64x64xf32> to vector<64x64xbf16>
    %cst_68 = arith.constant dense<0.000000e+00> : vector<64x32xf32>
    %184 = tpu.matmul %183, %168, %cst_68 {dimension_numbers = #tpu.dot_dimension_numbers<[1], [0], [0], [1], [0, 0, 1, 1], [], []>} : vector<64x64xbf16>, vector<64x32xbf16>, vector<64x32xf32> -> vector<64x32xf32>
    %c64_69 = arith.constant 64 : index
    %c0_70 = arith.constant 0 : index
    %185 = vector.load %arg23[%c64_69, %c0_70] : memref<128x128xf32, #tpu.memory_space<vmem>>, vector<64x32xf32>
    tpu.vector_store %arg23[%c64_69, %c0_70], %184 {strides = array<i32>} : memref<128x128xf32, #tpu.memory_space<vmem>>, vector<64x32xf32>,
    %186 = vector.extract_strided_slice %38 {offsets = [64, 32], sizes = [64, 32], strides = [1, 1]} : vector<128x128xf32> to vector<64x32xf32>
    %187 = arith.truncf %186 : vector<64x32xf32> to vector<64x32xbf16>
    %188 = vector.extract_strided_slice %41 {offsets = [64, 32], sizes = [64, 32], strides = [1, 1]} : vector<128x128xf32> to vector<64x32xf32>
    %189 = vector.extract_strided_slice %47 {offsets = [0, 32], sizes = [64, 32], strides = [1, 1]} : vector<64x128xf32> to vector<64x32xf32>
    %190 = arith.addf %188, %189 : vector<64x32xf32>
    %191 = arith.truncf %190 : vector<64x32xf32> to vector<64x32xbf16>
    %192 = vector.extract_strided_slice %44 {offsets = [64, 32], sizes = [64, 32], strides = [1, 1]} : vector<128x128xf32> to vector<64x32xf32>
    %193 = vector.extract_strided_slice %50 {offsets = [0, 32], sizes = [64, 32], strides = [1, 1]} : vector<64x128xf32> to vector<64x32xf32>
    %194 = arith.addf %192, %193 : vector<64x32xf32>
    %195 = arith.truncf %194 : vector<64x32xf32> to vector<64x32xbf16>
    %cst_71 = arith.constant dense<0.000000e+00> : vector<64x64xf32>
    %196 = tpu.matmul %187, %191, %cst_71 {dimension_numbers = #tpu.dot_dimension_numbers<[1], [1], [0], [0], [0, 0, 1, 0], [], []>} : vector<64x32xbf16>, vector<64x32xbf16>, vector<64x64xf32> -> vector<64x64xf32>
    %c0_72 = arith.constant 0 : index
    %c0_73 = arith.constant 0 : index
    %197 = vector.load %arg21[%c0_72, %c0_73] : memref<1x64xf32, #tpu.memory_space<vmem>>, vector<1x64xf32>
    %198 = vector.broadcast %197 : vector<1x64xf32> to vector<64x64xf32>
    %199 = arith.addf %196, %198 : vector<64x64xf32>
    %cst_74 = arith.constant dense<0xFF800000> : vector<64xf32>
    %200 = vector.multi_reduction <maximumf>, %199, %cst_74 [1] : vector<64x64xf32> to vector<64xf32>
    %201 = vector.shape_cast %200 : vector<64xf32> to vector<64x1xf32>
    %202 = vector.broadcast %201 : vector<64x1xf32> to vector<64x64xf32>
    %203 = arith.subf %199, %202 : vector<64x64xf32>
    %204 = math.exp %203 : vector<64x64xf32>
    %cst_75 = arith.constant dense<0.000000e+00> : vector<64xf32>
    %205 = vector.multi_reduction <add>, %204, %cst_75 [1] : vector<64x64xf32> to vector<64xf32>
    %206 = vector.shape_cast %205 : vector<64xf32> to vector<64x1xf32>
    %207 = tpu.reciprocal %206 {approx = true} : vector<64x1xf32> -> vector<64x1xf32>
    %208 = vector.broadcast %207 : vector<64x1xf32> to vector<64x64xf32>
    %209 = arith.mulf %204, %208 : vector<64x64xf32>
    %210 = arith.truncf %209 : vector<64x64xf32> to vector<64x64xbf16>
    %cst_76 = arith.constant dense<0.000000e+00> : vector<64x32xf32>
    %211 = tpu.matmul %210, %195, %cst_76 {dimension_numbers = #tpu.dot_dimension_numbers<[1], [0], [0], [1], [0, 0, 1, 1], [], []>} : vector<64x64xbf16>, vector<64x32xbf16>, vector<64x32xf32> -> vector<64x32xf32>
    %c64_77 = arith.constant 64 : index
    %c32_78 = arith.constant 32 : index
    %212 = vector.load %arg23[%c64_77, %c32_78] : memref<128x128xf32, #tpu.memory_space<vmem>>, vector<64x32xf32>
    tpu.vector_store %arg23[%c64_77, %c32_78], %211 {strides = array<i32>} : memref<128x128xf32, #tpu.memory_space<vmem>>, vector<64x32xf32>,
    %213 = vector.extract_strided_slice %38 {offsets = [64, 64], sizes = [64, 32], strides = [1, 1]} : vector<128x128xf32> to vector<64x32xf32>
    %214 = arith.truncf %213 : vector<64x32xf32> to vector<64x32xbf16>
    %215 = vector.extract_strided_slice %41 {offsets = [64, 64], sizes = [64, 32], strides = [1, 1]} : vector<128x128xf32> to vector<64x32xf32>
    %216 = vector.extract_strided_slice %47 {offsets = [0, 64], sizes = [64, 32], strides = [1, 1]} : vector<64x128xf32> to vector<64x32xf32>
    %217 = arith.addf %215, %216 : vector<64x32xf32>
    %218 = arith.truncf %217 : vector<64x32xf32> to vector<64x32xbf16>
    %219 = vector.extract_strided_slice %44 {offsets = [64, 64], sizes = [64, 32], strides = [1, 1]} : vector<128x128xf32> to vector<64x32xf32>
    %220 = vector.extract_strided_slice %50 {offsets = [0, 64], sizes = [64, 32], strides = [1, 1]} : vector<64x128xf32> to vector<64x32xf32>
    %221 = arith.addf %219, %220 : vector<64x32xf32>
    %222 = arith.truncf %221 : vector<64x32xf32> to vector<64x32xbf16>
    %cst_79 = arith.constant dense<0.000000e+00> : vector<64x64xf32>
    %223 = tpu.matmul %214, %218, %cst_79 {dimension_numbers = #tpu.dot_dimension_numbers<[1], [1], [0], [0], [0, 0, 1, 0], [], []>} : vector<64x32xbf16>, vector<64x32xbf16>, vector<64x64xf32> -> vector<64x64xf32>
    %c0_80 = arith.constant 0 : index
    %c0_81 = arith.constant 0 : index
    %224 = vector.load %arg21[%c0_80, %c0_81] : memref<1x64xf32, #tpu.memory_space<vmem>>, vector<1x64xf32>
    %225 = vector.broadcast %224 : vector<1x64xf32> to vector<64x64xf32>
    %226 = arith.addf %223, %225 : vector<64x64xf32>
    %cst_82 = arith.constant dense<0xFF800000> : vector<64xf32>
    %227 = vector.multi_reduction <maximumf>, %226, %cst_82 [1] : vector<64x64xf32> to vector<64xf32>
    %228 = vector.shape_cast %227 : vector<64xf32> to vector<64x1xf32>
    %229 = vector.broadcast %228 : vector<64x1xf32> to vector<64x64xf32>
    %230 = arith.subf %226, %229 : vector<64x64xf32>
    %231 = math.exp %230 : vector<64x64xf32>
    %cst_83 = arith.constant dense<0.000000e+00> : vector<64xf32>
    %232 = vector.multi_reduction <add>, %231, %cst_83 [1] : vector<64x64xf32> to vector<64xf32>
    %233 = vector.shape_cast %232 : vector<64xf32> to vector<64x1xf32>
    %234 = tpu.reciprocal %233 {approx = true} : vector<64x1xf32> -> vector<64x1xf32>
    %235 = vector.broadcast %234 : vector<64x1xf32> to vector<64x64xf32>
    %236 = arith.mulf %231, %235 : vector<64x64xf32>
    %237 = arith.truncf %236 : vector<64x64xf32> to vector<64x64xbf16>
    %cst_84 = arith.constant dense<0.000000e+00> : vector<64x32xf32>
    %238 = tpu.matmul %237, %222, %cst_84 {dimension_numbers = #tpu.dot_dimension_numbers<[1], [0], [0], [1], [0, 0, 1, 1], [], []>} : vector<64x64xbf16>, vector<64x32xbf16>, vector<64x32xf32> -> vector<64x32xf32>
    %c64_85 = arith.constant 64 : index
    %c64_86 = arith.constant 64 : index
    %239 = vector.load %arg23[%c64_85, %c64_86] : memref<128x128xf32, #tpu.memory_space<vmem>>, vector<64x32xf32>
    tpu.vector_store %arg23[%c64_85, %c64_86], %238 {strides = array<i32>} : memref<128x128xf32, #tpu.memory_space<vmem>>, vector<64x32xf32>,
    %240 = vector.extract_strided_slice %38 {offsets = [64, 96], sizes = [64, 32], strides = [1, 1]} : vector<128x128xf32> to vector<64x32xf32>
    %241 = arith.truncf %240 : vector<64x32xf32> to vector<64x32xbf16>
    %242 = vector.extract_strided_slice %41 {offsets = [64, 96], sizes = [64, 32], strides = [1, 1]} : vector<128x128xf32> to vector<64x32xf32>
    %243 = vector.extract_strided_slice %47 {offsets = [0, 96], sizes = [64, 32], strides = [1, 1]} : vector<64x128xf32> to vector<64x32xf32>
    %244 = arith.addf %242, %243 : vector<64x32xf32>
    %245 = arith.truncf %244 : vector<64x32xf32> to vector<64x32xbf16>
    %246 = vector.extract_strided_slice %44 {offsets = [64, 96], sizes = [64, 32], strides = [1, 1]} : vector<128x128xf32> to vector<64x32xf32>
    %247 = vector.extract_strided_slice %50 {offsets = [0, 96], sizes = [64, 32], strides = [1, 1]} : vector<64x128xf32> to vector<64x32xf32>
    %248 = arith.addf %246, %247 : vector<64x32xf32>
    %249 = arith.truncf %248 : vector<64x32xf32> to vector<64x32xbf16>
    %cst_87 = arith.constant dense<0.000000e+00> : vector<64x64xf32>
    %250 = tpu.matmul %241, %245, %cst_87 {dimension_numbers = #tpu.dot_dimension_numbers<[1], [1], [0], [0], [0, 0, 1, 0], [], []>} : vector<64x32xbf16>, vector<64x32xbf16>, vector<64x64xf32> -> vector<64x64xf32>
    %c0_88 = arith.constant 0 : index
    %c0_89 = arith.constant 0 : index
    %251 = vector.load %arg21[%c0_88, %c0_89] : memref<1x64xf32, #tpu.memory_space<vmem>>, vector<1x64xf32>
    %252 = vector.broadcast %251 : vector<1x64xf32> to vector<64x64xf32>
    %253 = arith.addf %250, %252 : vector<64x64xf32>
    %cst_90 = arith.constant dense<0xFF800000> : vector<64xf32>
    %254 = vector.multi_reduction <maximumf>, %253, %cst_90 [1] : vector<64x64xf32> to vector<64xf32>
    %255 = vector.shape_cast %254 : vector<64xf32> to vector<64x1xf32>
    %256 = vector.broadcast %255 : vector<64x1xf32> to vector<64x64xf32>
    %257 = arith.subf %253, %256 : vector<64x64xf32>
    %258 = math.exp %257 : vector<64x64xf32>
    %cst_91 = arith.constant dense<0.000000e+00> : vector<64xf32>
    %259 = vector.multi_reduction <add>, %258, %cst_91 [1] : vector<64x64xf32> to vector<64xf32>
    %260 = vector.shape_cast %259 : vector<64xf32> to vector<64x1xf32>
    %261 = tpu.reciprocal %260 {approx = true} : vector<64x1xf32> -> vector<64x1xf32>
    %262 = vector.broadcast %261 : vector<64x1xf32> to vector<64x64xf32>
    %263 = arith.mulf %258, %262 : vector<64x64xf32>
    %264 = arith.truncf %263 : vector<64x64xf32> to vector<64x64xbf16>
    %cst_92 = arith.constant dense<0.000000e+00> : vector<64x32xf32>
    %265 = tpu.matmul %264, %249, %cst_92 {dimension_numbers = #tpu.dot_dimension_numbers<[1], [0], [0], [1], [0, 0, 1, 1], [], []>} : vector<64x64xbf16>, vector<64x32xbf16>, vector<64x32xf32> -> vector<64x32xf32>
    %c64_93 = arith.constant 64 : index
    %c96_94 = arith.constant 96 : index
    %266 = vector.load %arg23[%c64_93, %c96_94] : memref<128x128xf32, #tpu.memory_space<vmem>>, vector<64x32xf32>
    tpu.vector_store %arg23[%c64_93, %c96_94], %265 {strides = array<i32>} : memref<128x128xf32, #tpu.memory_space<vmem>>, vector<64x32xf32>,
    %c0_95 = arith.constant 0 : index
    %c0_96 = arith.constant 0 : index
    %267 = vector.load %arg23[%c0_95, %c0_96] : memref<128x128xf32, #tpu.memory_space<vmem>>, vector<128x128xf32>
    %268 = arith.truncf %267 : vector<128x128xf32> to vector<128x128xbf16>
    %c0_97 = arith.constant 0 : index
    %c0_98 = arith.constant 0 : index
    %c0_99 = arith.constant 0 : index
    %269 = vector.load %arg11[%c0_97, %c0_98, %c0_99] : memref<1x128x128xbf16, #tpu.memory_space<vmem>>, vector<1x128x128xbf16>
    %270 = vector.shape_cast %269 : vector<1x128x128xbf16> to vector<128x128xbf16>
    %cst_100 = arith.constant dense<0.000000e+00> : vector<128x128xf32>
    %271 = tpu.matmul %268, %270, %cst_100 {dimension_numbers = #tpu.dot_dimension_numbers<[1], [0], [0], [1], [0, 0, 1, 1], [], []>} : vector<128x128xbf16>, vector<128x128xbf16>, vector<128x128xf32> -> vector<128x128xf32>
    %272 = arith.addf %4, %271 : vector<128x128xf32>
    %c0_101 = arith.constant 0 : index
    %c0_102 = arith.constant 0 : index
    %c0_103 = arith.constant 0 : index
    %273 = vector.load %arg12[%c0_101, %c0_102, %c0_103] : memref<1x1x128xf32, #tpu.memory_space<vmem>>, vector<1x1x128xf32>
    %274 = vector.shape_cast %273 : vector<1x1x128xf32> to vector<1x128xf32>
    %275 = vector.broadcast %274 : vector<1x128xf32> to vector<128x128xf32>
    %276 = arith.addf %272, %275 : vector<128x128xf32>
    %c0_104 = arith.constant 0 : index
    %c0_105 = arith.constant 0 : index
    %c0_106 = arith.constant 0 : index
    %277 = vector.load %arg13[%c0_104, %c0_105, %c0_106] : memref<1x1x128xf32, #tpu.memory_space<vmem>>, vector<1x1x128xf32>
    %278 = vector.shape_cast %277 : vector<1x1x128xf32> to vector<1x128xf32>
    %c0_107 = arith.constant 0 : index
    %c0_108 = arith.constant 0 : index
    %c0_109 = arith.constant 0 : index
    %279 = vector.load %arg14[%c0_107, %c0_108, %c0_109] : memref<1x1x128xf32, #tpu.memory_space<vmem>>, vector<1x1x128xf32>
    %280 = vector.shape_cast %279 : vector<1x1x128xf32> to vector<1x128xf32>
    %cst_110 = arith.constant dense<0.000000e+00> : vector<128xf32>
    %281 = vector.multi_reduction <add>, %276, %cst_110 [1] : vector<128x128xf32> to vector<128xf32>
    %282 = vector.shape_cast %281 : vector<128xf32> to vector<128x1xf32>
    %cst_111 = arith.constant 1.280000e+02 : f32
    %283 = vector.broadcast %cst_111 : f32 to vector<128x1xf32>
    %284 = arith.divf %282, %283 : vector<128x1xf32>
    %285 = vector.broadcast %284 : vector<128x1xf32> to vector<128x128xf32>
    %286 = arith.subf %276, %285 : vector<128x128xf32>
    %287 = arith.mulf %286, %286 : vector<128x128xf32>
    %cst_112 = arith.constant dense<0.000000e+00> : vector<128xf32>
    %288 = vector.multi_reduction <add>, %287, %cst_112 [1] : vector<128x128xf32> to vector<128xf32>
    %289 = vector.shape_cast %288 : vector<128xf32> to vector<128x1xf32>
    %cst_113 = arith.constant 1.280000e+02 : f32
    %290 = vector.broadcast %cst_113 : f32 to vector<128x1xf32>
    %291 = arith.divf %289, %290 : vector<128x1xf32>
    %292 = vector.broadcast %284 : vector<128x1xf32> to vector<128x128xf32>
    %293 = arith.subf %276, %292 : vector<128x128xf32>
    %cst_114 = arith.constant 9.99999997E-7 : f32
    %294 = vector.broadcast %cst_114 : f32 to vector<128x1xf32>
    %295 = arith.addf %291, %294 : vector<128x1xf32>
    %296 = math.rsqrt %295 : vector<128x1xf32>
    %297 = vector.broadcast %296 : vector<128x1xf32> to vector<128x128xf32>
    %298 = arith.mulf %293, %297 : vector<128x128xf32>
    %299 = vector.broadcast %278 : vector<1x128xf32> to vector<128x128xf32>
    %300 = arith.mulf %298, %299 : vector<128x128xf32>
    %301 = vector.broadcast %280 : vector<1x128xf32> to vector<128x128xf32>
    %302 = arith.addf %300, %301 : vector<128x128xf32>
    %303 = arith.truncf %302 : vector<128x128xf32> to vector<128x128xbf16>
    %c0_115 = arith.constant 0 : index
    %c0_116 = arith.constant 0 : index
    %c0_117 = arith.constant 0 : index
    %304 = vector.load %arg15[%c0_115, %c0_116, %c0_117] : memref<1x128x256xbf16, #tpu.memory_space<vmem>>, vector<1x128x256xbf16>
    %305 = vector.shape_cast %304 : vector<1x128x256xbf16> to vector<128x256xbf16>
    %cst_118 = arith.constant dense<0.000000e+00> : vector<128x256xf32>
    %306 = tpu.matmul %303, %305, %cst_118 {dimension_numbers = #tpu.dot_dimension_numbers<[1], [0], [0], [1], [0, 0, 1, 1], [], []>} : vector<128x128xbf16>, vector<128x256xbf16>, vector<128x256xf32> -> vector<128x256xf32>
    %c0_119 = arith.constant 0 : index
    %c0_120 = arith.constant 0 : index
    %c0_121 = arith.constant 0 : index
    %307 = vector.load %arg16[%c0_119, %c0_120, %c0_121] : memref<1x1x256xf32, #tpu.memory_space<vmem>>, vector<1x1x256xf32>
    %308 = vector.shape_cast %307 : vector<1x1x256xf32> to vector<1x256xf32>
    %309 = vector.broadcast %308 : vector<1x256xf32> to vector<128x256xf32>
    %310 = arith.addf %306, %309 : vector<128x256xf32>
    %cst_122 = arith.constant 5.000000e-01 : f32
    %311 = vector.broadcast %cst_122 : f32 to vector<128x256xf32>
    %312 = arith.mulf %311, %310 : vector<128x256xf32>
    %313 = arith.mulf %310, %310 : vector<128x256xf32>
    %314 = arith.mulf %313, %310 : vector<128x256xf32>
    %cst_123 = arith.constant 4.471500e-02 : f32
    %315 = vector.broadcast %cst_123 : f32 to vector<128x256xf32>
    %316 = arith.mulf %315, %314 : vector<128x256xf32>
    %317 = arith.addf %310, %316 : vector<128x256xf32>
    %cst_124 = arith.constant 0.797884583 : f32
    %318 = vector.broadcast %cst_124 : f32 to vector<128x256xf32>
    %319 = arith.mulf %318, %317 : vector<128x256xf32>
    %320 = math.tanh %319 : vector<128x256xf32>
    %cst_125 = arith.constant 1.000000e+00 : f32
    %321 = vector.broadcast %cst_125 : f32 to vector<128x256xf32>
    %322 = arith.addf %321, %320 : vector<128x256xf32>
    %323 = arith.mulf %312, %322 : vector<128x256xf32>
    %324 = arith.truncf %323 : vector<128x256xf32> to vector<128x256xbf16>
    %c0_126 = arith.constant 0 : index
    %c0_127 = arith.constant 0 : index
    %c0_128 = arith.constant 0 : index
    %325 = vector.load %arg17[%c0_126, %c0_127, %c0_128] : memref<1x256x128xbf16, #tpu.memory_space<vmem>>, vector<1x256x128xbf16>
    %326 = vector.shape_cast %325 : vector<1x256x128xbf16> to vector<256x128xbf16>
    %cst_129 = arith.constant dense<0.000000e+00> : vector<128x128xf32>
    %327 = tpu.matmul %324, %326, %cst_129 {dimension_numbers = #tpu.dot_dimension_numbers<[1], [0], [0], [1], [0, 0, 1, 1], [], []>} : vector<128x256xbf16>, vector<256x128xbf16>, vector<128x128xf32> -> vector<128x128xf32>
    %328 = arith.addf %276, %327 : vector<128x128xf32>
    %c0_130 = arith.constant 0 : index
    %c0_131 = arith.constant 0 : index
    %c0_132 = arith.constant 0 : index
    %329 = vector.load %arg18[%c0_130, %c0_131, %c0_132] : memref<1x1x128xf32, #tpu.memory_space<vmem>>, vector<1x1x128xf32>
    %330 = vector.shape_cast %329 : vector<1x1x128xf32> to vector<1x128xf32>
    %331 = vector.broadcast %330 : vector<1x128xf32> to vector<128x128xf32>
    %332 = arith.addf %328, %331 : vector<128x128xf32>
    %c0_133 = arith.constant 0 : index
    %c0_134 = arith.constant 0 : index
    %c0_135 = arith.constant 0 : index
    %333 = vector.load %arg22[%c0_133, %c0_134, %c0_135] : memref<1x128x128xf32, #tpu.memory_space<vmem>>, vector<1x128x128xf32>
    %334 = vector.shape_cast %333 : vector<1x128x128xf32> to vector<128x128xf32>
    %335 = vector.shape_cast %332 : vector<128x128xf32> to vector<1x128x128xf32>
    tpu.vector_store %arg22[%c0_133, %c0_134, %c0_135], %335 {strides = array<i32>} : memref<1x128x128xf32, #tpu.memory_space<vmem>>, vector<1x128x128xf32>,
    %c1_i32 = arith.constant 1 : i32
    %336 = arith.cmpi eq, %arg1, %c1_i32 : i32
    %337 = arith.extui %336 : i1 to i32
    %c0_i32_136 = arith.constant 0 : i32
    %338 = arith.cmpi ne, %337, %c0_i32_136 : i32
    scf.if %338 {
      %c0_137 = arith.constant 0 : index
      %c0_138 = arith.constant 0 : index
      %339 = vector.load %arg19[%c0_137, %c0_138] : memref<1x128xf32, #tpu.memory_space<vmem>>, vector<1x128xf32>
      %c0_139 = arith.constant 0 : index
      %c0_140 = arith.constant 0 : index
      %340 = vector.load %arg20[%c0_139, %c0_140] : memref<1x128xf32, #tpu.memory_space<vmem>>, vector<1x128xf32>
      %cst_141 = arith.constant dense<0.000000e+00> : vector<128xf32>
      %341 = vector.multi_reduction <add>, %332, %cst_141 [1] : vector<128x128xf32> to vector<128xf32>
      %342 = vector.shape_cast %341 : vector<128xf32> to vector<128x1xf32>
      %cst_142 = arith.constant 1.280000e+02 : f32
      %343 = vector.broadcast %cst_142 : f32 to vector<128x1xf32>
      %344 = arith.divf %342, %343 : vector<128x1xf32>
      %345 = vector.broadcast %344 : vector<128x1xf32> to vector<128x128xf32>
      %346 = arith.subf %332, %345 : vector<128x128xf32>
      %347 = arith.mulf %346, %346 : vector<128x128xf32>
      %cst_143 = arith.constant dense<0.000000e+00> : vector<128xf32>
      %348 = vector.multi_reduction <add>, %347, %cst_143 [1] : vector<128x128xf32> to vector<128xf32>
      %349 = vector.shape_cast %348 : vector<128xf32> to vector<128x1xf32>
      %cst_144 = arith.constant 1.280000e+02 : f32
      %350 = vector.broadcast %cst_144 : f32 to vector<128x1xf32>
      %351 = arith.divf %349, %350 : vector<128x1xf32>
      %352 = vector.broadcast %344 : vector<128x1xf32> to vector<128x128xf32>
      %353 = arith.subf %332, %352 : vector<128x128xf32>
      %cst_145 = arith.constant 9.99999997E-7 : f32
      %354 = vector.broadcast %cst_145 : f32 to vector<128x1xf32>
      %355 = arith.addf %351, %354 : vector<128x1xf32>
      %356 = math.rsqrt %355 : vector<128x1xf32>
      %357 = vector.broadcast %356 : vector<128x1xf32> to vector<128x128xf32>
      %358 = arith.mulf %353, %357 : vector<128x128xf32>
      %359 = vector.broadcast %339 : vector<1x128xf32> to vector<128x128xf32>
      %360 = arith.mulf %358, %359 : vector<128x128xf32>
      %361 = vector.broadcast %340 : vector<1x128xf32> to vector<128x128xf32>
      %362 = arith.addf %360, %361 : vector<128x128xf32>
      %c0_146 = arith.constant 0 : index
      %c0_147 = arith.constant 0 : index
      %c0_148 = arith.constant 0 : index
      %363 = vector.load %arg22[%c0_146, %c0_147, %c0_148] : memref<1x128x128xf32, #tpu.memory_space<vmem>>, vector<1x128x128xf32>
      %364 = vector.shape_cast %363 : vector<1x128x128xf32> to vector<128x128xf32>
      %365 = vector.shape_cast %362 : vector<128x128xf32> to vector<1x128x128xf32>
      tpu.vector_store %arg22[%c0_146, %c0_147, %c0_148], %365 {strides = array<i32>} : memref<1x128x128xf32, #tpu.memory_space<vmem>>, vector<1x128x128xf32>,
    } else {
    }
    return
  }
  func.func @transform_0(%arg0: i32, %arg1: i32) -> (i32, i32, i32) {
    %c0_i32 = arith.constant 0 : i32
    %c0_i32_0 = arith.constant 0 : i32
    %c0_i32_1 = arith.constant 0 : i32
    return %arg0, %c0_i32, %c0_i32_0 : i32, i32, i32
  }
  func.func @transform_1(%arg0: i32, %arg1: i32) -> (i32, i32, i32) {
    %c0_i32 = arith.constant 0 : i32
    %c0_i32_0 = arith.constant 0 : i32
    %c0_i32_1 = arith.constant 0 : i32
    return %arg1, %c0_i32, %c0_i32_0 : i32, i32, i32
  }
  func.func @transform_2(%arg0: i32, %arg1: i32) -> (i32, i32, i32) {
    %c0_i32 = arith.constant 0 : i32
    %c0_i32_0 = arith.constant 0 : i32
    %c0_i32_1 = arith.constant 0 : i32
    return %arg1, %c0_i32, %c0_i32_0 : i32, i32, i32
  }
  func.func @transform_3(%arg0: i32, %arg1: i32) -> (i32, i32, i32) {
    %c0_i32 = arith.constant 0 : i32
    %c0_i32_0 = arith.constant 0 : i32
    %c0_i32_1 = arith.constant 0 : i32
    return %arg1, %c0_i32, %c0_i32_0 : i32, i32, i32
  }
  func.func @transform_4(%arg0: i32, %arg1: i32) -> (i32, i32, i32) {
    %c0_i32 = arith.constant 0 : i32
    %c0_i32_0 = arith.constant 0 : i32
    %c0_i32_1 = arith.constant 0 : i32
    return %arg1, %c0_i32, %c0_i32_0 : i32, i32, i32
  }
  func.func @transform_5(%arg0: i32, %arg1: i32) -> (i32, i32, i32) {
    %c0_i32 = arith.constant 0 : i32
    %c0_i32_0 = arith.constant 0 : i32
    %c0_i32_1 = arith.constant 0 : i32
    return %arg1, %c0_i32, %c0_i32_0 : i32, i32, i32
  }
  func.func @transform_6(%arg0: i32, %arg1: i32) -> (i32, i32, i32) {
    %c0_i32 = arith.constant 0 : i32
    %c0_i32_0 = arith.constant 0 : i32
    %c0_i32_1 = arith.constant 0 : i32
    return %arg1, %c0_i32, %c0_i32_0 : i32, i32, i32
  }
  func.func @transform_7(%arg0: i32, %arg1: i32) -> (i32, i32, i32) {
    %c0_i32 = arith.constant 0 : i32
    %c0_i32_0 = arith.constant 0 : i32
    %c0_i32_1 = arith.constant 0 : i32
    return %arg1, %c0_i32, %c0_i32_0 : i32, i32, i32
  }
  func.func @transform_8(%arg0: i32, %arg1: i32) -> (i32, i32, i32) {
    %c0_i32 = arith.constant 0 : i32
    %c0_i32_0 = arith.constant 0 : i32
    %c0_i32_1 = arith.constant 0 : i32
    return %arg1, %c0_i32, %c0_i32_0 : i32, i32, i32
  }
  func.func @transform_9(%arg0: i32, %arg1: i32) -> (i32, i32, i32) {
    %c0_i32 = arith.constant 0 : i32
    %c0_i32_0 = arith.constant 0 : i32
    %c0_i32_1 = arith.constant 0 : i32
    return %arg1, %c0_i32, %c0_i32_0 : i32, i32, i32
  }
  func.func @transform_10(%arg0: i32, %arg1: i32) -> (i32, i32, i32) {
    %c0_i32 = arith.constant 0 : i32
    %c0_i32_0 = arith.constant 0 : i32
    %c0_i32_1 = arith.constant 0 : i32
    return %arg1, %c0_i32, %c0_i32_0 : i32, i32, i32
  }
  func.func @transform_11(%arg0: i32, %arg1: i32) -> (i32, i32, i32) {
    %c0_i32 = arith.constant 0 : i32
    %c0_i32_0 = arith.constant 0 : i32
    %c0_i32_1 = arith.constant 0 : i32
    return %arg1, %c0_i32, %c0_i32_0 : i32, i32, i32
  }
  func.func @transform_12(%arg0: i32, %arg1: i32) -> (i32, i32, i32) {
    %c0_i32 = arith.constant 0 : i32
    %c0_i32_0 = arith.constant 0 : i32
    %c0_i32_1 = arith.constant 0 : i32
    return %arg1, %c0_i32, %c0_i32_0 : i32, i32, i32
  }
  func.func @transform_13(%arg0: i32, %arg1: i32) -> (i32, i32, i32) {
    %c0_i32 = arith.constant 0 : i32
    %c0_i32_0 = arith.constant 0 : i32
    %c0_i32_1 = arith.constant 0 : i32
    return %arg1, %c0_i32, %c0_i32_0 : i32, i32, i32
  }
  func.func @transform_14(%arg0: i32, %arg1: i32) -> (i32, i32, i32) {
    %c0_i32 = arith.constant 0 : i32
    %c0_i32_0 = arith.constant 0 : i32
    %c0_i32_1 = arith.constant 0 : i32
    return %arg1, %c0_i32, %c0_i32_0 : i32, i32, i32
  }
  func.func @transform_15(%arg0: i32, %arg1: i32) -> (i32, i32, i32) {
    %c0_i32 = arith.constant 0 : i32
    %c0_i32_0 = arith.constant 0 : i32
    %c0_i32_1 = arith.constant 0 : i32
    return %arg1, %c0_i32, %c0_i32_0 : i32, i32, i32
  }
  func.func @transform_16(%arg0: i32, %arg1: i32) -> (i32, i32, i32) {
    %c0_i32 = arith.constant 0 : i32
    %c0_i32_0 = arith.constant 0 : i32
    %c0_i32_1 = arith.constant 0 : i32
    return %arg1, %c0_i32, %c0_i32_0 : i32, i32, i32
  }
  func.func @transform_17(%arg0: i32, %arg1: i32) -> (i32, i32) {
    %c0_i32 = arith.constant 0 : i32
    %c0_i32_0 = arith.constant 0 : i32
    %c0_i32_1 = arith.constant 0 : i32
    return %c0_i32, %c0_i32_0 : i32, i32
  }
  func.func @transform_18(%arg0: i32, %arg1: i32) -> (i32, i32) {
    %c0_i32 = arith.constant 0 : i32
    %c0_i32_0 = arith.constant 0 : i32
    %c0_i32_1 = arith.constant 0 : i32
    return %c0_i32, %c0_i32_0 : i32, i32
  }
  func.func @transform_19(%arg0: i32, %arg1: i32) -> (i32, i32) {
    %c0_i32 = arith.constant 0 : i32
    %c0_i32_0 = arith.constant 0 : i32
    %c0_i32_1 = arith.constant 0 : i32
    return %c0_i32, %c0_i32_0 : i32, i32
  }
  func.func @transform_20(%arg0: i32, %arg1: i32) -> (i32, i32, i32) {
    %c0_i32 = arith.constant 0 : i32
    %c0_i32_0 = arith.constant 0 : i32
    %c0_i32_1 = arith.constant 0 : i32
    return %arg0, %c0_i32, %c0_i32_0 : i32, i32, i32
  }
}

</mosaic_0001>

<llo_original>
// kernel: tpu_custom_call.1
$region0: #{tpu_custom_call.1}
  #allocation0 [shape = 'u32[]', space=smem, size = 0x4, offset = 0x4, fixed_abs, tag = 'smem constant byte address 0x4 - core index']
  #allocation1 [shape = 'u32[72,128]{1,0:T(1,128)}', space=vmem, size = 0x9000, scoped, tag = 'internal scratch']
  #allocation2 [shape = 'f32[128,128]{1,0:T(8,128)}', space=vmem, size = 0x10000, scoped, tag = 'scratch operand']
  %s0 = inlined_call_operand.hbm [shape: f32[1,128,128], index: 0, kind: input, shape index: {}, may-alias: {0,20}]
  %s1 = inlined_call_operand.vmem [shape: f32[2,1,128], index: 1, kind: input, shape index: {}]
  %s2 = inlined_call_operand.vmem [shape: f32[2,1,128], index: 2, kind: input, shape index: {}]
  %s3 = inlined_call_operand.hbm [shape: bf16[2,128,128], index: 3, kind: input, shape index: {}]
  %s4 = inlined_call_operand.vmem [shape: f32[2,1,128], index: 4, kind: input, shape index: {}]
  %s5 = inlined_call_operand.hbm [shape: bf16[2,128,128], index: 5, kind: input, shape index: {}]
  %s6 = inlined_call_operand.hbm [shape: bf16[2,64,128], index: 6, kind: input, shape index: {}]
  %s7 = inlined_call_operand.hbm [shape: bf16[2,128,128], index: 7, kind: input, shape index: {}]
  %s8 = inlined_call_operand.hbm [shape: bf16[2,64,128], index: 8, kind: input, shape index: {}]
  %s9 = inlined_call_operand.hbm [shape: bf16[2,128,128], index: 9, kind: input, shape index: {}]
  %s10 = inlined_call_operand.vmem [shape: f32[2,1,128], index: 10, kind: input, shape index: {}]
  %s11 = inlined_call_operand.hbm [shape: f32[2,1,128], index: 11, kind: input, shape index: {}]
  %s12 = inlined_call_operand.hbm [shape: f32[2,1,128], index: 12, kind: input, shape index: {}]
  %s13 = inlined_call_operand.vmem [shape: bf16[2,128,256], index: 13, kind: input, shape index: {}]
  %s14 = inlined_call_operand.vmem [shape: f32[2,1,256], index: 14, kind: input, shape index: {}]
  %s15 = inlined_call_operand.hbm [shape: bf16[2,256,128], index: 15, kind: input, shape index: {}]
  %s16 = inlined_call_operand.vmem [shape: f32[2,1,128], index: 16, kind: input, shape index: {}]
  %s17 = inlined_call_operand.hbm [shape: f32[1,128], index: 17, kind: input, shape index: {}]
  %s18 = inlined_call_operand.vmem [shape: f32[1,128], index: 18, kind: input, shape index: {}]
  %s19 = inlined_call_operand.vmem [shape: f32[1,64], index: 19, kind: input, shape index: {}]
  %s20 = inlined_call_operand.hbm [shape: f32[1,128,128], index: 20, kind: output, shape index: {}, may-alias: {0,20}]
  %s21 = sld [smem:[#allocation0]]
  $region165: #{tpu_custom_call.1} parent=0
    _
  %s23 = ssub.s32 1, %s21
  %s24 = scalar_select 0, %s23, %s21
  $region1: #{tpu_custom_call.1} parent=0
    #allocation3 [shape = 'u8[65536]{0}', space=vmem, size = 0x10000, scoped, tag = 'input window, operand 0, single buffered']
    #allocation4 [shape = 's32[2]{0}', space=sflag, size = 0x8, scoped, tag = 'scoped memory for tpu_custom_call.1']
    #allocation5 [shape = 's32[2]{0}', space=sflag, size = 0x8, scoped, tag = 'scoped memory for tpu_custom_call.1']
    #allocation6 [shape = 'u8[65536]{0}', space=vmem, size = 0x10000, scoped, tag = 'input window, operand 3']
    #allocation7 [shape = 's32[2]{0}', space=sflag, size = 0x8, scoped, tag = 'scoped memory for tpu_custom_call.1']
    #allocation8 [shape = 'u8[65536]{0}', space=vmem, size = 0x10000, scoped, tag = 'input window, operand 5']
    #allocation9 [shape = 'u8[32768]{0}', space=vmem, size = 0x8000, scoped, tag = 'input window, operand 6']
    #allocation10 [shape = 's32[2]{0}', space=sflag, size = 0x8, scoped, tag = 'scoped memory for tpu_custom_call.1']
    #allocation11 [shape = 'u8[65536]{0}', space=vmem, size = 0x10000, scoped, tag = 'input window, operand 7']
    #allocation12 [shape = 'u8[32768]{0}', space=vmem, size = 0x8000, scoped, tag = 'input window, operand 8']
    #allocation13 [shape = 's32[2]{0}', space=sflag, size = 0x8, scoped, tag = 'scoped memory for tpu_custom_call.1']
    #allocation14 [shape = 'u8[65536]{0}', space=vmem, size = 0x10000, scoped, tag = 'input window, operand 9']
    #allocation15 [shape = 'u8[1024]{0}', space=vmem, size = 0x400, scoped, tag = 'input window, operand 11']
    #allocation16 [shape = 's32[2]{0}', space=sflag, size = 0x8, scoped, tag = 'scoped memory for tpu_custom_call.1']
    #allocation17 [shape = 'u8[1024]{0}', space=vmem, size = 0x400, scoped, tag = 'input window, operand 12']
    #allocation18 [shape = 'u8[131072]{0}', space=vmem, size = 0x20000, scoped, tag = 'input window, operand 15']
    #allocation19 [shape = 's32[2]{0}', space=sflag, size = 0x8, scoped, tag = 'scoped memory for tpu_custom_call.1']
    #allocation20 [shape = 'u8[512]{0}', space=vmem, size = 0x400, scoped, tag = 'input window, operand 17, single buffered']
    #allocation21 [shape = 'u8[65536]{0}', space=vmem, size = 0x10000, scoped, tag = 'output window, operand 0, single buffered']
    %25 = vsyncpa [#allocation4], 0
    %26 = vsyncpa [#allocation7], 0
    %s27 = scalar_lea.sflag [#allocation7], 1
    %28 = vsyncpa %s27, 0
    %29 = vsyncpa [#allocation10], 0
    %s30 = scalar_lea.sflag [#allocation10], 1
    %31 = vsyncpa %s30, 0
    %32 = vsyncpa [#allocation13], 0
    %s33 = scalar_lea.sflag [#allocation13], 1
    %34 = vsyncpa %s33, 0
    %35 = vsyncpa [#allocation16], 0
    %s36 = scalar_lea.sflag [#allocation16], 1
    %37 = vsyncpa %s36, 0
    %38 = vsyncpa [#allocation19], 0
    %s39 = scalar_lea.sflag [#allocation19], 1
    %40 = vsyncpa %s39, 0
    %41 = vsyncpa [#allocation5], 0
    loop: start=0, step=1, limit=4
    $region2: #{tpu_custom_call.1} parent=1 // loop_pre_header
      _
    $region3: #{tpu_custom_call.1} parent=1 // loop_header
      %s43 = sphi 0, %s47
      %p44 = scmp.ge.s32.totalorder %s43, 4
      %s50 = sphi 0, %s62
      %s51 = sphi 0, %s58
      %s52 = sphi 0, %s50
      %s53 = sphi 0, %s51
      %s54 = sphi 0, %s52
      %s55 = sphi 0, %s53
      %s65 = sphi 0, %s67
      %s68 = sphi 0, %s65
      %s69 = sphi 0, %s68
      %s85 = sphi 0, %s69
      %s91 = sphi 0, %s93
      %s94 = sphi 0, %s91
      %s95 = sphi 0, %s94
      %s111 = sphi 0, %s95
      %s117 = sphi 0, %s119
      %s120 = sphi 0, %s117
      %s121 = sphi 0, %s120
      %s137 = sphi 0, %s121
      %s143 = sphi 0, %s145
      %s146 = sphi 0, %s143
      %s147 = sphi 0, %s146
      %s163 = sphi 0, %s147
      %s169 = sphi 0, %s171
      %s172 = sphi 0, %s169
      %s173 = sphi 0, %s172
      %s189 = sphi 0, %s173
      %s195 = sphi 0, %s197
      %s198 = sphi 0, %s195
      %s199 = sphi 0, %s198
      %s215 = sphi 0, %s199
      %s221 = sphi 0, %s223
      %s224 = sphi 0, %s221
      %s225 = sphi 0, %s224
      %s241 = sphi 0, %s225
      %s247 = sphi 0, %s249
      %s250 = sphi 0, %s247
      %s251 = sphi 0, %s250
      %s267 = sphi 0, %s251
      %s273 = sphi 0, %s275
      %s276 = sphi 0, %s273
      %s277 = sphi 0, %s276
      %s293 = sphi 0, %s277
      %s299 = sphi 0, %s301
      %s302 = sphi 0, %s299
      %s303 = sphi 0, %s302
      %s319 = sphi 0, %s303
      %s325 = sphi 0, %s327
      %s328 = sphi 0, %s325
      %s329 = sphi 0, %s328
      %s345 = sphi 0, %s329
      %s351 = sphi 0, %s353
      %s354 = sphi 0, %s351
      %s355 = sphi 0, %s354
      %s371 = sphi 0, %s355
      %s377 = sphi 0, %s379
      %s380 = sphi 0, %s377
      %s381 = sphi 0, %s380
      %s397 = sphi 0, %s381
      %s403 = sphi 0, %s405
      %s406 = sphi 0, %s403
      %s407 = sphi 0, %s406
      %s423 = sphi 0, %s407
      %s429 = sphi 0, %s431
      %s432 = sphi 0, %s429
      %s433 = sphi 0, %s432
      %s449 = sphi 0, %s433
      %s455 = sphi 0, %s457
      %s458 = sphi 0, %s455
      %s459 = sphi 0, %s458
      %s475 = sphi 0, %s459
      %s481 = sphi 0, %s483
      %s484 = sphi 0, %s481
      %s485 = sphi 0, %s484
      %s501 = sphi 0, %s485
      %s505 = sphi 0, %s505
      %s507 = sphi 0, %s505
      %s508 = sphi 0, %s507
      %s522 = sphi 0, %s508
      %s526 = sphi 0, %s526
      %s528 = sphi 0, %s526
      %s529 = sphi 0, %s528
      %s543 = sphi 0, %s529
      %s547 = sphi 0, %s547
      %s549 = sphi 0, %s547
      %s550 = sphi 0, %s549
      %s564 = sphi 0, %s550
      %s570 = sphi 0, %s572
      %s573 = sphi 0, %s570
      %s574 = sphi 0, %s573
      %s590 = sphi 0, %s574
    $region4: #{tpu_custom_call.1} parent=1 // loop_header_branch
      %46 = sbr.rel (%p44) target = $region8
    $region5: #{tpu_custom_call.1} parent=1 // loop_body
      %s48 = ssub.s32 %s43, 1
      %s49 = ssub.s32 %s43, 2
      %s56 = sadd.s32 1, %s51
      %p57 = scmp.ge.s32.totalorder %s56, 2
      %s58 = scalar_select %p57, 0, %s56
      %s59 = sadd.s32 1, %s50
      %s60 = scalar_select %p57, %s59, %s50
      %p61 = scmp.ge.s32.totalorder %s60, 1
      %s62 = scalar_select %p61, 0, %s60
      %s63 = ssub.s32 %s50, %s62
      %p64 = scmp.eq.s32.totalorder %s63, 0
      %s66 = sadd.s32 %s65, 1
      %s67 = scalar_select %p64, %s65, %s66
      %p70 = pneg %p64
      %p71 = scmp.eq.s32.totalorder %s43, 1
      %p72 = por %p70, %p71
      %p73 = scmp.ne.s32.totalorder %s65, %s68
      %p74 = scmp.eq.s32.totalorder %s43, 0
      %p75 = por %p73, %p74
      %p76 = scmp.ne.s32.totalorder %s65, %s68
      %p77 = scmp.eq.s32.totalorder %s48, 1
      %p78 = por %p76, %p77
      %p79 = scmp.ne.s32.totalorder %s68, %s69
      %p80 = scmp.eq.s32.totalorder %s48, 0
      %p81 = por %p79, %p80
      %p82 = scmp.ne.s32.totalorder %s68, %s69
      %p83 = scmp.eq.s32.totalorder %s49, 1
      %p84 = por %p82, %p83
      %p86 = scmp.ne.s32.totalorder %s69, %s85
      %p87 = scmp.eq.s32.totalorder %s49, 0
      %p88 = por %p86, %p87
      %s89 = ssub.s32 %s51, %s58
      %p90 = scmp.eq.s32.totalorder %s89, 0
      %s92 = sadd.s32 %s91, 1
      %s93 = scalar_select %p90, %s91, %s92
      %p96 = pneg %p90
      %p97 = scmp.eq.s32.totalorder %s43, 1
      %p98 = por %p96, %p97
      %p99 = scmp.ne.s32.totalorder %s91, %s94
      %p100 = scmp.eq.s32.totalorder %s43, 0
      %p101 = por %p99, %p100
      %p102 = scmp.ne.s32.totalorder %s91, %s94
      %p103 = scmp.eq.s32.totalorder %s48, 1
      %p104 = por %p102, %p103
      %p105 = scmp.ne.s32.totalorder %s94, %s95
      %p106 = scmp.eq.s32.totalorder %s48, 0
      %p107 = por %p105, %p106
      %p108 = scmp.ne.s32.totalorder %s94, %s95
      %p109 = scmp.eq.s32.totalorder %s49, 1
      %p110 = por %p108, %p109
      %p112 = scmp.ne.s32.totalorder %s95, %s111
      %p113 = scmp.eq.s32.totalorder %s49, 0
      %p114 = por %p112, %p113
      %s115 = ssub.s32 %s51, %s58
      %p116 = scmp.eq.s32.totalorder %s115, 0
      %s118 = sadd.s32 %s117, 1
      %s119 = scalar_select %p116, %s117, %s118
      %p122 = pneg %p116
      %p123 = scmp.eq.s32.totalorder %s43, 1
      %p124 = por %p122, %p123
      %p125 = scmp.ne.s32.totalorder %s117, %s120
      %p126 = scmp.eq.s32.totalorder %s43, 0
      %p127 = por %p125, %p126
      %p128 = scmp.ne.s32.totalorder %s117, %s120
      %p129 = scmp.eq.s32.totalorder %s48, 1
      %p130 = por %p128, %p129
      %p131 = scmp.ne.s32.totalorder %s120, %s121
      %p132 = scmp.eq.s32.totalorder %s48, 0
      %p133 = por %p131, %p132
      %p134 = scmp.ne.s32.totalorder %s120, %s121
      %p135 = scmp.eq.s32.totalorder %s49, 1
      %p136 = por %p134, %p135
      %p138 = scmp.ne.s32.totalorder %s121, %s137
      %p139 = scmp.eq.s32.totalorder %s49, 0
      %p140 = por %p138, %p139
      %s141 = ssub.s32 %s51, %s58
      %p142 = scmp.eq.s32.totalorder %s141, 0
      %s144 = sadd.s32 %s143, 1
      %s145 = scalar_select %p142, %s143, %s144
      %p148 = pneg %p142
      %p149 = scmp.eq.s32.totalorder %s43, 1
      %p150 = por %p148, %p149
      %p151 = scmp.ne.s32.totalorder %s143, %s146
      %p152 = scmp.eq.s32.totalorder %s43, 0
      %p153 = por %p151, %p152
      %p154 = scmp.ne.s32.totalorder %s143, %s146
      %p155 = scmp.eq.s32.totalorder %s48, 1
      %p156 = por %p154, %p155
      %p157 = scmp.ne.s32.totalorder %s146, %s147
      %p158 = scmp.eq.s32.totalorder %s48, 0
      %p159 = por %p157, %p158
      %p160 = scmp.ne.s32.totalorder %s146, %s147
      %p161 = scmp.eq.s32.totalorder %s49, 1
      %p162 = por %p160, %p161
      %p164 = scmp.ne.s32.totalorder %s147, %s163
      %p165 = scmp.eq.s32.totalorder %s49, 0
      %p166 = por %p164, %p165
      %s167 = ssub.s32 %s51, %s58
      %p168 = scmp.eq.s32.totalorder %s167, 0
      %s170 = sadd.s32 %s169, 1
      %s171 = scalar_select %p168, %s169, %s170
      %p174 = pneg %p168
      %p175 = scmp.eq.s32.totalorder %s43, 1
      %p176 = por %p174, %p175
      %p177 = scmp.ne.s32.totalorder %s169, %s172
      %p178 = scmp.eq.s32.totalorder %s43, 0
      %p179 = por %p177, %p178
      %p180 = scmp.ne.s32.totalorder %s169, %s172
      %p181 = scmp.eq.s32.totalorder %s48, 1
      %p182 = por %p180, %p181
      %p183 = scmp.ne.s32.totalorder %s172, %s173
      %p184 = scmp.eq.s32.totalorder %s48, 0
      %p185 = por %p183, %p184
      %p186 = scmp.ne.s32.totalorder %s172, %s173
      %p187 = scmp.eq.s32.totalorder %s49, 1
      %p188 = por %p186, %p187
      %p190 = scmp.ne.s32.totalorder %s173, %s189
      %p191 = scmp.eq.s32.totalorder %s49, 0
      %p192 = por %p190, %p191
      %s193 = ssub.s32 %s51, %s58
      %p194 = scmp.eq.s32.totalorder %s193, 0
      %s196 = sadd.s32 %s195, 1
      %s197 = scalar_select %p194, %s195, %s196
      %p200 = pneg %p194
      %p201 = scmp.eq.s32.totalorder %s43, 1
      %p202 = por %p200, %p201
      %p203 = scmp.ne.s32.totalorder %s195, %s198
      %p204 = scmp.eq.s32.totalorder %s43, 0
      %p205 = por %p203, %p204
      %p206 = scmp.ne.s32.totalorder %s195, %s198
      %p207 = scmp.eq.s32.totalorder %s48, 1
      %p208 = por %p206, %p207
      %p209 = scmp.ne.s32.totalorder %s198, %s199
      %p210 = scmp.eq.s32.totalorder %s48, 0
      %p211 = por %p209, %p210
      %p212 = scmp.ne.s32.totalorder %s198, %s199
      %p213 = scmp.eq.s32.totalorder %s49, 1
      %p214 = por %p212, %p213
      %p216 = scmp.ne.s32.totalorder %s199, %s215
      %p217 = scmp.eq.s32.totalorder %s49, 0
      %p218 = por %p216, %p217
      %s219 = ssub.s32 %s51, %s58
      %p220 = scmp.eq.s32.totalorder %s219, 0
      %s222 = sadd.s32 %s221, 1
      %s223 = scalar_select %p220, %s221, %s222
      %p226 = pneg %p220
      %p227 = scmp.eq.s32.totalorder %s43, 1
      %p228 = por %p226, %p227
      %p229 = scmp.ne.s32.totalorder %s221, %s224
      %p230 = scmp.eq.s32.totalorder %s43, 0
      %p231 = por %p229, %p230
      %p232 = scmp.ne.s32.totalorder %s221, %s224
      %p233 = scmp.eq.s32.totalorder %s48, 1
      %p234 = por %p232, %p233
      %p235 = scmp.ne.s32.totalorder %s224, %s225
      %p236 = scmp.eq.s32.totalorder %s48, 0
      %p237 = por %p235, %p236
      %p238 = scmp.ne.s32.totalorder %s224, %s225
      %p239 = scmp.eq.s32.totalorder %s49, 1
      %p240 = por %p238, %p239
      %p242 = scmp.ne.s32.totalorder %s225, %s241
      %p243 = scmp.eq.s32.totalorder %s49, 0
      %p244 = por %p242, %p243
      %s245 = ssub.s32 %s51, %s58
      %p246 = scmp.eq.s32.totalorder %s245, 0
      %s248 = sadd.s32 %s247, 1
      %s249 = scalar_select %p246, %s247, %s248
      %p252 = pneg %p246
      %p253 = scmp.eq.s32.totalorder %s43, 1
      %p254 = por %p252, %p253
      %p255 = scmp.ne.s32.totalorder %s247, %s250
      %p256 = scmp.eq.s32.totalorder %s43, 0
      %p257 = por %p255, %p256
      %p258 = scmp.ne.s32.totalorder %s247, %s250
      %p259 = scmp.eq.s32.totalorder %s48, 1
      %p260 = por %p258, %p259
      %p261 = scmp.ne.s32.totalorder %s250, %s251
      %p262 = scmp.eq.s32.totalorder %s48, 0
      %p263 = por %p261, %p262
      %p264 = scmp.ne.s32.totalorder %s250, %s251
      %p265 = scmp.eq.s32.totalorder %s49, 1
      %p266 = por %p264, %p265
      %p268 = scmp.ne.s32.totalorder %s251, %s267
      %p269 = scmp.eq.s32.totalorder %s49, 0
      %p270 = por %p268, %p269
      %s271 = ssub.s32 %s51, %s58
      %p272 = scmp.eq.s32.totalorder %s271, 0
      %s274 = sadd.s32 %s273, 1
      %s275 = scalar_select %p272, %s273, %s274
      %p278 = pneg %p272
      %p279 = scmp.eq.s32.totalorder %s43, 1
      %p280 = por %p278, %p279
      %p281 = scmp.ne.s32.totalorder %s273, %s276
      %p282 = scmp.eq.s32.totalorder %s43, 0
      %p283 = por %p281, %p282
      %p284 = scmp.ne.s32.totalorder %s273, %s276
      %p285 = scmp.eq.s32.totalorder %s48, 1
      %p286 = por %p284, %p285
      %p287 = scmp.ne.s32.totalorder %s276, %s277
      %p288 = scmp.eq.s32.totalorder %s48, 0
      %p289 = por %p287, %p288
      %p290 = scmp.ne.s32.totalorder %s276, %s277
      %p291 = scmp.eq.s32.totalorder %s49, 1
      %p292 = por %p290, %p291
      %p294 = scmp.ne.s32.totalorder %s277, %s293
      %p295 = scmp.eq.s32.totalorder %s49, 0
      %p296 = por %p294, %p295
      %s297 = ssub.s32 %s51, %s58
      %p298 = scmp.eq.s32.totalorder %s297, 0
      %s300 = sadd.s32 %s299, 1
      %s301 = scalar_select %p298, %s299, %s300
      %p304 = pneg %p298
      %p305 = scmp.eq.s32.totalorder %s43, 1
      %p306 = por %p304, %p305
      %p307 = scmp.ne.s32.totalorder %s299, %s302
      %p308 = scmp.eq.s32.totalorder %s43, 0
      %p309 = por %p307, %p308
      %p310 = scmp.ne.s32.totalorder %s299, %s302
      %p311 = scmp.eq.s32.totalorder %s48, 1
      %p312 = por %p310, %p311
      %p313 = scmp.ne.s32.totalorder %s302, %s303
      %p314 = scmp.eq.s32.totalorder %s48, 0
      %p315 = por %p313, %p314
      %p316 = scmp.ne.s32.totalorder %s302, %s303
      %p317 = scmp.eq.s32.totalorder %s49, 1
      %p318 = por %p316, %p317
      %p320 = scmp.ne.s32.totalorder %s303, %s319
      %p321 = scmp.eq.s32.totalorder %s49, 0
      %p322 = por %p320, %p321
      %s323 = ssub.s32 %s51, %s58
      %p324 = scmp.eq.s32.totalorder %s323, 0
      %s326 = sadd.s32 %s325, 1
      %s327 = scalar_select %p324, %s325, %s326
      %p330 = pneg %p324
      %p331 = scmp.eq.s32.totalorder %s43, 1
      %p332 = por %p330, %p331
      %p333 = scmp.ne.s32.totalorder %s325, %s328
      %p334 = scmp.eq.s32.totalorder %s43, 0
      %p335 = por %p333, %p334
      %p336 = scmp.ne.s32.totalorder %s325, %s328
      %p337 = scmp.eq.s32.totalorder %s48, 1
      %p338 = por %p336, %p337
      %p339 = scmp.ne.s32.totalorder %s328, %s329
      %p340 = scmp.eq.s32.totalorder %s48, 0
      %p341 = por %p339, %p340
      %p342 = scmp.ne.s32.totalorder %s328, %s329
      %p343 = scmp.eq.s32.totalorder %s49, 1
      %p344 = por %p342, %p343
      %p346 = scmp.ne.s32.totalorder %s329, %s345
      %p347 = scmp.eq.s32.totalorder %s49, 0
      %p348 = por %p346, %p347
      %s349 = ssub.s32 %s51, %s58
      %p350 = scmp.eq.s32.totalorder %s349, 0
      %s352 = sadd.s32 %s351, 1
      %s353 = scalar_select %p350, %s351, %s352
      %p356 = pneg %p350
      %p357 = scmp.eq.s32.totalorder %s43, 1
      %p358 = por %p356, %p357
      %p359 = scmp.ne.s32.totalorder %s351, %s354
      %p360 = scmp.eq.s32.totalorder %s43, 0
      %p361 = por %p359, %p360
      %p362 = scmp.ne.s32.totalorder %s351, %s354
      %p363 = scmp.eq.s32.totalorder %s48, 1
      %p364 = por %p362, %p363
      %p365 = scmp.ne.s32.totalorder %s354, %s355
      %p366 = scmp.eq.s32.totalorder %s48, 0
      %p367 = por %p365, %p366
      %p368 = scmp.ne.s32.totalorder %s354, %s355
      %p369 = scmp.eq.s32.totalorder %s49, 1
      %p370 = por %p368, %p369
      %p372 = scmp.ne.s32.totalorder %s355, %s371
      %p373 = scmp.eq.s32.totalorder %s49, 0
      %p374 = por %p372, %p373
      %s375 = ssub.s32 %s51, %s58
      %p376 = scmp.eq.s32.totalorder %s375, 0
      %s378 = sadd.s32 %s377, 1
      %s379 = scalar_select %p376, %s377, %s378
      %p382 = pneg %p376
      %p383 = scmp.eq.s32.totalorder %s43, 1
      %p384 = por %p382, %p383
      %p385 = scmp.ne.s32.totalorder %s377, %s380
      %p386 = scmp.eq.s32.totalorder %s43, 0
      %p387 = por %p385, %p386
      %p388 = scmp.ne.s32.totalorder %s377, %s380
      %p389 = scmp.eq.s32.totalorder %s48, 1
      %p390 = por %p388, %p389
      %p391 = scmp.ne.s32.totalorder %s380, %s381
      %p392 = scmp.eq.s32.totalorder %s48, 0
      %p393 = por %p391, %p392
      %p394 = scmp.ne.s32.totalorder %s380, %s381
      %p395 = scmp.eq.s32.totalorder %s49, 1
      %p396 = por %p394, %p395
      %p398 = scmp.ne.s32.totalorder %s381, %s397
      %p399 = scmp.eq.s32.totalorder %s49, 0
      %p400 = por %p398, %p399
      %s401 = ssub.s32 %s51, %s58
      %p402 = scmp.eq.s32.totalorder %s401, 0
      %s404 = sadd.s32 %s403, 1
      %s405 = scalar_select %p402, %s403, %s404
      %p408 = pneg %p402
      %p409 = scmp.eq.s32.totalorder %s43, 1
      %p410 = por %p408, %p409
      %p411 = scmp.ne.s32.totalorder %s403, %s406
      %p412 = scmp.eq.s32.totalorder %s43, 0
      %p413 = por %p411, %p412
      %p414 = scmp.ne.s32.totalorder %s403, %s406
      %p415 = scmp.eq.s32.totalorder %s48, 1
      %p416 = por %p414, %p415
      %p417 = scmp.ne.s32.totalorder %s406, %s407
      %p418 = scmp.eq.s32.totalorder %s48, 0
      %p419 = por %p417, %p418
      %p420 = scmp.ne.s32.totalorder %s406, %s407
      %p421 = scmp.eq.s32.totalorder %s49, 1
      %p422 = por %p420, %p421
      %p424 = scmp.ne.s32.totalorder %s407, %s423
      %p425 = scmp.eq.s32.totalorder %s49, 0
      %p426 = por %p424, %p425
      %s427 = ssub.s32 %s51, %s58
      %p428 = scmp.eq.s32.totalorder %s427, 0
      %s430 = sadd.s32 %s429, 1
      %s431 = scalar_select %p428, %s429, %s430
      %p434 = pneg %p428
      %p435 = scmp.eq.s32.totalorder %s43, 1
      %p436 = por %p434, %p435
      %p437 = scmp.ne.s32.totalorder %s429, %s432
      %p438 = scmp.eq.s32.totalorder %s43, 0
      %p439 = por %p437, %p438
      %p440 = scmp.ne.s32.totalorder %s429, %s432
      %p441 = scmp.eq.s32.totalorder %s48, 1
      %p442 = por %p440, %p441
      %p443 = scmp.ne.s32.totalorder %s432, %s433
      %p444 = scmp.eq.s32.totalorder %s48, 0
      %p445 = por %p443, %p444
      %p446 = scmp.ne.s32.totalorder %s432, %s433
      %p447 = scmp.eq.s32.totalorder %s49, 1
      %p448 = por %p446, %p447
      %p450 = scmp.ne.s32.totalorder %s433, %s449
      %p451 = scmp.eq.s32.totalorder %s49, 0
      %p452 = por %p450, %p451
      %s453 = ssub.s32 %s51, %s58
      %p454 = scmp.eq.s32.totalorder %s453, 0
      %s456 = sadd.s32 %s455, 1
      %s457 = scalar_select %p454, %s455, %s456
      %p460 = pneg %p454
      %p461 = scmp.eq.s32.totalorder %s43, 1
      %p462 = por %p460, %p461
      %p463 = scmp.ne.s32.totalorder %s455, %s458
      %p464 = scmp.eq.s32.totalorder %s43, 0
      %p465 = por %p463, %p464
      %p466 = scmp.ne.s32.totalorder %s455, %s458
      %p467 = scmp.eq.s32.totalorder %s48, 1
      %p468 = por %p466, %p467
      %p469 = scmp.ne.s32.totalorder %s458, %s459
      %p470 = scmp.eq.s32.totalorder %s48, 0
      %p471 = por %p469, %p470
      %p472 = scmp.ne.s32.totalorder %s458, %s459
      %p473 = scmp.eq.s32.totalorder %s49, 1
      %p474 = por %p472, %p473
      %p476 = scmp.ne.s32.totalorder %s459, %s475
      %p477 = scmp.eq.s32.totalorder %s49, 0
      %p478 = por %p476, %p477
      %s479 = ssub.s32 %s51, %s58
      %p480 = scmp.eq.s32.totalorder %s479, 0
      %s482 = sadd.s32 %s481, 1
      %s483 = scalar_select %p480, %s481, %s482
      %p486 = pneg %p480
      %p487 = scmp.eq.s32.totalorder %s43, 1
      %p488 = por %p486, %p487
      %p489 = scmp.ne.s32.totalorder %s481, %s484
      %p490 = scmp.eq.s32.totalorder %s43, 0
      %p491 = por %p489, %p490
      %p492 = scmp.ne.s32.totalorder %s481, %s484
      %p493 = scmp.eq.s32.totalorder %s48, 1
      %p494 = por %p492, %p493
      %p495 = scmp.ne.s32.totalorder %s484, %s485
      %p496 = scmp.eq.s32.totalorder %s48, 0
      %p497 = por %p495, %p496
      %p498 = scmp.ne.s32.totalorder %s484, %s485
      %p499 = scmp.eq.s32.totalorder %s49, 1
      %p500 = por %p498, %p499
      %p502 = scmp.ne.s32.totalorder %s485, %s501
      %p503 = scmp.eq.s32.totalorder %s49, 0
      %p504 = por %p502, %p503
      %s506 = sadd.s32 %s505, 1
      %p509 = scmp.eq.s32.totalorder %s43, 1
      %p510 = scmp.ne.s32.totalorder %s505, %s507
      %p511 = scmp.eq.s32.totalorder %s43, 0
      %p512 = por %p510, %p511
      %p513 = scmp.ne.s32.totalorder %s505, %s507
      %p514 = scmp.eq.s32.totalorder %s48, 1
      %p515 = por %p513, %p514
      %p516 = scmp.ne.s32.totalorder %s507, %s508
      %p517 = scmp.eq.s32.totalorder %s48, 0
      %p518 = por %p516, %p517
      %p519 = scmp.ne.s32.totalorder %s507, %s508
      %p520 = scmp.eq.s32.totalorder %s49, 1
      %p521 = por %p519, %p520
      %p523 = scmp.ne.s32.totalorder %s508, %s522
      %p524 = scmp.eq.s32.totalorder %s49, 0
      %p525 = por %p523, %p524
      %s527 = sadd.s32 %s526, 1
      %p530 = scmp.eq.s32.totalorder %s43, 1
      %p531 = scmp.ne.s32.totalorder %s526, %s528
      %p532 = scmp.eq.s32.totalorder %s43, 0
      %p533 = por %p531, %p532
      %p534 = scmp.ne.s32.totalorder %s526, %s528
      %p535 = scmp.eq.s32.totalorder %s48, 1
      %p536 = por %p534, %p535
      %p537 = scmp.ne.s32.totalorder %s528, %s529
      %p538 = scmp.eq.s32.totalorder %s48, 0
      %p539 = por %p537, %p538
      %p540 = scmp.ne.s32.totalorder %s528, %s529
      %p541 = scmp.eq.s32.totalorder %s49, 1
      %p542 = por %p540, %p541
      %p544 = scmp.ne.s32.totalorder %s529, %s543
      %p545 = scmp.eq.s32.totalorder %s49, 0
      %p546 = por %p544, %p545
      %s548 = sadd.s32 %s547, 1
      %p551 = scmp.eq.s32.totalorder %s43, 1
      %p552 = scmp.ne.s32.totalorder %s547, %s549
      %p553 = scmp.eq.s32.totalorder %s43, 0
      %p554 = por %p552, %p553
      %p555 = scmp.ne.s32.totalorder %s547, %s549
      %p556 = scmp.eq.s32.totalorder %s48, 1
      %p557 = por %p555, %p556
      %p558 = scmp.ne.s32.totalorder %s549, %s550
      %p559 = scmp.eq.s32.totalorder %s48, 0
      %p560 = por %p558, %p559
      %p561 = scmp.ne.s32.totalorder %s549, %s550
      %p562 = scmp.eq.s32.totalorder %s49, 1
      %p563 = por %p561, %p562
      %p565 = scmp.ne.s32.totalorder %s550, %s564
      %p566 = scmp.eq.s32.totalorder %s49, 0
      %p567 = por %p565, %p566
      %s568 = ssub.s32 %s50, %s62
      %p569 = scmp.eq.s32.totalorder %s568, 0
      %s571 = sadd.s32 %s570, 1
      %s572 = scalar_select %p569, %s570, %s571
      %p575 = pneg %p569
      %p576 = scmp.eq.s32.totalorder %s43, 1
      %p577 = por %p575, %p576
      %p578 = scmp.ne.s32.totalorder %s570, %s573
      %p579 = scmp.eq.s32.totalorder %s43, 0
      %p580 = por %p578, %p579
      %p581 = scmp.ne.s32.totalorder %s570, %s573
      %p582 = scmp.eq.s32.totalorder %s48, 1
      %p583 = por %p581, %p582
      %p584 = scmp.ne.s32.totalorder %s573, %s574
      %p585 = scmp.eq.s32.totalorder %s48, 0
      %p586 = por %p584, %p585
      %p587 = scmp.ne.s32.totalorder %s573, %s574
      %p588 = scmp.eq.s32.totalorder %s49, 1
      %p589 = por %p587, %p588
      %p591 = scmp.ne.s32.totalorder %s574, %s590
      %p592 = scmp.eq.s32.totalorder %s49, 0
      %p593 = por %p591, %p592
      %p594 = scmp.le.s32.totalorder 1, %s43
      %p595 = scmp.lt.s32.totalorder %s43, 3
      %p596 = pnand %p594, %p595
      %p597 = pneg %p596
      // Predicated region
      $region9: #{tpu_custom_call.1} parent=5 // pred_check
        _
      $region10: #{tpu_custom_call.1} parent=5 // pred_check_branch
        %599 = sbr.rel (%p596) target = $region12
      $region11: #{tpu_custom_call.1} parent=5 // pred_region
        %s600 = ssub.s32 %s43, 1
        // Predicated region
        $region13: #{tpu_custom_call.1} parent=11 // pred_check
          %p601 = pneg %p81
        $region14: #{tpu_custom_call.1} parent=11 // pred_check_branch
          %603 = sbr.rel (%p601) target = $region16
        $region15: #{tpu_custom_call.1} parent=11 // pred_region
          %605 = vsyncadd [#allocation4], 0
          %s606 = smul.addr %s52, 16
          %s607 = smul.addr %s606, 8
          %s608 = scalar_lea.hbm %s0, %s607
          %s609 = sshll.u32 %s608, 4
          %s610 = int_to_ptr.hbm [resolvable:$true] %s609
          %s611 = sshll.u32 [#allocation3], 4
          %s612 = int_to_ptr.vmem [resolvable:$true] %s611
          %617 = dma.hbm_to_vmem [thread:$0]  %s610, 2048, %s612, [#allocation4], 128, 128, 8
        $region16: #{tpu_custom_call.1} parent=11 // pred_fallthru
          _
        // Predicated region
        $region17: #{tpu_custom_call.1} parent=11 // pred_check
          %p618 = pneg %p518
        $region18: #{tpu_custom_call.1} parent=11 // pred_check_branch
          %620 = sbr.rel (%p618) target = $region20
        $region19: #{tpu_custom_call.1} parent=11 // pred_region
          %622 = vsyncadd [#allocation19], 0
          %s624 = sshll.u32 %s17, 4
          %s625 = int_to_ptr.hbm [resolvable:$true] %s624
          %s626 = sshll.u32 [#allocation20], 4
          %s627 = int_to_ptr.vmem [resolvable:$true] %s626
          %629 = dma.hbm_to_vmem [thread:$0]  %s625, 16, %s627, [#allocation19]
        $region20: #{tpu_custom_call.1} parent=11 // pred_fallthru
          _
        // Predicated region
        $region21: #{tpu_custom_call.1} parent=11 // pred_check
          %p630 = pneg %p539
        $region22: #{tpu_custom_call.1} parent=11 // pred_check_branch
          %632 = sbr.rel (%p630) target = $region24
        $region23: #{tpu_custom_call.1} parent=11 // pred_region
          _
        $region24: #{tpu_custom_call.1} parent=11 // pred_fallthru
          _
        // Predicated region
        $region25: #{tpu_custom_call.1} parent=11 // pred_check
          %p633 = pneg %p560
        $region26: #{tpu_custom_call.1} parent=11 // pred_check_branch
          %635 = sbr.rel (%p633) target = $region28
        $region27: #{tpu_custom_call.1} parent=11 // pred_region
          _
        $region28: #{tpu_custom_call.1} parent=11 // pred_fallthru
          _
      $region12: #{tpu_custom_call.1} parent=5 // pred_fallthru
        _
      %p636 = scmp.lt.s32.totalorder %s43, 2
      // Predicated region
      $region29: #{tpu_custom_call.1} parent=5 // pred_check
        %p637 = pneg %p636
      $region30: #{tpu_custom_call.1} parent=5 // pred_check_branch
        %639 = sbr.rel (%p637) target = $region32
      $region31: #{tpu_custom_call.1} parent=5 // pred_region
        // Predicated region
        $region33: #{tpu_custom_call.1} parent=31 // pred_check
          %p640 = pneg %p101
        $region34: #{tpu_custom_call.1} parent=31 // pred_check_branch
          %642 = sbr.rel (%p640) target = $region36
        $region35: #{tpu_custom_call.1} parent=31 // pred_region
          %p643 = scmp.lt.s32.totalorder %s51, 1
          %s644 = scalar_select %p643, %s51, 1
          %s645 = scalar_lea.vmem %s1, %s644
        $region36: #{tpu_custom_call.1} parent=31 // pred_fallthru
          _
        // Predicated region
        $region37: #{tpu_custom_call.1} parent=31 // pred_check
          %p646 = pneg %p127
        $region38: #{tpu_custom_call.1} parent=31 // pred_check_branch
          %648 = sbr.rel (%p646) target = $region40
        $region39: #{tpu_custom_call.1} parent=31 // pred_region
          %p649 = scmp.lt.s32.totalorder %s51, 1
          %s650 = scalar_select %p649, %s51, 1
          %s651 = scalar_lea.vmem %s2, %s650
        $region40: #{tpu_custom_call.1} parent=31 // pred_fallthru
          _
        // Predicated region
        $region41: #{tpu_custom_call.1} parent=31 // pred_check
          %p652 = pneg %p153
        $region42: #{tpu_custom_call.1} parent=31 // pred_check_branch
          %654 = sbr.rel (%p652) target = $region44
        $region43: #{tpu_custom_call.1} parent=31 // pred_region
          %s655 = sand.u32 %s43, 1
          %s656 = scalar_lea.sflag [#allocation7], %s655
          %s657 = sand.u32 %s143, 1
          %s658 = smul.addr %s657, 64
          %s659 = scalar_lea.vmem [#allocation6], %s658
          %661 = vsyncadd %s656, 0
          %s662 = smul.addr %s51, 16
          %s663 = smul.addr %s662, 4
          %s664 = scalar_lea.hbm %s3, %s663
          %s665 = sshll.u32 %s664, 4
          %s666 = int_to_ptr.hbm [resolvable:$true] %s665
          %s667 = sshll.u32 %s659, 4
          %s668 = int_to_ptr.vmem [resolvable:$true] %s667
          %673 = dma.hbm_to_vmem [thread:$0]  %s666, 1024, %s668, %s656, 64, 64, 4
        $region44: #{tpu_custom_call.1} parent=31 // pred_fallthru
          _
        // Predicated region
        $region45: #{tpu_custom_call.1} parent=31 // pred_check
          %p674 = pneg %p179
        $region46: #{tpu_custom_call.1} parent=31 // pred_check_branch
          %676 = sbr.rel (%p674) target = $region48
        $region47: #{tpu_custom_call.1} parent=31 // pred_region
          %p677 = scmp.lt.s32.totalorder %s51, 1
          %s678 = scalar_select %p677, %s51, 1
          %s679 = scalar_lea.vmem %s4, %s678
        $region48: #{tpu_custom_call.1} parent=31 // pred_fallthru
          _
        // Predicated region
        $region49: #{tpu_custom_call.1} parent=31 // pred_check
          %p680 = pneg %p205
        $region50: #{tpu_custom_call.1} parent=31 // pred_check_branch
          %682 = sbr.rel (%p680) target = $region52
        $region51: #{tpu_custom_call.1} parent=31 // pred_region
          %s683 = sand.u32 %s43, 1
          %s684 = scalar_lea.sflag [#allocation7], %s683
          %s685 = sand.u32 %s195, 1
          %s686 = smul.addr %s685, 64
          %s687 = scalar_lea.vmem [#allocation8], %s686
          %689 = vsyncadd %s684, 0
          %s690 = smul.addr %s51, 16
          %s691 = smul.addr %s690, 4
          %s692 = scalar_lea.hbm %s5, %s691
          %s693 = sshll.u32 %s692, 4
          %s694 = int_to_ptr.hbm [resolvable:$true] %s693
          %s695 = sshll.u32 %s687, 4
          %s696 = int_to_ptr.vmem [resolvable:$true] %s695
          %701 = dma.hbm_to_vmem [thread:$0]  %s694, 1024, %s696, %s684, 64, 64, 4
        $region52: #{tpu_custom_call.1} parent=31 // pred_fallthru
          _
        // Predicated region
        $region53: #{tpu_custom_call.1} parent=31 // pred_check
          %p702 = pneg %p231
        $region54: #{tpu_custom_call.1} parent=31 // pred_check_branch
          %704 = sbr.rel (%p702) target = $region56
        $region55: #{tpu_custom_call.1} parent=31 // pred_region
          %s705 = sand.u32 %s43, 1
          %s706 = scalar_lea.sflag [#allocation10], %s705
          %s707 = sand.u32 %s221, 1
          %s708 = smul.addr %s707, 32
          %s709 = scalar_lea.vmem [#allocation9], %s708
          %711 = vsyncadd %s706, 0
          %s712 = smul.addr %s51, 8
          %s713 = smul.addr %s712, 4
          %s714 = scalar_lea.hbm %s6, %s713
          %s715 = sshll.u32 %s714, 4
          %s716 = int_to_ptr.hbm [resolvable:$true] %s715
          %s717 = sshll.u32 %s709, 4
          %s718 = int_to_ptr.vmem [resolvable:$true] %s717
          %723 = dma.hbm_to_vmem [thread:$0]  %s716, 512, %s718, %s706, 64, 64, 4
        $region56: #{tpu_custom_call.1} parent=31 // pred_fallthru
          _
        // Predicated region
        $region57: #{tpu_custom_call.1} parent=31 // pred_check
          %p724 = pneg %p257
        $region58: #{tpu_custom_call.1} parent=31 // pred_check_branch
          %726 = sbr.rel (%p724) target = $region60
        $region59: #{tpu_custom_call.1} parent=31 // pred_region
          %s727 = sand.u32 %s43, 1
          %s728 = scalar_lea.sflag [#allocation10], %s727
          %s729 = sand.u32 %s247, 1
          %s730 = smul.addr %s729, 64
          %s731 = scalar_lea.vmem [#allocation11], %s730
          %733 = vsyncadd %s728, 0
          %s734 = smul.addr %s51, 16
          %s735 = smul.addr %s734, 4
          %s736 = scalar_lea.hbm %s7, %s735
          %s737 = sshll.u32 %s736, 4
          %s738 = int_to_ptr.hbm [resolvable:$true] %s737
          %s739 = sshll.u32 %s731, 4
          %s740 = int_to_ptr.vmem [resolvable:$true] %s739
          %745 = dma.hbm_to_vmem [thread:$0]  %s738, 1024, %s740, %s728, 64, 64, 4
        $region60: #{tpu_custom_call.1} parent=31 // pred_fallthru
          _
        // Predicated region
        $region61: #{tpu_custom_call.1} parent=31 // pred_check
          %p746 = pneg %p283
        $region62: #{tpu_custom_call.1} parent=31 // pred_check_branch
          %748 = sbr.rel (%p746) target = $region64
        $region63: #{tpu_custom_call.1} parent=31 // pred_region
          %s749 = sand.u32 %s43, 1
          %s750 = scalar_lea.sflag [#allocation13], %s749
          %s751 = sand.u32 %s273, 1
          %s752 = smul.addr %s751, 32
          %s753 = scalar_lea.vmem [#allocation12], %s752
          %755 = vsyncadd %s750, 0
          %s756 = smul.addr %s51, 8
          %s757 = smul.addr %s756, 4
          %s758 = scalar_lea.hbm %s8, %s757
          %s759 = sshll.u32 %s758, 4
          %s760 = int_to_ptr.hbm [resolvable:$true] %s759
          %s761 = sshll.u32 %s753, 4
          %s762 = int_to_ptr.vmem [resolvable:$true] %s761
          %767 = dma.hbm_to_vmem [thread:$0]  %s760, 512, %s762, %s750, 64, 64, 4
        $region64: #{tpu_custom_call.1} parent=31 // pred_fallthru
          _
        // Predicated region
        $region65: #{tpu_custom_call.1} parent=31 // pred_check
          %p768 = pneg %p309
        $region66: #{tpu_custom_call.1} parent=31 // pred_check_branch
          %770 = sbr.rel (%p768) target = $region68
        $region67: #{tpu_custom_call.1} parent=31 // pred_region
          %s771 = sand.u32 %s43, 1
          %s772 = scalar_lea.sflag [#allocation13], %s771
          %s773 = sand.u32 %s299, 1
          %s774 = smul.addr %s773, 64
          %s775 = scalar_lea.vmem [#allocation14], %s774
          %777 = vsyncadd %s772, 0
          %s778 = smul.addr %s51, 16
          %s779 = smul.addr %s778, 4
          %s780 = scalar_lea.hbm %s9, %s779
          %s781 = sshll.u32 %s780, 4
          %s782 = int_to_ptr.hbm [resolvable:$true] %s781
          %s783 = sshll.u32 %s775, 4
          %s784 = int_to_ptr.vmem [resolvable:$true] %s783
          %789 = dma.hbm_to_vmem [thread:$0]  %s782, 1024, %s784, %s772, 64, 64, 4
        $region68: #{tpu_custom_call.1} parent=31 // pred_fallthru
          _
        // Predicated region
        $region69: #{tpu_custom_call.1} parent=31 // pred_check
          %p790 = pneg %p335
        $region70: #{tpu_custom_call.1} parent=31 // pred_check_branch
          %792 = sbr.rel (%p790) target = $region72
        $region71: #{tpu_custom_call.1} parent=31 // pred_region
          %p793 = scmp.lt.s32.totalorder %s51, 1
          %s794 = scalar_select %p793, %s51, 1
          %s795 = scalar_lea.vmem %s10, %s794
        $region72: #{tpu_custom_call.1} parent=31 // pred_fallthru
          _
        // Predicated region
        $region73: #{tpu_custom_call.1} parent=31 // pred_check
          %p796 = pneg %p361
        $region74: #{tpu_custom_call.1} parent=31 // pred_check_branch
          %798 = sbr.rel (%p796) target = $region76
        $region75: #{tpu_custom_call.1} parent=31 // pred_region
          %s799 = sand.u32 %s43, 1
          %s800 = scalar_lea.sflag [#allocation16], %s799
          %s801 = sand.u32 %s351, 1
          %s802 = scalar_lea.vmem [#allocation15], %s801
          %804 = vsyncadd %s800, 0
          %s805 = scalar_lea.hbm %s11, %s51
          %s807 = sshll.u32 %s805, 4
          %s808 = int_to_ptr.hbm [resolvable:$true] %s807
          %s809 = sshll.u32 %s802, 4
          %s810 = int_to_ptr.vmem [resolvable:$true] %s809
          %812 = dma.hbm_to_vmem [thread:$0]  %s808, 16, %s810, %s800
        $region76: #{tpu_custom_call.1} parent=31 // pred_fallthru
          _
        // Predicated region
        $region77: #{tpu_custom_call.1} parent=31 // pred_check
          %p813 = pneg %p387
        $region78: #{tpu_custom_call.1} parent=31 // pred_check_branch
          %815 = sbr.rel (%p813) target = $region80
        $region79: #{tpu_custom_call.1} parent=31 // pred_region
          %s816 = sand.u32 %s43, 1
          %s817 = scalar_lea.sflag [#allocation16], %s816
          %s818 = sand.u32 %s377, 1
          %s819 = scalar_lea.vmem [#allocation17], %s818
          %821 = vsyncadd %s817, 0
          %s822 = scalar_lea.hbm %s12, %s51
          %s824 = sshll.u32 %s822, 4
          %s825 = int_to_ptr.hbm [resolvable:$true] %s824
          %s826 = sshll.u32 %s819, 4
          %s827 = int_to_ptr.vmem [resolvable:$true] %s826
          %829 = dma.hbm_to_vmem [thread:$0]  %s825, 16, %s827, %s817
        $region80: #{tpu_custom_call.1} parent=31 // pred_fallthru
          _
        // Predicated region
        $region81: #{tpu_custom_call.1} parent=31 // pred_check
          %p830 = pneg %p413
        $region82: #{tpu_custom_call.1} parent=31 // pred_check_branch
          %832 = sbr.rel (%p830) target = $region84
        $region83: #{tpu_custom_call.1} parent=31 // pred_region
          %p833 = scmp.lt.s32.totalorder %s51, 1
          %s834 = scalar_select %p833, %s51, 1
          %s835 = smul.addr %s834, 32
          %s836 = smul.addr %s835, 4
          %s837 = scalar_lea.vmem %s13, %s836
        $region84: #{tpu_custom_call.1} parent=31 // pred_fallthru
          _
        // Predicated region
        $region85: #{tpu_custom_call.1} parent=31 // pred_check
          %p838 = pneg %p439
        $region86: #{tpu_custom_call.1} parent=31 // pred_check_branch
          %840 = sbr.rel (%p838) target = $region88
        $region87: #{tpu_custom_call.1} parent=31 // pred_region
          %p841 = scmp.lt.s32.totalorder %s51, 1
          %s842 = scalar_select %p841, %s51, 1
          %s843 = smul.addr %s842, 2
          %s844 = scalar_lea.vmem %s14, %s843
        $region88: #{tpu_custom_call.1} parent=31 // pred_fallthru
          _
        // Predicated region
        $region89: #{tpu_custom_call.1} parent=31 // pred_check
          %p845 = pneg %p465
        $region90: #{tpu_custom_call.1} parent=31 // pred_check_branch
          %847 = sbr.rel (%p845) target = $region92
        $region91: #{tpu_custom_call.1} parent=31 // pred_region
          %s848 = sand.u32 %s43, 1
          %s849 = scalar_lea.sflag [#allocation19], %s848
          %s850 = sand.u32 %s455, 1
          %s851 = smul.addr %s850, 128
          %s852 = scalar_lea.vmem [#allocation18], %s851
          %854 = vsyncadd %s849, 0
          %s855 = smul.addr %s51, 32
          %s856 = smul.addr %s855, 4
          %s857 = scalar_lea.hbm %s15, %s856
          %s858 = sshll.u32 %s857, 4
          %s859 = int_to_ptr.hbm [resolvable:$true] %s858
          %s860 = sshll.u32 %s852, 4
          %s861 = int_to_ptr.vmem [resolvable:$true] %s860
          %866 = dma.hbm_to_vmem [thread:$0]  %s859, 2048, %s861, %s849, 64, 64, 4
        $region92: #{tpu_custom_call.1} parent=31 // pred_fallthru
          _
        // Predicated region
        $region93: #{tpu_custom_call.1} parent=31 // pred_check
          %p867 = pneg %p491
        $region94: #{tpu_custom_call.1} parent=31 // pred_check_branch
          %869 = sbr.rel (%p867) target = $region96
        $region95: #{tpu_custom_call.1} parent=31 // pred_region
          %p870 = scmp.lt.s32.totalorder %s51, 1
          %s871 = scalar_select %p870, %s51, 1
          %s872 = scalar_lea.vmem %s16, %s871
        $region96: #{tpu_custom_call.1} parent=31 // pred_fallthru
          _
      $region32: #{tpu_custom_call.1} parent=5 // pred_fallthru
        _
      %p873 = scmp.le.s32.totalorder 1, %s43
      %p874 = scmp.lt.s32.totalorder %s43, 3
      %p875 = pnand %p873, %p874
      %p876 = pneg %p875
      // Predicated region
      $region97: #{tpu_custom_call.1} parent=5 // pred_check
        _
      $region98: #{tpu_custom_call.1} parent=5 // pred_check_branch
        %878 = sbr.rel (%p875) target = $region100
      $region99: #{tpu_custom_call.1} parent=5 // pred_region
        %s879 = ssub.s32 %s43, 1
        // Predicated region
        $region101: #{tpu_custom_call.1} parent=99 // pred_check
          %p880 = pneg %p81
        $region102: #{tpu_custom_call.1} parent=99 // pred_check_branch
          %882 = sbr.rel (%p880) target = $region104
        $region103: #{tpu_custom_call.1} parent=99 // pred_region
          %884 = dma.done [#allocation4], 2048
        $region104: #{tpu_custom_call.1} parent=99 // pred_fallthru
          _
        %s885 = sand.u32 %s48, 1
        %s886 = scalar_lea.sflag [#allocation7], %s885
        %s887 = sand.u32 %s146, 1
        %s888 = smul.addr %s887, 64
        %s889 = scalar_lea.vmem [#allocation6], %s888
        // Predicated region
        $region105: #{tpu_custom_call.1} parent=99 // pred_check
          %p890 = pneg %p159
        $region106: #{tpu_custom_call.1} parent=99 // pred_check_branch
          %892 = sbr.rel (%p890) target = $region108
        $region107: #{tpu_custom_call.1} parent=99 // pred_region
          %894 = dma.done %s886, 1024
        $region108: #{tpu_custom_call.1} parent=99 // pred_fallthru
          _
        %s895 = sand.u32 %s48, 1
        %s896 = scalar_lea.sflag [#allocation7], %s895
        %s897 = sand.u32 %s198, 1
        %s898 = smul.addr %s897, 64
        %s899 = scalar_lea.vmem [#allocation8], %s898
        // Predicated region
        $region109: #{tpu_custom_call.1} parent=99 // pred_check
          %p900 = pneg %p211
        $region110: #{tpu_custom_call.1} parent=99 // pred_check_branch
          %902 = sbr.rel (%p900) target = $region112
        $region111: #{tpu_custom_call.1} parent=99 // pred_region
          %904 = dma.done %s896, 1024
        $region112: #{tpu_custom_call.1} parent=99 // pred_fallthru
          _
        %s905 = sand.u32 %s48, 1
        %s906 = scalar_lea.sflag [#allocation10], %s905
        %s907 = sand.u32 %s224, 1
        %s908 = smul.addr %s907, 32
        %s909 = scalar_lea.vmem [#allocation9], %s908
        // Predicated region
        $region113: #{tpu_custom_call.1} parent=99 // pred_check
          %p910 = pneg %p237
        $region114: #{tpu_custom_call.1} parent=99 // pred_check_branch
          %912 = sbr.rel (%p910) target = $region116
        $region115: #{tpu_custom_call.1} parent=99 // pred_region
          %914 = dma.done %s906, 512
        $region116: #{tpu_custom_call.1} parent=99 // pred_fallthru
          _
        %s915 = sand.u32 %s48, 1
        %s916 = scalar_lea.sflag [#allocation10], %s915
        %s917 = sand.u32 %s250, 1
        %s918 = smul.addr %s917, 64
        %s919 = scalar_lea.vmem [#allocation11], %s918
        // Predicated region
        $region117: #{tpu_custom_call.1} parent=99 // pred_check
          %p920 = pneg %p263
        $region118: #{tpu_custom_call.1} parent=99 // pred_check_branch
          %922 = sbr.rel (%p920) target = $region120
        $region119: #{tpu_custom_call.1} parent=99 // pred_region
          %924 = dma.done %s916, 1024
        $region120: #{tpu_custom_call.1} parent=99 // pred_fallthru
          _
        %s925 = sand.u32 %s48, 1
        %s926 = scalar_lea.sflag [#allocation13], %s925
        %s927 = sand.u32 %s276, 1
        %s928 = smul.addr %s927, 32
        %s929 = scalar_lea.vmem [#allocation12], %s928
        // Predicated region
        $region121: #{tpu_custom_call.1} parent=99 // pred_check
          %p930 = pneg %p289
        $region122: #{tpu_custom_call.1} parent=99 // pred_check_branch
          %932 = sbr.rel (%p930) target = $region124
        $region123: #{tpu_custom_call.1} parent=99 // pred_region
          %934 = dma.done %s926, 512
        $region124: #{tpu_custom_call.1} parent=99 // pred_fallthru
          _
        %s935 = sand.u32 %s48, 1
        %s936 = scalar_lea.sflag [#allocation13], %s935
        %s937 = sand.u32 %s302, 1
        %s938 = smul.addr %s937, 64
        %s939 = scalar_lea.vmem [#allocation14], %s938
        // Predicated region
        $region125: #{tpu_custom_call.1} parent=99 // pred_check
          %p940 = pneg %p315
        $region126: #{tpu_custom_call.1} parent=99 // pred_check_branch
          %942 = sbr.rel (%p940) target = $region128
        $region127: #{tpu_custom_call.1} parent=99 // pred_region
          %944 = dma.done %s936, 1024
        $region128: #{tpu_custom_call.1} parent=99 // pred_fallthru
          _
        %s945 = sand.u32 %s48, 1
        %s946 = scalar_lea.sflag [#allocation16], %s945
        %s947 = sand.u32 %s354, 1
        %s948 = scalar_lea.vmem [#allocation15], %s947
        // Predicated region
        $region129: #{tpu_custom_call.1} parent=99 // pred_check
          %p949 = pneg %p367
        $region130: #{tpu_custom_call.1} parent=99 // pred_check_branch
          %951 = sbr.rel (%p949) target = $region132
        $region131: #{tpu_custom_call.1} parent=99 // pred_region
          %953 = dma.done %s946, 16
        $region132: #{tpu_custom_call.1} parent=99 // pred_fallthru
          _
        %s954 = sand.u32 %s48, 1
        %s955 = scalar_lea.sflag [#allocation16], %s954
        %s956 = sand.u32 %s380, 1
        %s957 = scalar_lea.vmem [#allocation17], %s956
        // Predicated region
        $region133: #{tpu_custom_call.1} parent=99 // pred_check
          %p958 = pneg %p393
        $region134: #{tpu_custom_call.1} parent=99 // pred_check_branch
          %960 = sbr.rel (%p958) target = $region136
        $region135: #{tpu_custom_call.1} parent=99 // pred_region
          %962 = dma.done %s955, 16
        $region136: #{tpu_custom_call.1} parent=99 // pred_fallthru
          _
        %s963 = sand.u32 %s48, 1
        %s964 = scalar_lea.sflag [#allocation19], %s963
        %s965 = sand.u32 %s458, 1
        %s966 = smul.addr %s965, 128
        %s967 = scalar_lea.vmem [#allocation18], %s966
        // Predicated region
        $region137: #{tpu_custom_call.1} parent=99 // pred_check
          %p968 = pneg %p471
        $region138: #{tpu_custom_call.1} parent=99 // pred_check_branch
          %970 = sbr.rel (%p968) target = $region140
        $region139: #{tpu_custom_call.1} parent=99 // pred_region
          %972 = dma.done %s964, 2048
        $region140: #{tpu_custom_call.1} parent=99 // pred_fallthru
          _
        // Predicated region
        $region141: #{tpu_custom_call.1} parent=99 // pred_check
          %p973 = pneg %p518
        $region142: #{tpu_custom_call.1} parent=99 // pred_check_branch
          %975 = sbr.rel (%p973) target = $region144
        $region143: #{tpu_custom_call.1} parent=99 // pred_region
          %977 = dma.done [#allocation19], 16
        $region144: #{tpu_custom_call.1} parent=99 // pred_fallthru
          _
        %p978 = pneg %p81
        %p979 = pneg %p78
        %p980 = scmp.lt.s32.totalorder %s53, 1
        %s981 = scalar_select %p980, %s53, 1
        %s982 = scalar_lea.vmem %s1, %s981
        %p983 = pneg %p107
        %p984 = pneg %p104
        %p985 = scmp.lt.s32.totalorder %s53, 1
        %s986 = scalar_select %p985, %s53, 1
        %s987 = scalar_lea.vmem %s2, %s986
        %p988 = pneg %p133
        %p989 = pneg %p130
        %s990 = sand.u32 %s48, 1
        %s991 = scalar_lea.sflag [#allocation7], %s990
        %s992 = sand.u32 %s146, 1
        %s993 = smul.addr %s992, 64
        %s994 = scalar_lea.vmem [#allocation6], %s993
        %p995 = pneg %p159
        %p996 = pneg %p156
        %p997 = scmp.lt.s32.totalorder %s53, 1
        %s998 = scalar_select %p997, %s53, 1
        %s999 = scalar_lea.vmem %s4, %s998
        %p1000 = pneg %p185
        %p1001 = pneg %p182
        %s1002 = sand.u32 %s48, 1
        %s1003 = scalar_lea.sflag [#allocation7], %s1002
        %s1004 = sand.u32 %s198, 1
        %s1005 = smul.addr %s1004, 64
        %s1006 = scalar_lea.vmem [#allocation8], %s1005
        %p1007 = pneg %p211
        %p1008 = pneg %p208
        %s1009 = sand.u32 %s48, 1
        %s1010 = scalar_lea.sflag [#allocation10], %s1009
        %s1011 = sand.u32 %s224, 1
        %s1012 = smul.addr %s1011, 32
        %s1013 = scalar_lea.vmem [#allocation9], %s1012
        %p1014 = pneg %p237
        %p1015 = pneg %p234
        %s1016 = sand.u32 %s48, 1
        %s1017 = scalar_lea.sflag [#allocation10], %s1016
        %s1018 = sand.u32 %s250, 1
        %s1019 = smul.addr %s1018, 64
        %s1020 = scalar_lea.vmem [#allocation11], %s1019
        %p1021 = pneg %p263
        %p1022 = pneg %p260
        %s1023 = sand.u32 %s48, 1
        %s1024 = scalar_lea.sflag [#allocation13], %s1023
        %s1025 = sand.u32 %s276, 1
        %s1026 = smul.addr %s1025, 32
        %s1027 = scalar_lea.vmem [#allocation12], %s1026
        %p1028 = pneg %p289
        %p1029 = pneg %p286
        %s1030 = sand.u32 %s48, 1
        %s1031 = scalar_lea.sflag [#allocation13], %s1030
        %s1032 = sand.u32 %s302, 1
        %s1033 = smul.addr %s1032, 64
        %s1034 = scalar_lea.vmem [#allocation14], %s1033
        %p1035 = pneg %p315
        %p1036 = pneg %p312
        %p1037 = scmp.lt.s32.totalorder %s53, 1
        %s1038 = scalar_select %p1037, %s53, 1
        %s1039 = scalar_lea.vmem %s10, %s1038
        %p1040 = pneg %p341
        %p1041 = pneg %p338
        %s1042 = sand.u32 %s48, 1
        %s1043 = scalar_lea.sflag [#allocation16], %s1042
        %s1044 = sand.u32 %s354, 1
        %s1045 = scalar_lea.vmem [#allocation15], %s1044
        %p1046 = pneg %p367
        %p1047 = pneg %p364
        %s1048 = sand.u32 %s48, 1
        %s1049 = scalar_lea.sflag [#allocation16], %s1048
        %s1050 = sand.u32 %s380, 1
        %s1051 = scalar_lea.vmem [#allocation17], %s1050
        %p1052 = pneg %p393
        %p1053 = pneg %p390
        %p1054 = scmp.lt.s32.totalorder %s53, 1
        %s1055 = scalar_select %p1054, %s53, 1
        %s1056 = smul.addr %s1055, 32
        %s1057 = smul.addr %s1056, 4
        %s1058 = scalar_lea.vmem %s13, %s1057
        %p1059 = pneg %p419
        %p1060 = pneg %p416
        %p1061 = scmp.lt.s32.totalorder %s53, 1
        %s1062 = scalar_select %p1061, %s53, 1
        %s1063 = smul.addr %s1062, 2
        %s1064 = scalar_lea.vmem %s14, %s1063
        %p1065 = pneg %p445
        %p1066 = pneg %p442
        %s1067 = sand.u32 %s48, 1
        %s1068 = scalar_lea.sflag [#allocation19], %s1067
        %s1069 = sand.u32 %s458, 1
        %s1070 = smul.addr %s1069, 128
        %s1071 = scalar_lea.vmem [#allocation18], %s1070
        %p1072 = pneg %p471
        %p1073 = pneg %p468
        %p1074 = scmp.lt.s32.totalorder %s53, 1
        %s1075 = scalar_select %p1074, %s53, 1
        %s1076 = scalar_lea.vmem %s16, %s1075
        %p1077 = pneg %p497
        %p1078 = pneg %p494
        %p1079 = pneg %p518
        %p1080 = pneg %p515
        %p1081 = pneg %p539
        %p1082 = pneg %p536
        %p1083 = pneg %p560
        %p1084 = pneg %p557
        %p1085 = pneg %p586
        %p1086 = pneg %p583
        %p1087 = scmp.lt.s32.totalorder %s53, 1
        %s1088 = scalar_select %p1087, %s53, 1
        %s1089 = scalar_lea.vmem %s1, %s1088
        %p1090 = scmp.lt.s32.totalorder %s53, 1
        %s1091 = scalar_select %p1090, %s53, 1
        %s1092 = scalar_lea.vmem %s2, %s1091
        %p1093 = scmp.lt.s32.totalorder %s53, 1
        %s1094 = scalar_select %p1093, %s53, 1
        %s1095 = scalar_lea.vmem %s4, %s1094
        %p1096 = scmp.lt.s32.totalorder %s53, 1
        %s1097 = scalar_select %p1096, %s53, 1
        %s1098 = scalar_lea.vmem %s10, %s1097
        %p1099 = scmp.lt.s32.totalorder %s53, 1
        %s1100 = scalar_select %p1099, %s53, 1
        %s1101 = smul.addr %s1100, 32
        %s1102 = smul.addr %s1101, 4
        %s1103 = scalar_lea.vmem %s13, %s1102
        %p1104 = scmp.lt.s32.totalorder %s53, 1
        %s1105 = scalar_select %p1104, %s53, 1
        %s1106 = smul.addr %s1105, 2
        %s1107 = scalar_lea.vmem %s14, %s1106
        %p1108 = scmp.lt.s32.totalorder %s53, 1
        %s1109 = scalar_select %p1108, %s53, 1
        %s1110 = scalar_lea.vmem %s16, %s1109
        %p1112 = scmp.eq.s32.totalorder %s53, 0
        // Predicated region
        $region145: #{tpu_custom_call.1} parent=99 // pred_check
          %p1113 = pneg %p1112
        $region146: #{tpu_custom_call.1} parent=99 // pred_check_branch
          %1115 = sbr.rel (%p1113) target = $region148
        $region147: #{tpu_custom_call.1} parent=99 // pred_region
          %v1116 = vld [vmem:[#allocation3] sm:$0xff]
          %v1117 = vld [vmem:[#allocation3 + $0x8] sm:$0xff]
          %v1118 = vld [vmem:[#allocation3 + $0x10] sm:$0xff]
          %v1119 = vld [vmem:[#allocation3 + $0x18] sm:$0xff]
          %v1120 = vld [vmem:[#allocation3 + $0x20] sm:$0xff]
          %v1121 = vld [vmem:[#allocation3 + $0x28] sm:$0xff]
          %v1122 = vld [vmem:[#allocation3 + $0x30] sm:$0xff]
          %v1123 = vld [vmem:[#allocation3 + $0x38] sm:$0xff]
          %v1124 = vld [vmem:[#allocation3 + $0x40] sm:$0xff]
          %v1125 = vld [vmem:[#allocation3 + $0x48] sm:$0xff]
          %v1126 = vld [vmem:[#allocation3 + $0x50] sm:$0xff]
          %v1127 = vld [vmem:[#allocation3 + $0x58] sm:$0xff]
          %v1128 = vld [vmem:[#allocation3 + $0x60] sm:$0xff]
          %v1129 = vld [vmem:[#allocation3 + $0x68] sm:$0xff]
          %v1130 = vld [vmem:[#allocation3 + $0x70] sm:$0xff]
          %v1131 = vld [vmem:[#allocation3 + $0x78] sm:$0xff]
          %1132 = vst [vmem:[#allocation21] sm:$0xff] %v1116
          %1133 = vst [vmem:[#allocation21 + $0x8] sm:$0xff] %v1117
          %1134 = vst [vmem:[#allocation21 + $0x10] sm:$0xff] %v1118
          %1135 = vst [vmem:[#allocation21 + $0x18] sm:$0xff] %v1119
          %1136 = vst [vmem:[#allocation21 + $0x20] sm:$0xff] %v1120
          %1137 = vst [vmem:[#allocation21 + $0x28] sm:$0xff] %v1121
          %1138 = vst [vmem:[#allocation21 + $0x30] sm:$0xff] %v1122
          %1139 = vst [vmem:[#allocation21 + $0x38] sm:$0xff] %v1123
          %1140 = vst [vmem:[#allocation21 + $0x40] sm:$0xff] %v1124
          %1141 = vst [vmem:[#allocation21 + $0x48] sm:$0xff] %v1125
          %1142 = vst [vmem:[#allocation21 + $0x50] sm:$0xff] %v1126
          %1143 = vst [vmem:[#allocation21 + $0x58] sm:$0xff] %v1127
          %1144 = vst [vmem:[#allocation21 + $0x60] sm:$0xff] %v1128
          %1145 = vst [vmem:[#allocation21 + $0x68] sm:$0xff] %v1129
          %1146 = vst [vmem:[#allocation21 + $0x70] sm:$0xff] %v1130
          %1147 = vst [vmem:[#allocation21 + $0x78] sm:$0xff] %v1131
        $region148: #{tpu_custom_call.1} parent=99 // pred_fallthru
          _
        %v1148 = vld [vmem:[#allocation21] sm:$0xff]
        %v1149 = vld [vmem:[#allocation21 + $0x8] sm:$0xff]
        %v1150 = vld [vmem:[#allocation21 + $0x10] sm:$0xff]
        %v1151 = vld [vmem:[#allocation21 + $0x18] sm:$0xff]
        %v1152 = vld [vmem:[#allocation21 + $0x20] sm:$0xff]
        %v1153 = vld [vmem:[#allocation21 + $0x28] sm:$0xff]
        %v1154 = vld [vmem:[#allocation21 + $0x30] sm:$0xff]
        %v1155 = vld [vmem:[#allocation21 + $0x38] sm:$0xff]
        %v1156 = vld [vmem:[#allocation21 + $0x40] sm:$0xff]
        %v1157 = vld [vmem:[#allocation21 + $0x48] sm:$0xff]
        %v1158 = vld [vmem:[#allocation21 + $0x50] sm:$0xff]
        %v1159 = vld [vmem:[#allocation21 + $0x58] sm:$0xff]
        %v1160 = vld [vmem:[#allocation21 + $0x60] sm:$0xff]
        %v1161 = vld [vmem:[#allocation21 + $0x68] sm:$0xff]
        %v1162 = vld [vmem:[#allocation21 + $0x70] sm:$0xff]
        %v1163 = vld [vmem:[#allocation21 + $0x78] sm:$0xff]
        %v1164 = vld [vmem:[%s1089] sm:$0x1]
        %v1165 = vld [vmem:[%s1092] sm:$0x1]
        %1166 = vadd.xlane.f32.xlu0 %v1148
        %v1167 = vpop.xlane.xlu0 %1166
        %1168 = vadd.xlane.f32.xlu0 %v1149
        %v1169 = vpop.xlane.xlu0 %1168
        %1170 = vadd.xlane.f32.xlu0 %v1150
        %v1171 = vpop.xlane.xlu0 %1170
        %1172 = vadd.xlane.f32.xlu0 %v1151
        %v1173 = vpop.xlane.xlu0 %1172
        %1174 = vadd.xlane.f32.xlu0 %v1152
        %v1175 = vpop.xlane.xlu0 %1174
        %1176 = vadd.xlane.f32.xlu0 %v1153
        %v1177 = vpop.xlane.xlu0 %1176
        %1178 = vadd.xlane.f32.xlu0 %v1154
        %v1179 = vpop.xlane.xlu0 %1178
        %1180 = vadd.xlane.f32.xlu0 %v1155
        %v1181 = vpop.xlane.xlu0 %1180
        %1182 = vadd.xlane.f32.xlu0 %v1156
        %v1183 = vpop.xlane.xlu0 %1182
        %1184 = vadd.xlane.f32.xlu0 %v1157
        %v1185 = vpop.xlane.xlu0 %1184
        %1186 = vadd.xlane.f32.xlu0 %v1158
        %v1187 = vpop.xlane.xlu0 %1186
        %1188 = vadd.xlane.f32.xlu0 %v1159
        %v1189 = vpop.xlane.xlu0 %1188
        %1190 = vadd.xlane.f32.xlu0 %v1160
        %v1191 = vpop.xlane.xlu0 %1190
        %1192 = vadd.xlane.f32.xlu0 %v1161
        %v1193 = vpop.xlane.xlu0 %1192
        %1194 = vadd.xlane.f32.xlu0 %v1162
        %v1195 = vpop.xlane.xlu0 %1194
        %1196 = vadd.xlane.f32.xlu0 %v1163
        %v1197 = vpop.xlane.xlu0 %1196
        %v1198 = vrcp.pop 128.0
        %v1199 = vmul.f32 128.0, %v1198
        %v1200 = vsub.f32 1.0, %v1199
        %v1201 = vmul.f32 %v1198, %v1200
        %v1202 = vadd.f32 %v1198, %v1201
        %vm1203 = vweird.f32 %v1198
        %v1204 = vsel %vm1203, %v1198, %v1202
        %v1205 = vmul.f32 %v1167, %v1204
        %v1206 = vmul.f32 %v1169, %v1204
        %v1207 = vmul.f32 %v1171, %v1204
        %v1208 = vmul.f32 %v1173, %v1204
        %v1209 = vmul.f32 %v1175, %v1204
        %v1210 = vmul.f32 %v1177, %v1204
        %v1211 = vmul.f32 %v1179, %v1204
        %v1212 = vmul.f32 %v1181, %v1204
        %v1213 = vmul.f32 %v1183, %v1204
        %v1214 = vmul.f32 %v1185, %v1204
        %v1215 = vmul.f32 %v1187, %v1204
        %v1216 = vmul.f32 %v1189, %v1204
        %v1217 = vmul.f32 %v1191, %v1204
        %v1218 = vmul.f32 %v1193, %v1204
        %v1219 = vmul.f32 %v1195, %v1204
        %v1220 = vmul.f32 %v1197, %v1204
        %v1221 = vsub.f32 %v1148, %v1205
        %v1222 = vsub.f32 %v1149, %v1206
        %v1223 = vsub.f32 %v1150, %v1207
        %v1224 = vsub.f32 %v1151, %v1208
        %v1225 = vsub.f32 %v1152, %v1209
        %v1226 = vsub.f32 %v1153, %v1210
        %v1227 = vsub.f32 %v1154, %v1211
        %v1228 = vsub.f32 %v1155, %v1212
        %v1229 = vsub.f32 %v1156, %v1213
        %v1230 = vsub.f32 %v1157, %v1214
        %v1231 = vsub.f32 %v1158, %v1215
        %v1232 = vsub.f32 %v1159, %v1216
        %v1233 = vsub.f32 %v1160, %v1217
        %v1234 = vsub.f32 %v1161, %v1218
        %v1235 = vsub.f32 %v1162, %v1219
        %v1236 = vsub.f32 %v1163, %v1220
        %v1237 = vmul.f32 %v1221, %v1221
        %v1238 = vmul.f32 %v1222, %v1222
        %v1239 = vmul.f32 %v1223, %v1223
        %v1240 = vmul.f32 %v1224, %v1224
        %v1241 = vmul.f32 %v1225, %v1225
        %v1242 = vmul.f32 %v1226, %v1226
        %v1243 = vmul.f32 %v1227, %v1227
        %v1244 = vmul.f32 %v1228, %v1228
        %v1245 = vmul.f32 %v1229, %v1229
        %v1246 = vmul.f32 %v1230, %v1230
        %v1247 = vmul.f32 %v1231, %v1231
        %v1248 = vmul.f32 %v1232, %v1232
        %v1249 = vmul.f32 %v1233, %v1233
        %v1250 = vmul.f32 %v1234, %v1234
        %v1251 = vmul.f32 %v1235, %v1235
        %v1252 = vmul.f32 %v1236, %v1236
        %1253 = vadd.xlane.f32.xlu0 %v1237
        %v1254 = vpop.xlane.xlu0 %1253
        %1255 = vadd.xlane.f32.xlu0 %v1238
        %v1256 = vpop.xlane.xlu0 %1255
        %1257 = vadd.xlane.f32.xlu0 %v1239
        %v1258 = vpop.xlane.xlu0 %1257
        %1259 = vadd.xlane.f32.xlu0 %v1240
        %v1260 = vpop.xlane.xlu0 %1259
        %1261 = vadd.xlane.f32.xlu0 %v1241
        %v1262 = vpop.xlane.xlu0 %1261
        %1263 = vadd.xlane.f32.xlu0 %v1242
        %v1264 = vpop.xlane.xlu0 %1263
        %1265 = vadd.xlane.f32.xlu0 %v1243
        %v1266 = vpop.xlane.xlu0 %1265
        %1267 = vadd.xlane.f32.xlu0 %v1244
        %v1268 = vpop.xlane.xlu0 %1267
        %1269 = vadd.xlane.f32.xlu0 %v1245
        %v1270 = vpop.xlane.xlu0 %1269
        %1271 = vadd.xlane.f32.xlu0 %v1246
        %v1272 = vpop.xlane.xlu0 %1271
        %1273 = vadd.xlane.f32.xlu0 %v1247
        %v1274 = vpop.xlane.xlu0 %1273
        %1275 = vadd.xlane.f32.xlu0 %v1248
        %v1276 = vpop.xlane.xlu0 %1275
        %1277 = vadd.xlane.f32.xlu0 %v1249
        %v1278 = vpop.xlane.xlu0 %1277
        %1279 = vadd.xlane.f32.xlu0 %v1250
        %v1280 = vpop.xlane.xlu0 %1279
        %1281 = vadd.xlane.f32.xlu0 %v1251
        %v1282 = vpop.xlane.xlu0 %1281
        %1283 = vadd.xlane.f32.xlu0 %v1252
        %v1284 = vpop.xlane.xlu0 %1283
        %v1285 = vmul.f32 %v1254, %v1204
        %v1286 = vmul.f32 %v1256, %v1204
        %v1287 = vmul.f32 %v1258, %v1204
        %v1288 = vmul.f32 %v1260, %v1204
        %v1289 = vmul.f32 %v1262, %v1204
        %v1290 = vmul.f32 %v1264, %v1204
        %v1291 = vmul.f32 %v1266, %v1204
        %v1292 = vmul.f32 %v1268, %v1204
        %v1293 = vmul.f32 %v1270, %v1204
        %v1294 = vmul.f32 %v1272, %v1204
        %v1295 = vmul.f32 %v1274, %v1204
        %v1296 = vmul.f32 %v1276, %v1204
        %v1297 = vmul.f32 %v1278, %v1204
        %v1298 = vmul.f32 %v1280, %v1204
        %v1299 = vmul.f32 %v1282, %v1204
        %v1300 = vmul.f32 %v1284, %v1204
        %v1301 = vadd.f32 %v1285, 1e-06
        %v1302 = vadd.f32 %v1286, 1e-06
        %v1303 = vadd.f32 %v1287, 1e-06
        %v1304 = vadd.f32 %v1288, 1e-06
        %v1305 = vadd.f32 %v1289, 1e-06
        %v1306 = vadd.f32 %v1290, 1e-06
        %v1307 = vadd.f32 %v1291, 1e-06
        %v1308 = vadd.f32 %v1292, 1e-06
        %v1309 = vadd.f32 %v1293, 1e-06
        %v1310 = vadd.f32 %v1294, 1e-06
        %v1311 = vadd.f32 %v1295, 1e-06
        %v1312 = vadd.f32 %v1296, 1e-06
        %v1313 = vadd.f32 %v1297, 1e-06
        %v1314 = vadd.f32 %v1298, 1e-06
        %v1315 = vadd.f32 %v1299, 1e-06
        %v1316 = vadd.f32 %v1300, 1e-06
        %v1317 = vrsqrt.pop %v1301
        %v1318 = vmul.f32 %v1317, %v1301
        %v1319 = vmul.f32 %v1318, %v1317
        %v1320 = vmul.f32 0.5, %v1319
        %v1321 = vsub.f32 1.5, %v1320
        %v1322 = vmul.f32 %v1317, %v1321
        %vm1323 = vweird.f32 %v1301
        %vm1324 = vweird.f32 %v1317
        %vm1325 = vmor %vm1323, %vm1324
        %v1326 = vsel %vm1325, %v1317, %v1322
        %v1327 = vrsqrt.pop %v1302
        %v1328 = vmul.f32 %v1327, %v1302
        %v1329 = vmul.f32 %v1328, %v1327
        %v1330 = vmul.f32 0.5, %v1329
        %v1331 = vsub.f32 1.5, %v1330
        %v1332 = vmul.f32 %v1327, %v1331
        %vm1333 = vweird.f32 %v1302
        %vm1334 = vweird.f32 %v1327
        %vm1335 = vmor %vm1333, %vm1334
        %v1336 = vsel %vm1335, %v1327, %v1332
        %v1337 = vrsqrt.pop %v1303
        %v1338 = vmul.f32 %v1337, %v1303
        %v1339 = vmul.f32 %v1338, %v1337
        %v1340 = vmul.f32 0.5, %v1339
        %v1341 = vsub.f32 1.5, %v1340
        %v1342 = vmul.f32 %v1337, %v1341
        %vm1343 = vweird.f32 %v1303
        %vm1344 = vweird.f32 %v1337
        %vm1345 = vmor %vm1343, %vm1344
        %v1346 = vsel %vm1345, %v1337, %v1342
        %v1347 = vrsqrt.pop %v1304
        %v1348 = vmul.f32 %v1347, %v1304
        %v1349 = vmul.f32 %v1348, %v1347
        %v1350 = vmul.f32 0.5, %v1349
        %v1351 = vsub.f32 1.5, %v1350
        %v1352 = vmul.f32 %v1347, %v1351
        %vm1353 = vweird.f32 %v1304
        %vm1354 = vweird.f32 %v1347
        %vm1355 = vmor %vm1353, %vm1354
        %v1356 = vsel %vm1355, %v1347, %v1352
        %v1357 = vrsqrt.pop %v1305
        %v1358 = vmul.f32 %v1357, %v1305
        %v1359 = vmul.f32 %v1358, %v1357
        %v1360 = vmul.f32 0.5, %v1359
        %v1361 = vsub.f32 1.5, %v1360
        %v1362 = vmul.f32 %v1357, %v1361
        %vm1363 = vweird.f32 %v1305
        %vm1364 = vweird.f32 %v1357
        %vm1365 = vmor %vm1363, %vm1364
        %v1366 = vsel %vm1365, %v1357, %v1362
        %v1367 = vrsqrt.pop %v1306
        %v1368 = vmul.f32 %v1367, %v1306
        %v1369 = vmul.f32 %v1368, %v1367
        %v1370 = vmul.f32 0.5, %v1369
        %v1371 = vsub.f32 1.5, %v1370
        %v1372 = vmul.f32 %v1367, %v1371
        %vm1373 = vweird.f32 %v1306
        %vm1374 = vweird.f32 %v1367
        %vm1375 = vmor %vm1373, %vm1374
        %v1376 = vsel %vm1375, %v1367, %v1372
        %v1377 = vrsqrt.pop %v1307
        %v1378 = vmul.f32 %v1377, %v1307
        %v1379 = vmul.f32 %v1378, %v1377
        %v1380 = vmul.f32 0.5, %v1379
        %v1381 = vsub.f32 1.5, %v1380
        %v1382 = vmul.f32 %v1377, %v1381
        %vm1383 = vweird.f32 %v1307
        %vm1384 = vweird.f32 %v1377
        %vm1385 = vmor %vm1383, %vm1384
        %v1386 = vsel %vm1385, %v1377, %v1382
        %v1387 = vrsqrt.pop %v1308
        %v1388 = vmul.f32 %v1387, %v1308
        %v1389 = vmul.f32 %v1388, %v1387
        %v1390 = vmul.f32 0.5, %v1389
        %v1391 = vsub.f32 1.5, %v1390
        %v1392 = vmul.f32 %v1387, %v1391
        %vm1393 = vweird.f32 %v1308
        %vm1394 = vweird.f32 %v1387
        %vm1395 = vmor %vm1393, %vm1394
        %v1396 = vsel %vm1395, %v1387, %v1392
        %v1397 = vrsqrt.pop %v1309
        %v1398 = vmul.f32 %v1397, %v1309
        %v1399 = vmul.f32 %v1398, %v1397
        %v1400 = vmul.f32 0.5, %v1399
        %v1401 = vsub.f32 1.5, %v1400
        %v1402 = vmul.f32 %v1397, %v1401
        %vm1403 = vweird.f32 %v1309
        %vm1404 = vweird.f32 %v1397
        %vm1405 = vmor %vm1403, %vm1404
        %v1406 = vsel %vm1405, %v1397, %v1402
        %v1407 = vrsqrt.pop %v1310
        %v1408 = vmul.f32 %v1407, %v1310
        %v1409 = vmul.f32 %v1408, %v1407
        %v1410 = vmul.f32 0.5, %v1409
        %v1411 = vsub.f32 1.5, %v1410
        %v1412 = vmul.f32 %v1407, %v1411
        %vm1413 = vweird.f32 %v1310
        %vm1414 = vweird.f32 %v1407
        %vm1415 = vmor %vm1413, %vm1414
        %v1416 = vsel %vm1415, %v1407, %v1412
        %v1417 = vrsqrt.pop %v1311
        %v1418 = vmul.f32 %v1417, %v1311
        %v1419 = vmul.f32 %v1418, %v1417
        %v1420 = vmul.f32 0.5, %v1419
        %v1421 = vsub.f32 1.5, %v1420
        %v1422 = vmul.f32 %v1417, %v1421
        %vm1423 = vweird.f32 %v1311
        %vm1424 = vweird.f32 %v1417
        %vm1425 = vmor %vm1423, %vm1424
        %v1426 = vsel %vm1425, %v1417, %v1422
        %v1427 = vrsqrt.pop %v1312
        %v1428 = vmul.f32 %v1427, %v1312
        %v1429 = vmul.f32 %v1428, %v1427
        %v1430 = vmul.f32 0.5, %v1429
        %v1431 = vsub.f32 1.5, %v1430
        %v1432 = vmul.f32 %v1427, %v1431
        %vm1433 = vweird.f32 %v1312
        %vm1434 = vweird.f32 %v1427
        %vm1435 = vmor %vm1433, %vm1434
        %v1436 = vsel %vm1435, %v1427, %v1432
        %v1437 = vrsqrt.pop %v1313
        %v1438 = vmul.f32 %v1437, %v1313
        %v1439 = vmul.f32 %v1438, %v1437
        %v1440 = vmul.f32 0.5, %v1439
        %v1441 = vsub.f32 1.5, %v1440
        %v1442 = vmul.f32 %v1437, %v1441
        %vm1443 = vweird.f32 %v1313
        %vm1444 = vweird.f32 %v1437
        %vm1445 = vmor %vm1443, %vm1444
        %v1446 = vsel %vm1445, %v1437, %v1442
        %v1447 = vrsqrt.pop %v1314
        %v1448 = vmul.f32 %v1447, %v1314
        %v1449 = vmul.f32 %v1448, %v1447
        %v1450 = vmul.f32 0.5, %v1449
        %v1451 = vsub.f32 1.5, %v1450
        %v1452 = vmul.f32 %v1447, %v1451
        %vm1453 = vweird.f32 %v1314
        %vm1454 = vweird.f32 %v1447
        %vm1455 = vmor %vm1453, %vm1454
        %v1456 = vsel %vm1455, %v1447, %v1452
        %v1457 = vrsqrt.pop %v1315
        %v1458 = vmul.f32 %v1457, %v1315
        %v1459 = vmul.f32 %v1458, %v1457
        %v1460 = vmul.f32 0.5, %v1459
        %v1461 = vsub.f32 1.5, %v1460
        %v1462 = vmul.f32 %v1457, %v1461
        %vm1463 = vweird.f32 %v1315
        %vm1464 = vweird.f32 %v1457
        %vm1465 = vmor %vm1463, %vm1464
        %v1466 = vsel %vm1465, %v1457, %v1462
        %v1467 = vrsqrt.pop %v1316
        %v1468 = vmul.f32 %v1467, %v1316
        %v1469 = vmul.f32 %v1468, %v1467
        %v1470 = vmul.f32 0.5, %v1469
        %v1471 = vsub.f32 1.5, %v1470
        %v1472 = vmul.f32 %v1467, %v1471
        %vm1473 = vweird.f32 %v1316
        %vm1474 = vweird.f32 %v1467
        %vm1475 = vmor %vm1473, %vm1474
        %v1476 = vsel %vm1475, %v1467, %v1472
        %v1477 = vmul.f32 %v1221, %v1326
        %v1478 = vmul.f32 %v1222, %v1336
        %v1479 = vmul.f32 %v1223, %v1346
        %v1480 = vmul.f32 %v1224, %v1356
        %v1481 = vmul.f32 %v1225, %v1366
        %v1482 = vmul.f32 %v1226, %v1376
        %v1483 = vmul.f32 %v1227, %v1386
        %v1484 = vmul.f32 %v1228, %v1396
        %v1485 = vmul.f32 %v1229, %v1406
        %v1486 = vmul.f32 %v1230, %v1416
        %v1487 = vmul.f32 %v1231, %v1426
        %v1488 = vmul.f32 %v1232, %v1436
        %v1489 = vmul.f32 %v1233, %v1446
        %v1490 = vmul.f32 %v1234, %v1456
        %v1491 = vmul.f32 %v1235, %v1466
        %v1492 = vmul.f32 %v1236, %v1476
        %v1494 = vperm.slane %v1164, 0
        %v1496 = vmul.f32 %v1477, %v1494
        %v1497 = vmul.f32 %v1478, %v1494
        %v1498 = vmul.f32 %v1479, %v1494
        %v1499 = vmul.f32 %v1480, %v1494
        %v1500 = vmul.f32 %v1481, %v1494
        %v1501 = vmul.f32 %v1482, %v1494
        %v1502 = vmul.f32 %v1483, %v1494
        %v1503 = vmul.f32 %v1484, %v1494
        %v1504 = vmul.f32 %v1485, %v1494
        %v1505 = vmul.f32 %v1486, %v1494
        %v1506 = vmul.f32 %v1487, %v1494
        %v1507 = vmul.f32 %v1488, %v1494
        %v1508 = vmul.f32 %v1489, %v1494
        %v1509 = vmul.f32 %v1490, %v1494
        %v1510 = vmul.f32 %v1491, %v1494
        %v1511 = vmul.f32 %v1492, %v1494
        %v1513 = vperm.slane %v1165, 0
        %v1515 = vadd.f32 %v1496, %v1513
        %v1516 = vadd.f32 %v1497, %v1513
        %v1517 = vadd.f32 %v1498, %v1513
        %v1518 = vadd.f32 %v1499, %v1513
        %v1519 = vadd.f32 %v1500, %v1513
        %v1520 = vadd.f32 %v1501, %v1513
        %v1521 = vadd.f32 %v1502, %v1513
        %v1522 = vadd.f32 %v1503, %v1513
        %v1523 = vadd.f32 %v1504, %v1513
        %v1524 = vadd.f32 %v1505, %v1513
        %v1525 = vadd.f32 %v1506, %v1513
        %v1526 = vadd.f32 %v1507, %v1513
        %v1527 = vadd.f32 %v1508, %v1513
        %v1528 = vadd.f32 %v1509, %v1513
        %v1529 = vadd.f32 %v1510, %v1513
        %v1530 = vadd.f32 %v1511, %v1513
        %v1531 = vpack.c.bf16 %v1516, %v1515
        %v1532 = vpack.c.bf16 %v1518, %v1517
        %v1533 = vpack.c.bf16 %v1520, %v1519
        %v1534 = vpack.c.bf16 %v1522, %v1521
        %v1535 = vpack.c.bf16 %v1524, %v1523
        %v1536 = vpack.c.bf16 %v1526, %v1525
        %v1537 = vpack.c.bf16 %v1528, %v1527
        %v1538 = vpack.c.bf16 %v1530, %v1529
        %v1539 = vld [vmem:[%s889] sm:$0xf]
        %v1540 = vld [vmem:[%s889 + $0x4] sm:$0xf]
        %v1541 = vld [vmem:[%s889 + $0x8] sm:$0xf]
        %v1542 = vld [vmem:[%s889 + $0xc] sm:$0xf]
        %v1543 = vld [vmem:[%s889 + $0x10] sm:$0xf]
        %v1544 = vld [vmem:[%s889 + $0x14] sm:$0xf]
        %v1545 = vld [vmem:[%s889 + $0x18] sm:$0xf]
        %v1546 = vld [vmem:[%s889 + $0x1c] sm:$0xf]
        %v1547 = vld [vmem:[%s889 + $0x20] sm:$0xf]
        %v1548 = vld [vmem:[%s889 + $0x24] sm:$0xf]
        %v1549 = vld [vmem:[%s889 + $0x28] sm:$0xf]
        %v1550 = vld [vmem:[%s889 + $0x2c] sm:$0xf]
        %v1551 = vld [vmem:[%s889 + $0x30] sm:$0xf]
        %v1552 = vld [vmem:[%s889 + $0x34] sm:$0xf]
        %v1553 = vld [vmem:[%s889 + $0x38] sm:$0xf]
        %v1554 = vld [vmem:[%s889 + $0x3c] sm:$0xf]
        %v1555 = vld [vmem:[%s1095] sm:$0x1]
        %v1557 = vperm.slane %v1555, 0
        %v1575 = vunpack.c.l.b16 %v1539
        %v1576 = vunpack.c.l.b16 %v1540
        %v1577 = vunpack.c.l.b16 %v1541
        %v1578 = vunpack.c.l.b16 %v1542
        %v1579 = vunpack.c.l.b16 %v1543
        %v1580 = vunpack.c.l.b16 %v1544
        %v1581 = vunpack.c.l.b16 %v1545
        %v1582 = vunpack.c.l.b16 %v1546
        %v1583 = vunpack.c.l.b16 %v1547
        %v1584 = vunpack.c.l.b16 %v1548
        %v1585 = vunpack.c.l.b16 %v1549
        %v1586 = vunpack.c.l.b16 %v1550
        %v1587 = vunpack.c.l.b16 %v1551
        %v1588 = vunpack.c.l.b16 %v1552
        %v1589 = vunpack.c.l.b16 %v1553
        %v1590 = vunpack.c.l.b16 %v1554
        %v1591 = vpack.c.b16 %v1576, %v1575
        %v1592 = vpack.c.b16 %v1578, %v1577
        %v1593 = vpack.c.b16 %v1580, %v1579
        %v1594 = vpack.c.b16 %v1582, %v1581
        %v1595 = vpack.c.b16 %v1584, %v1583
        %v1596 = vpack.c.b16 %v1586, %v1585
        %v1597 = vpack.c.b16 %v1588, %v1587
        %v1598 = vpack.c.b16 %v1590, %v1589
        %1607 = vmatpush.bf16.msra.mxu0 %v1598
        %1608 = vmatpush.bf16.msra.mxu0 %v1597
        %1609 = vmatpush.bf16.msra.mxu0 %v1596
        %1610 = vmatpush.bf16.msra.mxu0 %v1595
        %1611 = vmatpush.bf16.msra.mxu0 %v1594
        %1612 = vmatpush.bf16.msra.mxu0 %v1593
        %1613 = vmatpush.bf16.msra.mxu0 %v1592
        %1614 = vmatpush.bf16.msra.mxu0 %v1591
        %1615 = vmatmul.bf16.gmra.mxu0 %v1531
        %v1616 = vpop.f32.mrf.mxu0
        %v1617 = vadd.f32 %v1557, %v1616
        %v1618 = vpop.f32.mrf.mxu0
        %v1619 = vadd.f32 %v1557, %v1618
        %1620 = vmatmul.bf16.gmra.mxu0 %v1532
        %v1621 = vpop.f32.mrf.mxu0
        %v1622 = vadd.f32 %v1557, %v1621
        %v1623 = vpop.f32.mrf.mxu0
        %v1624 = vadd.f32 %v1557, %v1623
        %1625 = vmatmul.bf16.gmra.mxu0 %v1533
        %v1626 = vpop.f32.mrf.mxu0
        %v1627 = vadd.f32 %v1557, %v1626
        %v1628 = vpop.f32.mrf.mxu0
        %v1629 = vadd.f32 %v1557, %v1628
        %1630 = vmatmul.bf16.gmra.mxu0 %v1534
        %v1631 = vpop.f32.mrf.mxu0
        %v1632 = vadd.f32 %v1557, %v1631
        %v1633 = vpop.f32.mrf.mxu0
        %v1634 = vadd.f32 %v1557, %v1633
        %1635 = vmatmul.bf16.gmra.mxu0 %v1535
        %v1636 = vpop.f32.mrf.mxu0
        %v1637 = vadd.f32 %v1557, %v1636
        %v1638 = vpop.f32.mrf.mxu0
        %v1639 = vadd.f32 %v1557, %v1638
        %1640 = vmatmul.bf16.gmra.mxu0 %v1536
        %v1641 = vpop.f32.mrf.mxu0
        %v1642 = vadd.f32 %v1557, %v1641
        %v1643 = vpop.f32.mrf.mxu0
        %v1644 = vadd.f32 %v1557, %v1643
        %1645 = vmatmul.bf16.gmra.mxu0 %v1537
        %v1646 = vpop.f32.mrf.mxu0
        %v1647 = vadd.f32 %v1557, %v1646
        %v1648 = vpop.f32.mrf.mxu0
        %v1649 = vadd.f32 %v1557, %v1648
        %1650 = vmatmul.bf16.gmra.mxu0 %v1538
        %v1651 = vpop.f32.mrf.mxu0
        %v1652 = vadd.f32 %v1557, %v1651
        %v1653 = vpop.f32.mrf.mxu0
        %v1654 = vadd.f32 %v1557, %v1653
        %1655 = vdwg.mxu0
        %v1656 = vld [vmem:[%s899] sm:$0xf]
        %v1657 = vld [vmem:[%s899 + $0x4] sm:$0xf]
        %v1658 = vld [vmem:[%s899 + $0x8] sm:$0xf]
        %v1659 = vld [vmem:[%s899 + $0xc] sm:$0xf]
        %v1660 = vld [vmem:[%s899 + $0x10] sm:$0xf]
        %v1661 = vld [vmem:[%s899 + $0x14] sm:$0xf]
        %v1662 = vld [vmem:[%s899 + $0x18] sm:$0xf]
        %v1663 = vld [vmem:[%s899 + $0x1c] sm:$0xf]
        %v1664 = vld [vmem:[%s899 + $0x20] sm:$0xf]
        %v1665 = vld [vmem:[%s899 + $0x24] sm:$0xf]
        %v1666 = vld [vmem:[%s899 + $0x28] sm:$0xf]
        %v1667 = vld [vmem:[%s899 + $0x2c] sm:$0xf]
        %v1668 = vld [vmem:[%s899 + $0x30] sm:$0xf]
        %v1669 = vld [vmem:[%s899 + $0x34] sm:$0xf]
        %v1670 = vld [vmem:[%s899 + $0x38] sm:$0xf]
        %v1671 = vld [vmem:[%s899 + $0x3c] sm:$0xf]
        %v1688 = vunpack.c.l.b16 %v1656
        %v1689 = vunpack.c.l.b16 %v1657
        %v1690 = vunpack.c.l.b16 %v1658
        %v1691 = vunpack.c.l.b16 %v1659
        %v1692 = vunpack.c.l.b16 %v1660
        %v1693 = vunpack.c.l.b16 %v1661
        %v1694 = vunpack.c.l.b16 %v1662
        %v1695 = vunpack.c.l.b16 %v1663
        %v1696 = vunpack.c.l.b16 %v1664
        %v1697 = vunpack.c.l.b16 %v1665
        %v1698 = vunpack.c.l.b16 %v1666
        %v1699 = vunpack.c.l.b16 %v1667
        %v1700 = vunpack.c.l.b16 %v1668
        %v1701 = vunpack.c.l.b16 %v1669
        %v1702 = vunpack.c.l.b16 %v1670
        %v1703 = vunpack.c.l.b16 %v1671
        %v1704 = vpack.c.b16 %v1689, %v1688
        %v1705 = vpack.c.b16 %v1691, %v1690
        %v1706 = vpack.c.b16 %v1693, %v1692
        %v1707 = vpack.c.b16 %v1695, %v1694
        %v1708 = vpack.c.b16 %v1697, %v1696
        %v1709 = vpack.c.b16 %v1699, %v1698
        %v1710 = vpack.c.b16 %v1701, %v1700
        %v1711 = vpack.c.b16 %v1703, %v1702
        %1720 = vmatpush.bf16.msra.mxu0 %v1711
        %1721 = vmatpush.bf16.msra.mxu0 %v1710
        %1722 = vmatpush.bf16.msra.mxu0 %v1709
        %1723 = vmatpush.bf16.msra.mxu0 %v1708
        %1724 = vmatpush.bf16.msra.mxu0 %v1707
        %1725 = vmatpush.bf16.msra.mxu0 %v1706
        %1726 = vmatpush.bf16.msra.mxu0 %v1705
        %1727 = vmatpush.bf16.msra.mxu0 %v1704
        %1728 = vmatmul.bf16.gmra.mxu0 %v1531
        %v1729 = vpop.f32.mrf.mxu0
        %v1730 = vadd.f32 0.0, %v1729
        %v1731 = vpop.f32.mrf.mxu0
        %v1732 = vadd.f32 0.0, %v1731
        %1733 = vmatmul.bf16.gmra.mxu0 %v1532
        %v1734 = vpop.f32.mrf.mxu0
        %v1735 = vadd.f32 0.0, %v1734
        %v1736 = vpop.f32.mrf.mxu0
        %v1737 = vadd.f32 0.0, %v1736
        %1738 = vmatmul.bf16.gmra.mxu0 %v1533
        %v1739 = vpop.f32.mrf.mxu0
        %v1740 = vadd.f32 0.0, %v1739
        %v1741 = vpop.f32.mrf.mxu0
        %v1742 = vadd.f32 0.0, %v1741
        %1743 = vmatmul.bf16.gmra.mxu0 %v1534
        %v1744 = vpop.f32.mrf.mxu0
        %v1745 = vadd.f32 0.0, %v1744
        %v1746 = vpop.f32.mrf.mxu0
        %v1747 = vadd.f32 0.0, %v1746
        %1748 = vmatmul.bf16.gmra.mxu0 %v1535
        %v1749 = vpop.f32.mrf.mxu0
        %v1750 = vadd.f32 0.0, %v1749
        %v1751 = vpop.f32.mrf.mxu0
        %v1752 = vadd.f32 0.0, %v1751
        %1753 = vmatmul.bf16.gmra.mxu0 %v1536
        %v1754 = vpop.f32.mrf.mxu0
        %v1755 = vadd.f32 0.0, %v1754
        %v1756 = vpop.f32.mrf.mxu0
        %v1757 = vadd.f32 0.0, %v1756
        %1758 = vmatmul.bf16.gmra.mxu0 %v1537
        %v1759 = vpop.f32.mrf.mxu0
        %v1760 = vadd.f32 0.0, %v1759
        %v1761 = vpop.f32.mrf.mxu0
        %v1762 = vadd.f32 0.0, %v1761
        %1763 = vmatmul.bf16.gmra.mxu0 %v1538
        %v1764 = vpop.f32.mrf.mxu0
        %v1765 = vadd.f32 0.0, %v1764
        %v1766 = vpop.f32.mrf.mxu0
        %v1767 = vadd.f32 0.0, %v1766
        %1768 = vdwg.mxu0
        %v1769 = vld [vmem:[%s919] sm:$0xf]
        %v1770 = vld [vmem:[%s919 + $0x4] sm:$0xf]
        %v1771 = vld [vmem:[%s919 + $0x8] sm:$0xf]
        %v1772 = vld [vmem:[%s919 + $0xc] sm:$0xf]
        %v1773 = vld [vmem:[%s919 + $0x10] sm:$0xf]
        %v1774 = vld [vmem:[%s919 + $0x14] sm:$0xf]
        %v1775 = vld [vmem:[%s919 + $0x18] sm:$0xf]
        %v1776 = vld [vmem:[%s919 + $0x1c] sm:$0xf]
        %v1777 = vld [vmem:[%s919 + $0x20] sm:$0xf]
        %v1778 = vld [vmem:[%s919 + $0x24] sm:$0xf]
        %v1779 = vld [vmem:[%s919 + $0x28] sm:$0xf]
        %v1780 = vld [vmem:[%s919 + $0x2c] sm:$0xf]
        %v1781 = vld [vmem:[%s919 + $0x30] sm:$0xf]
        %v1782 = vld [vmem:[%s919 + $0x34] sm:$0xf]
        %v1783 = vld [vmem:[%s919 + $0x38] sm:$0xf]
        %v1784 = vld [vmem:[%s919 + $0x3c] sm:$0xf]
        %v1801 = vunpack.c.l.b16 %v1769
        %v1802 = vunpack.c.l.b16 %v1770
        %v1803 = vunpack.c.l.b16 %v1771
        %v1804 = vunpack.c.l.b16 %v1772
        %v1805 = vunpack.c.l.b16 %v1773
        %v1806 = vunpack.c.l.b16 %v1774
        %v1807 = vunpack.c.l.b16 %v1775
        %v1808 = vunpack.c.l.b16 %v1776
        %v1809 = vunpack.c.l.b16 %v1777
        %v1810 = vunpack.c.l.b16 %v1778
        %v1811 = vunpack.c.l.b16 %v1779
        %v1812 = vunpack.c.l.b16 %v1780
        %v1813 = vunpack.c.l.b16 %v1781
        %v1814 = vunpack.c.l.b16 %v1782
        %v1815 = vunpack.c.l.b16 %v1783
        %v1816 = vunpack.c.l.b16 %v1784
        %v1817 = vpack.c.b16 %v1802, %v1801
        %v1818 = vpack.c.b16 %v1804, %v1803
        %v1819 = vpack.c.b16 %v1806, %v1805
        %v1820 = vpack.c.b16 %v1808, %v1807
        %v1821 = vpack.c.b16 %v1810, %v1809
        %v1822 = vpack.c.b16 %v1812, %v1811
        %v1823 = vpack.c.b16 %v1814, %v1813
        %v1824 = vpack.c.b16 %v1816, %v1815
        %1833 = vmatpush.bf16.msra.mxu0 %v1824
        %1834 = vmatpush.bf16.msra.mxu0 %v1823
        %1835 = vmatpush.bf16.msra.mxu0 %v1822
        %1836 = vmatpush.bf16.msra.mxu0 %v1821
        %1837 = vmatpush.bf16.msra.mxu0 %v1820
        %1838 = vmatpush.bf16.msra.mxu0 %v1819
        %1839 = vmatpush.bf16.msra.mxu0 %v1818
        %1840 = vmatpush.bf16.msra.mxu0 %v1817
        %1841 = vmatmul.bf16.gmra.mxu0 %v1531
        %v1842 = vpop.f32.mrf.mxu0
        %v1843 = vadd.f32 0.0, %v1842
        %v1844 = vpop.f32.mrf.mxu0
        %v1845 = vadd.f32 0.0, %v1844
        %1846 = vmatmul.bf16.gmra.mxu0 %v1532
        %v1847 = vpop.f32.mrf.mxu0
        %v1848 = vadd.f32 0.0, %v1847
        %v1849 = vpop.f32.mrf.mxu0
        %v1850 = vadd.f32 0.0, %v1849
        %1851 = vmatmul.bf16.gmra.mxu0 %v1533
        %v1852 = vpop.f32.mrf.mxu0
        %v1853 = vadd.f32 0.0, %v1852
        %v1854 = vpop.f32.mrf.mxu0
        %v1855 = vadd.f32 0.0, %v1854
        %1856 = vmatmul.bf16.gmra.mxu0 %v1534
        %v1857 = vpop.f32.mrf.mxu0
        %v1858 = vadd.f32 0.0, %v1857
        %v1859 = vpop.f32.mrf.mxu0
        %v1860 = vadd.f32 0.0, %v1859
        %1861 = vmatmul.bf16.gmra.mxu0 %v1535
        %v1862 = vpop.f32.mrf.mxu0
        %v1863 = vadd.f32 0.0, %v1862
        %v1864 = vpop.f32.mrf.mxu0
        %v1865 = vadd.f32 0.0, %v1864
        %1866 = vmatmul.bf16.gmra.mxu0 %v1536
        %v1867 = vpop.f32.mrf.mxu0
        %v1868 = vadd.f32 0.0, %v1867
        %v1869 = vpop.f32.mrf.mxu0
        %v1870 = vadd.f32 0.0, %v1869
        %1871 = vmatmul.bf16.gmra.mxu0 %v1537
        %v1872 = vpop.f32.mrf.mxu0
        %v1873 = vadd.f32 0.0, %v1872
        %v1874 = vpop.f32.mrf.mxu0
        %v1875 = vadd.f32 0.0, %v1874
        %1876 = vmatmul.bf16.gmra.mxu0 %v1538
        %v1877 = vpop.f32.mrf.mxu0
        %v1878 = vadd.f32 0.0, %v1877
        %v1879 = vpop.f32.mrf.mxu0
        %v1880 = vadd.f32 0.0, %v1879
        %1881 = vdwg.mxu0
        %v1882 = vld [vmem:[%s909] sm:$0xf]
        %v1883 = vld [vmem:[%s909 + $0x4] sm:$0xf]
        %v1884 = vld [vmem:[%s909 + $0x8] sm:$0xf]
        %v1885 = vld [vmem:[%s909 + $0xc] sm:$0xf]
        %v1886 = vld [vmem:[%s909 + $0x10] sm:$0xf]
        %v1887 = vld [vmem:[%s909 + $0x14] sm:$0xf]
        %v1888 = vld [vmem:[%s909 + $0x18] sm:$0xf]
        %v1889 = vld [vmem:[%s909 + $0x1c] sm:$0xf]
        %v1890 = vunpack.c.l.bf16 %v1882
        %v1891 = vunpack.c.l.bf16 %v1883
        %v1892 = vunpack.c.l.bf16 %v1884
        %v1893 = vunpack.c.l.bf16 %v1885
        %v1894 = vunpack.c.l.bf16 %v1886
        %v1895 = vunpack.c.l.bf16 %v1887
        %v1896 = vunpack.c.l.bf16 %v1888
        %v1897 = vunpack.c.l.bf16 %v1889
        %v1898 = vld [vmem:[%s929] sm:$0xf]
        %v1899 = vld [vmem:[%s929 + $0x4] sm:$0xf]
        %v1900 = vld [vmem:[%s929 + $0x8] sm:$0xf]
        %v1901 = vld [vmem:[%s929 + $0xc] sm:$0xf]
        %v1902 = vld [vmem:[%s929 + $0x10] sm:$0xf]
        %v1903 = vld [vmem:[%s929 + $0x14] sm:$0xf]
        %v1904 = vld [vmem:[%s929 + $0x18] sm:$0xf]
        %v1905 = vld [vmem:[%s929 + $0x1c] sm:$0xf]
        %v1906 = vunpack.c.l.bf16 %v1898
        %v1907 = vunpack.c.l.bf16 %v1899
        %v1908 = vunpack.c.l.bf16 %v1900
        %v1909 = vunpack.c.l.bf16 %v1901
        %v1910 = vunpack.c.l.bf16 %v1902
        %v1911 = vunpack.c.l.bf16 %v1903
        %v1912 = vunpack.c.l.bf16 %v1904
        %v1913 = vunpack.c.l.bf16 %v1905
        %v1914 = vpack.c.bf16 %v1619, %v1617
        %v1915 = vpack.c.bf16 %v1624, %v1622
        %v1916 = vpack.c.bf16 %v1629, %v1627
        %v1917 = vpack.c.bf16 %v1634, %v1632
        %v1918 = vadd.f32 %v1730, %v1890
        %v1919 = vadd.f32 %v1732, %v1891
        %v1920 = vadd.f32 %v1735, %v1892
        %v1921 = vadd.f32 %v1737, %v1893
        %v1922 = vadd.f32 %v1740, %v1894
        %v1923 = vadd.f32 %v1742, %v1895
        %v1924 = vadd.f32 %v1745, %v1896
        %v1925 = vadd.f32 %v1747, %v1897
        %v1926 = vpack.c.bf16 %v1919, %v1918
        %v1927 = vpack.c.bf16 %v1921, %v1920
        %v1928 = vpack.c.bf16 %v1923, %v1922
        %v1929 = vpack.c.bf16 %v1925, %v1924
        %v1930 = vadd.f32 %v1843, %v1906
        %v1931 = vadd.f32 %v1845, %v1907
        %v1932 = vadd.f32 %v1848, %v1908
        %v1933 = vadd.f32 %v1850, %v1909
        %v1934 = vadd.f32 %v1853, %v1910
        %v1935 = vadd.f32 %v1855, %v1911
        %v1936 = vadd.f32 %v1858, %v1912
        %v1937 = vadd.f32 %v1860, %v1913
        %v1938 = vpack.c.bf16 %v1931, %v1930
        %v1939 = vpack.c.bf16 %v1933, %v1932
        %v1940 = vpack.c.bf16 %v1935, %v1934
        %v1941 = vpack.c.bf16 %v1937, %v1936
        %v1942 = vld [vmem:[%s19] sm:$0x1]
        %v1944 = vperm.slane %v1942, 0
        %vm1946 = vcmask 261120
        %v1948 = vsel %vm1946, %v1914, 0
        %v1951 = vsel %vm1946, %v1915, 0
        %v1954 = vsel %vm1946, %v1916, 0
        %v1957 = vsel %vm1946, %v1917, 0
        %v1960 = vsel %vm1946, %v1926, 0
        %v1963 = vsel %vm1946, %v1927, 0
        %v1966 = vsel %vm1946, %v1928, 0
        %v1969 = vsel %vm1946, %v1929, 0
        %1971 = vmatpush.bf16.xpose.msra.mxu0 0
        %1972 = vmatpush.bf16.xpose.msra.mxu0 0
        %1973 = vmatpush.bf16.xpose.msra.mxu0 0
        %1974 = vmatpush.bf16.xpose.msra.mxu0 0
        %1975 = vmatpush.bf16.xpose.msra.mxu0 %v1969
        %1976 = vmatpush.bf16.xpose.msra.mxu0 %v1966
        %1977 = vmatpush.bf16.xpose.msra.mxu0 %v1963
        %1978 = vmatpush.bf16.xpose.msra.mxu0 %v1960
        %1979 = vmatmul.bf16.gmra.mxu0 %v1948
        %v1980 = vpop.f32.mrf.mxu0
        %v1981 = vadd.f32 %v1944, %v1980
        %v1982 = vpop.f32.mrf.mxu0
        %v1983 = vadd.f32 %v1944, %v1982
        %1984 = vmatmul.bf16.gmra.mxu0 %v1951
        %v1985 = vpop.f32.mrf.mxu0
        %v1986 = vadd.f32 %v1944, %v1985
        %v1987 = vpop.f32.mrf.mxu0
        %v1988 = vadd.f32 %v1944, %v1987
        %1989 = vmatmul.bf16.gmra.mxu0 %v1954
        %v1990 = vpop.f32.mrf.mxu0
        %v1991 = vadd.f32 %v1944, %v1990
        %v1992 = vpop.f32.mrf.mxu0
        %v1993 = vadd.f32 %v1944, %v1992
        %1994 = vmatmul.bf16.gmra.mxu0 %v1957
        %v1995 = vpop.f32.mrf.mxu0
        %v1996 = vadd.f32 %v1944, %v1995
        %v1997 = vpop.f32.mrf.mxu0
        %v1998 = vadd.f32 %v1944, %v1997
        %1999 = vdwg.mxu0
        %vm2000 = vcmask 523264
        %v2001 = vsel %vm2000, %v1981, -inf
        %2002 = vmax.xlane.f32.xlu0 %v2001
        %v2003 = vpop.xlane.xlu0 %2002
        %v2004 = vsel %vm2000, %v1983, -inf
        %2005 = vmax.xlane.f32.xlu0 %v2004
        %v2006 = vpop.xlane.xlu0 %2005
        %v2007 = vsel %vm2000, %v1986, -inf
        %2008 = vmax.xlane.f32.xlu0 %v2007
        %v2009 = vpop.xlane.xlu0 %2008
        %v2010 = vsel %vm2000, %v1988, -inf
        %2011 = vmax.xlane.f32.xlu0 %v2010
        %v2012 = vpop.xlane.xlu0 %2011
        %v2013 = vsel %vm2000, %v1991, -inf
        %2014 = vmax.xlane.f32.xlu0 %v2013
        %v2015 = vpop.xlane.xlu0 %2014
        %v2016 = vsel %vm2000, %v1993, -inf
        %2017 = vmax.xlane.f32.xlu0 %v2016
        %v2018 = vpop.xlane.xlu0 %2017
        %v2019 = vsel %vm2000, %v1996, -inf
        %2020 = vmax.xlane.f32.xlu0 %v2019
        %v2021 = vpop.xlane.xlu0 %2020
        %v2022 = vsel %vm2000, %v1998, -inf
        %2023 = vmax.xlane.f32.xlu0 %v2022
        %v2024 = vpop.xlane.xlu0 %2023
        %v2025 = vsub.f32 %v1981, %v2003
        %v2026 = vsub.f32 %v1983, %v2006
        %v2027 = vsub.f32 %v1986, %v2009
        %v2028 = vsub.f32 %v1988, %v2012
        %v2029 = vsub.f32 %v1991, %v2015
        %v2030 = vsub.f32 %v1993, %v2018
        %v2031 = vsub.f32 %v1996, %v2021
        %v2032 = vsub.f32 %v1998, %v2024
        %v2033 = vmul.f32 %v2025, 1.442695
        %v2034 = vpow.pop %v2033
        %v2035 = vmul.f32 %v2026, 1.442695
        %v2036 = vpow.pop %v2035
        %v2037 = vmul.f32 %v2027, 1.442695
        %v2038 = vpow.pop %v2037
        %v2039 = vmul.f32 %v2028, 1.442695
        %v2040 = vpow.pop %v2039
        %v2041 = vmul.f32 %v2029, 1.442695
        %v2042 = vpow.pop %v2041
        %v2043 = vmul.f32 %v2030, 1.442695
        %v2044 = vpow.pop %v2043
        %v2045 = vmul.f32 %v2031, 1.442695
        %v2046 = vpow.pop %v2045
        %v2047 = vmul.f32 %v2032, 1.442695
        %v2048 = vpow.pop %v2047
        %v2049 = vsel %vm2000, %v2034, 0.0
        %2050 = vadd.xlane.f32.xlu0 %v2049
        %v2051 = vpop.xlane.xlu0 %2050
        %v2052 = vsel %vm2000, %v2036, 0.0
        %2053 = vadd.xlane.f32.xlu0 %v2052
        %v2054 = vpop.xlane.xlu0 %2053
        %v2055 = vsel %vm2000, %v2038, 0.0
        %2056 = vadd.xlane.f32.xlu0 %v2055
        %v2057 = vpop.xlane.xlu0 %2056
        %v2058 = vsel %vm2000, %v2040, 0.0
        %2059 = vadd.xlane.f32.xlu0 %v2058
        %v2060 = vpop.xlane.xlu0 %2059
        %v2061 = vsel %vm2000, %v2042, 0.0
        %2062 = vadd.xlane.f32.xlu0 %v2061
        %v2063 = vpop.xlane.xlu0 %2062
        %v2064 = vsel %vm2000, %v2044, 0.0
        %2065 = vadd.xlane.f32.xlu0 %v2064
        %v2066 = vpop.xlane.xlu0 %2065
        %v2067 = vsel %vm2000, %v2046, 0.0
        %2068 = vadd.xlane.f32.xlu0 %v2067
        %v2069 = vpop.xlane.xlu0 %2068
        %v2070 = vsel %vm2000, %v2048, 0.0
        %2071 = vadd.xlane.f32.xlu0 %v2070
        %v2072 = vpop.xlane.xlu0 %2071
        %v2073 = vrcp.pop %v2051
        %v2074 = vrcp.pop %v2054
        %v2075 = vrcp.pop %v2057
        %v2076 = vrcp.pop %v2060
        %v2077 = vrcp.pop %v2063
        %v2078 = vrcp.pop %v2066
        %v2079 = vrcp.pop %v2069
        %v2080 = vrcp.pop %v2072
        %v2081 = vmul.f32 %v2034, %v2073
        %v2082 = vmul.f32 %v2036, %v2074
        %v2083 = vmul.f32 %v2038, %v2075
        %v2084 = vmul.f32 %v2040, %v2076
        %v2085 = vmul.f32 %v2042, %v2077
        %v2086 = vmul.f32 %v2044, %v2078
        %v2087 = vmul.f32 %v2046, %v2079
        %v2088 = vmul.f32 %v2048, %v2080
        %v2089 = vpack.c.bf16 %v2082, %v2081
        %v2090 = vpack.c.bf16 %v2084, %v2083
        %v2091 = vpack.c.bf16 %v2086, %v2085
        %v2092 = vpack.c.bf16 %v2088, %v2087
        %v2094 = vsel %vm2000, %v2089, 0
        %v2097 = vsel %vm2000, %v2090, 0
        %v2100 = vsel %vm2000, %v2091, 0
        %v2103 = vsel %vm2000, %v2092, 0
        %2105 = vmatpush.bf16.msra.mxu0 0
        %2106 = vmatpush.bf16.msra.mxu0 0
        %2107 = vmatpush.bf16.msra.mxu0 0
        %2108 = vmatpush.bf16.msra.mxu0 0
        %2109 = vmatpush.bf16.msra.mxu0 %v1941
        %2110 = vmatpush.bf16.msra.mxu0 %v1940
        %2111 = vmatpush.bf16.msra.mxu0 %v1939
        %2112 = vmatpush.bf16.msra.mxu0 %v1938
        %2113 = vmatmul.bf16.gmra.mxu0 %v2094
        %v2114 = vpop.f32.mrf.mxu0
        %v2115 = vadd.f32 0.0, %v2114
        %v2116 = vpop.f32.mrf.mxu0
        %v2117 = vadd.f32 0.0, %v2116
        %2118 = vmatmul.bf16.gmra.mxu0 %v2097
        %v2119 = vpop.f32.mrf.mxu0
        %v2120 = vadd.f32 0.0, %v2119
        %v2121 = vpop.f32.mrf.mxu0
        %v2122 = vadd.f32 0.0, %v2121
        %2123 = vmatmul.bf16.gmra.mxu0 %v2100
        %v2124 = vpop.f32.mrf.mxu0
        %v2125 = vadd.f32 0.0, %v2124
        %v2126 = vpop.f32.mrf.mxu0
        %v2127 = vadd.f32 0.0, %v2126
        %2128 = vmatmul.bf16.gmra.mxu0 %v2103
        %v2129 = vpop.f32.mrf.mxu0
        %v2130 = vadd.f32 0.0, %v2129
        %v2131 = vpop.f32.mrf.mxu0
        %v2132 = vadd.f32 0.0, %v2131
        %2133 = vdwg.mxu0
        %2134 = vst.msk [vmem:[#allocation2] sm:$0xff] %vm1946, %v2115
        %2135 = vst.msk [vmem:[#allocation2 + $0x8] sm:$0xff] %vm1946, %v2117
        %2136 = vst.msk [vmem:[#allocation2 + $0x10] sm:$0xff] %vm1946, %v2120
        %2137 = vst.msk [vmem:[#allocation2 + $0x18] sm:$0xff] %vm1946, %v2122
        %2138 = vst.msk [vmem:[#allocation2 + $0x20] sm:$0xff] %vm1946, %v2125
        %2139 = vst.msk [vmem:[#allocation2 + $0x28] sm:$0xff] %vm1946, %v2127
        %2140 = vst.msk [vmem:[#allocation2 + $0x30] sm:$0xff] %vm1946, %v2130
        %2141 = vst.msk [vmem:[#allocation2 + $0x38] sm:$0xff] %vm1946, %v2132
        %v2142 = vld [vmem:[%s19] sm:$0x1]
        %v2144 = vperm.slane %v2142, 0
        %2150 = vrot.lane.b32.xlu0 %v1914, 96
        %v2151 = vpop.permute.xlu0 %2150
        %2152 = vrot.lane.b32.xlu0 %v1915, 96
        %v2153 = vpop.permute.xlu0 %2152
        %2154 = vrot.lane.b32.xlu0 %v1916, 96
        %v2155 = vpop.permute.xlu0 %2154
        %2156 = vrot.lane.b32.xlu0 %v1917, 96
        %v2157 = vpop.permute.xlu0 %2156
        %2162 = vrot.lane.b32.xlu0 %v1926, 96
        %v2163 = vpop.permute.xlu0 %2162
        %2164 = vrot.lane.b32.xlu0 %v1927, 96
        %v2165 = vpop.permute.xlu0 %2164
        %2166 = vrot.lane.b32.xlu0 %v1928, 96
        %v2167 = vpop.permute.xlu0 %2166
        %2168 = vrot.lane.b32.xlu0 %v1929, 96
        %v2169 = vpop.permute.xlu0 %2168
        %v2171 = vsel %vm1946, %v2151, 0
        %v2174 = vsel %vm1946, %v2153, 0
        %v2177 = vsel %vm1946, %v2155, 0
        %v2180 = vsel %vm1946, %v2157, 0
        %v2183 = vsel %vm1946, %v2163, 0
        %v2186 = vsel %vm1946, %v2165, 0
        %v2189 = vsel %vm1946, %v2167, 0
        %v2192 = vsel %vm1946, %v2169, 0
        %2194 = vmatpush.bf16.xpose.msra.mxu0 0
        %2195 = vmatpush.bf16.xpose.msra.mxu0 0
        %2196 = vmatpush.bf16.xpose.msra.mxu0 0
        %2197 = vmatpush.bf16.xpose.msra.mxu0 0
        %2198 = vmatpush.bf16.xpose.msra.mxu0 %v2192
        %2199 = vmatpush.bf16.xpose.msra.mxu0 %v2189
        %2200 = vmatpush.bf16.xpose.msra.mxu0 %v2186
        %2201 = vmatpush.bf16.xpose.msra.mxu0 %v2183
        %2202 = vmatmul.bf16.gmra.mxu0 %v2171
        %v2203 = vpop.f32.mrf.mxu0
        %v2204 = vadd.f32 %v2144, %v2203
        %v2205 = vpop.f32.mrf.mxu0
        %v2206 = vadd.f32 %v2144, %v2205
        %2207 = vmatmul.bf16.gmra.mxu0 %v2174
        %v2208 = vpop.f32.mrf.mxu0
        %v2209 = vadd.f32 %v2144, %v2208
        %v2210 = vpop.f32.mrf.mxu0
        %v2211 = vadd.f32 %v2144, %v2210
        %2212 = vmatmul.bf16.gmra.mxu0 %v2177
        %v2213 = vpop.f32.mrf.mxu0
        %v2214 = vadd.f32 %v2144, %v2213
        %v2215 = vpop.f32.mrf.mxu0
        %v2216 = vadd.f32 %v2144, %v2215
        %2217 = vmatmul.bf16.gmra.mxu0 %v2180
        %v2218 = vpop.f32.mrf.mxu0
        %v2219 = vadd.f32 %v2144, %v2218
        %v2220 = vpop.f32.mrf.mxu0
        %v2221 = vadd.f32 %v2144, %v2220
        %2222 = vdwg.mxu0
        %v2223 = vsel %vm2000, %v2204, -inf
        %2224 = vmax.xlane.f32.xlu0 %v2223
        %v2225 = vpop.xlane.xlu0 %2224
        %v2226 = vsel %vm2000, %v2206, -inf
        %2227 = vmax.xlane.f32.xlu0 %v2226
        %v2228 = vpop.xlane.xlu0 %2227
        %v2229 = vsel %vm2000, %v2209, -inf
        %2230 = vmax.xlane.f32.xlu0 %v2229
        %v2231 = vpop.xlane.xlu0 %2230
        %v2232 = vsel %vm2000, %v2211, -inf
        %2233 = vmax.xlane.f32.xlu0 %v2232
        %v2234 = vpop.xlane.xlu0 %2233
        %v2235 = vsel %vm2000, %v2214, -inf
        %2236 = vmax.xlane.f32.xlu0 %v2235
        %v2237 = vpop.xlane.xlu0 %2236
        %v2238 = vsel %vm2000, %v2216, -inf
        %2239 = vmax.xlane.f32.xlu0 %v2238
        %v2240 = vpop.xlane.xlu0 %2239
        %v2241 = vsel %vm2000, %v2219, -inf
        %2242 = vmax.xlane.f32.xlu0 %v2241
        %v2243 = vpop.xlane.xlu0 %2242
        %v2244 = vsel %vm2000, %v2221, -inf
        %2245 = vmax.xlane.f32.xlu0 %v2244
        %v2246 = vpop.xlane.xlu0 %2245
        %v2247 = vsub.f32 %v2204, %v2225
        %v2248 = vsub.f32 %v2206, %v2228
        %v2249 = vsub.f32 %v2209, %v2231
        %v2250 = vsub.f32 %v2211, %v2234
        %v2251 = vsub.f32 %v2214, %v2237
        %v2252 = vsub.f32 %v2216, %v2240
        %v2253 = vsub.f32 %v2219, %v2243
        %v2254 = vsub.f32 %v2221, %v2246
        %v2255 = vmul.f32 %v2247, 1.442695
        %v2256 = vpow.pop %v2255
        %v2257 = vmul.f32 %v2248, 1.442695
        %v2258 = vpow.pop %v2257
        %v2259 = vmul.f32 %v2249, 1.442695
        %v2260 = vpow.pop %v2259
        %v2261 = vmul.f32 %v2250, 1.442695
        %v2262 = vpow.pop %v2261
        %v2263 = vmul.f32 %v2251, 1.442695
        %v2264 = vpow.pop %v2263
        %v2265 = vmul.f32 %v2252, 1.442695
        %v2266 = vpow.pop %v2265
        %v2267 = vmul.f32 %v2253, 1.442695
        %v2268 = vpow.pop %v2267
        %v2269 = vmul.f32 %v2254, 1.442695
        %v2270 = vpow.pop %v2269
        %v2271 = vsel %vm2000, %v2256, 0.0
        %2272 = vadd.xlane.f32.xlu0 %v2271
        %v2273 = vpop.xlane.xlu0 %2272
        %v2274 = vsel %vm2000, %v2258, 0.0
        %2275 = vadd.xlane.f32.xlu0 %v2274
        %v2276 = vpop.xlane.xlu0 %2275
        %v2277 = vsel %vm2000, %v2260, 0.0
        %2278 = vadd.xlane.f32.xlu0 %v2277
        %v2279 = vpop.xlane.xlu0 %2278
        %v2280 = vsel %vm2000, %v2262, 0.0
        %2281 = vadd.xlane.f32.xlu0 %v2280
        %v2282 = vpop.xlane.xlu0 %2281
        %v2283 = vsel %vm2000, %v2264, 0.0
        %2284 = vadd.xlane.f32.xlu0 %v2283
        %v2285 = vpop.xlane.xlu0 %2284
        %v2286 = vsel %vm2000, %v2266, 0.0
        %2287 = vadd.xlane.f32.xlu0 %v2286
        %v2288 = vpop.xlane.xlu0 %2287
        %v2289 = vsel %vm2000, %v2268, 0.0
        %2290 = vadd.xlane.f32.xlu0 %v2289
        %v2291 = vpop.xlane.xlu0 %2290
        %v2292 = vsel %vm2000, %v2270, 0.0
        %2293 = vadd.xlane.f32.xlu0 %v2292
        %v2294 = vpop.xlane.xlu0 %2293
        %v2295 = vrcp.pop %v2273
        %v2296 = vrcp.pop %v2276
        %v2297 = vrcp.pop %v2279
        %v2298 = vrcp.pop %v2282
        %v2299 = vrcp.pop %v2285
        %v2300 = vrcp.pop %v2288
        %v2301 = vrcp.pop %v2291
        %v2302 = vrcp.pop %v2294
        %v2303 = vmul.f32 %v2256, %v2295
        %v2304 = vmul.f32 %v2258, %v2296
        %v2305 = vmul.f32 %v2260, %v2297
        %v2306 = vmul.f32 %v2262, %v2298
        %v2307 = vmul.f32 %v2264, %v2299
        %v2308 = vmul.f32 %v2266, %v2300
        %v2309 = vmul.f32 %v2268, %v2301
        %v2310 = vmul.f32 %v2270, %v2302
        %v2311 = vpack.c.bf16 %v2304, %v2303
        %v2312 = vpack.c.bf16 %v2306, %v2305
        %v2313 = vpack.c.bf16 %v2308, %v2307
        %v2314 = vpack.c.bf16 %v2310, %v2309
        %2319 = vrot.lane.b32.xlu0 %v1938, 96
        %v2320 = vpop.permute.xlu0 %2319
        %2321 = vrot.lane.b32.xlu0 %v1939, 96
        %v2322 = vpop.permute.xlu0 %2321
        %2323 = vrot.lane.b32.xlu0 %v1940, 96
        %v2324 = vpop.permute.xlu0 %2323
        %2325 = vrot.lane.b32.xlu0 %v1941, 96
        %v2326 = vpop.permute.xlu0 %2325
        %v2332 = vsel %vm2000, %v2311, 0
        %v2335 = vsel %vm2000, %v2312, 0
        %v2338 = vsel %vm2000, %v2313, 0
        %v2341 = vsel %vm2000, %v2314, 0
        %2343 = vmatpush.bf16.msra.mxu0 0
        %2344 = vmatpush.bf16.msra.mxu0 0
        %2345 = vmatpush.bf16.msra.mxu0 0
        %2346 = vmatpush.bf16.msra.mxu0 0
        %2347 = vmatpush.bf16.msra.mxu0 %v2326
        %2348 = vmatpush.bf16.msra.mxu0 %v2324
        %2349 = vmatpush.bf16.msra.mxu0 %v2322
        %2350 = vmatpush.bf16.msra.mxu0 %v2320
        %2351 = vmatmul.bf16.gmra.mxu0 %v2332
        %v2352 = vpop.f32.mrf.mxu0
        %v2353 = vadd.f32 0.0, %v2352
        %v2354 = vpop.f32.mrf.mxu0
        %v2355 = vadd.f32 0.0, %v2354
        %2356 = vmatmul.bf16.gmra.mxu0 %v2335
        %v2357 = vpop.f32.mrf.mxu0
        %v2358 = vadd.f32 0.0, %v2357
        %v2359 = vpop.f32.mrf.mxu0
        %v2360 = vadd.f32 0.0, %v2359
        %2361 = vmatmul.bf16.gmra.mxu0 %v2338
        %v2362 = vpop.f32.mrf.mxu0
        %v2363 = vadd.f32 0.0, %v2362
        %v2364 = vpop.f32.mrf.mxu0
        %v2365 = vadd.f32 0.0, %v2364
        %2366 = vmatmul.bf16.gmra.mxu0 %v2341
        %v2367 = vpop.f32.mrf.mxu0
        %v2368 = vadd.f32 0.0, %v2367
        %v2369 = vpop.f32.mrf.mxu0
        %v2370 = vadd.f32 0.0, %v2369
        %2371 = vdwg.mxu0
        %2380 = vrot.lane.b32.xlu0 %v2353, 32
        %v2381 = vpop.permute.xlu0 %2380
        %2382 = vrot.lane.b32.xlu0 %v2355, 32
        %v2383 = vpop.permute.xlu0 %2382
        %2384 = vrot.lane.b32.xlu0 %v2358, 32
        %v2385 = vpop.permute.xlu0 %2384
        %2386 = vrot.lane.b32.xlu0 %v2360, 32
        %v2387 = vpop.permute.xlu0 %2386
        %2388 = vrot.lane.b32.xlu0 %v2363, 32
        %v2389 = vpop.permute.xlu0 %2388
        %2390 = vrot.lane.b32.xlu0 %v2365, 32
        %v2391 = vpop.permute.xlu0 %2390
        %2392 = vrot.lane.b32.xlu0 %v2368, 32
        %v2393 = vpop.permute.xlu0 %2392
        %2394 = vrot.lane.b32.xlu0 %v2370, 32
        %v2395 = vpop.permute.xlu0 %2394
        %vm2404 = vcmask 523520
        %2405 = vst.msk [vmem:[#allocation2] sm:$0xff] %vm2404, %v2381
        %2406 = vst.msk [vmem:[#allocation2 + $0x8] sm:$0xff] %vm2404, %v2383
        %2407 = vst.msk [vmem:[#allocation2 + $0x10] sm:$0xff] %vm2404, %v2385
        %2408 = vst.msk [vmem:[#allocation2 + $0x18] sm:$0xff] %vm2404, %v2387
        %2409 = vst.msk [vmem:[#allocation2 + $0x20] sm:$0xff] %vm2404, %v2389
        %2410 = vst.msk [vmem:[#allocation2 + $0x28] sm:$0xff] %vm2404, %v2391
        %2411 = vst.msk [vmem:[#allocation2 + $0x30] sm:$0xff] %vm2404, %v2393
        %2412 = vst.msk [vmem:[#allocation2 + $0x38] sm:$0xff] %vm2404, %v2395
        %v2413 = vld [vmem:[%s19] sm:$0x1]
        %v2415 = vperm.slane %v2413, 0
        %2417 = vrot.lane.b32.xlu0 %v1914, 64
        %v2418 = vpop.permute.xlu0 %2417
        %2419 = vrot.lane.b32.xlu0 %v1915, 64
        %v2420 = vpop.permute.xlu0 %2419
        %2421 = vrot.lane.b32.xlu0 %v1916, 64
        %v2422 = vpop.permute.xlu0 %2421
        %2423 = vrot.lane.b32.xlu0 %v1917, 64
        %v2424 = vpop.permute.xlu0 %2423
        %2425 = vrot.lane.b32.xlu0 %v1926, 64
        %v2426 = vpop.permute.xlu0 %2425
        %2427 = vrot.lane.b32.xlu0 %v1927, 64
        %v2428 = vpop.permute.xlu0 %2427
        %2429 = vrot.lane.b32.xlu0 %v1928, 64
        %v2430 = vpop.permute.xlu0 %2429
        %2431 = vrot.lane.b32.xlu0 %v1929, 64
        %v2432 = vpop.permute.xlu0 %2431
        %v2434 = vsel %vm1946, %v2418, 0
        %v2437 = vsel %vm1946, %v2420, 0
        %v2440 = vsel %vm1946, %v2422, 0
        %v2443 = vsel %vm1946, %v2424, 0
        %v2446 = vsel %vm1946, %v2426, 0
        %v2449 = vsel %vm1946, %v2428, 0
        %v2452 = vsel %vm1946, %v2430, 0
        %v2455 = vsel %vm1946, %v2432, 0
        %2457 = vmatpush.bf16.xpose.msra.mxu0 0
        %2458 = vmatpush.bf16.xpose.msra.mxu0 0
        %2459 = vmatpush.bf16.xpose.msra.mxu0 0
        %2460 = vmatpush.bf16.xpose.msra.mxu0 0
        %2461 = vmatpush.bf16.xpose.msra.mxu0 %v2455
        %2462 = vmatpush.bf16.xpose.msra.mxu0 %v2452
        %2463 = vmatpush.bf16.xpose.msra.mxu0 %v2449
        %2464 = vmatpush.bf16.xpose.msra.mxu0 %v2446
        %2465 = vmatmul.bf16.gmra.mxu0 %v2434
        %v2466 = vpop.f32.mrf.mxu0
        %v2467 = vadd.f32 %v2415, %v2466
        %v2468 = vpop.f32.mrf.mxu0
        %v2469 = vadd.f32 %v2415, %v2468
        %2470 = vmatmul.bf16.gmra.mxu0 %v2437
        %v2471 = vpop.f32.mrf.mxu0
        %v2472 = vadd.f32 %v2415, %v2471
        %v2473 = vpop.f32.mrf.mxu0
        %v2474 = vadd.f32 %v2415, %v2473
        %2475 = vmatmul.bf16.gmra.mxu0 %v2440
        %v2476 = vpop.f32.mrf.mxu0
        %v2477 = vadd.f32 %v2415, %v2476
        %v2478 = vpop.f32.mrf.mxu0
        %v2479 = vadd.f32 %v2415, %v2478
        %2480 = vmatmul.bf16.gmra.mxu0 %v2443
        %v2481 = vpop.f32.mrf.mxu0
        %v2482 = vadd.f32 %v2415, %v2481
        %v2483 = vpop.f32.mrf.mxu0
        %v2484 = vadd.f32 %v2415, %v2483
        %2485 = vdwg.mxu0
        %v2486 = vsel %vm2000, %v2467, -inf
        %2487 = vmax.xlane.f32.xlu0 %v2486
        %v2488 = vpop.xlane.xlu0 %2487
        %v2489 = vsel %vm2000, %v2469, -inf
        %2490 = vmax.xlane.f32.xlu0 %v2489
        %v2491 = vpop.xlane.xlu0 %2490
        %v2492 = vsel %vm2000, %v2472, -inf
        %2493 = vmax.xlane.f32.xlu0 %v2492
        %v2494 = vpop.xlane.xlu0 %2493
        %v2495 = vsel %vm2000, %v2474, -inf
        %2496 = vmax.xlane.f32.xlu0 %v2495
        %v2497 = vpop.xlane.xlu0 %2496
        %v2498 = vsel %vm2000, %v2477, -inf
        %2499 = vmax.xlane.f32.xlu0 %v2498
        %v2500 = vpop.xlane.xlu0 %2499
        %v2501 = vsel %vm2000, %v2479, -inf
        %2502 = vmax.xlane.f32.xlu0 %v2501
        %v2503 = vpop.xlane.xlu0 %2502
        %v2504 = vsel %vm2000, %v2482, -inf
        %2505 = vmax.xlane.f32.xlu0 %v2504
        %v2506 = vpop.xlane.xlu0 %2505
        %v2507 = vsel %vm2000, %v2484, -inf
        %2508 = vmax.xlane.f32.xlu0 %v2507
        %v2509 = vpop.xlane.xlu0 %2508
        %v2510 = vsub.f32 %v2467, %v2488
        %v2511 = vsub.f32 %v2469, %v2491
        %v2512 = vsub.f32 %v2472, %v2494
        %v2513 = vsub.f32 %v2474, %v2497
        %v2514 = vsub.f32 %v2477, %v2500
        %v2515 = vsub.f32 %v2479, %v2503
        %v2516 = vsub.f32 %v2482, %v2506
        %v2517 = vsub.f32 %v2484, %v2509
        %v2518 = vmul.f32 %v2510, 1.442695
        %v2519 = vpow.pop %v2518
        %v2520 = vmul.f32 %v2511, 1.442695
        %v2521 = vpow.pop %v2520
        %v2522 = vmul.f32 %v2512, 1.442695
        %v2523 = vpow.pop %v2522
        %v2524 = vmul.f32 %v2513, 1.442695
        %v2525 = vpow.pop %v2524
        %v2526 = vmul.f32 %v2514, 1.442695
        %v2527 = vpow.pop %v2526
        %v2528 = vmul.f32 %v2515, 1.442695
        %v2529 = vpow.pop %v2528
        %v2530 = vmul.f32 %v2516, 1.442695
        %v2531 = vpow.pop %v2530
        %v2532 = vmul.f32 %v2517, 1.442695
        %v2533 = vpow.pop %v2532
        %v2534 = vsel %vm2000, %v2519, 0.0
        %2535 = vadd.xlane.f32.xlu0 %v2534
        %v2536 = vpop.xlane.xlu0 %2535
        %v2537 = vsel %vm2000, %v2521, 0.0
        %2538 = vadd.xlane.f32.xlu0 %v2537
        %v2539 = vpop.xlane.xlu0 %2538
        %v2540 = vsel %vm2000, %v2523, 0.0
        %2541 = vadd.xlane.f32.xlu0 %v2540
        %v2542 = vpop.xlane.xlu0 %2541
        %v2543 = vsel %vm2000, %v2525, 0.0
        %2544 = vadd.xlane.f32.xlu0 %v2543
        %v2545 = vpop.xlane.xlu0 %2544
        %v2546 = vsel %vm2000, %v2527, 0.0
        %2547 = vadd.xlane.f32.xlu0 %v2546
        %v2548 = vpop.xlane.xlu0 %2547
        %v2549 = vsel %vm2000, %v2529, 0.0
        %2550 = vadd.xlane.f32.xlu0 %v2549
        %v2551 = vpop.xlane.xlu0 %2550
        %v2552 = vsel %vm2000, %v2531, 0.0
        %2553 = vadd.xlane.f32.xlu0 %v2552
        %v2554 = vpop.xlane.xlu0 %2553
        %v2555 = vsel %vm2000, %v2533, 0.0
        %2556 = vadd.xlane.f32.xlu0 %v2555
        %v2557 = vpop.xlane.xlu0 %2556
        %v2558 = vrcp.pop %v2536
        %v2559 = vrcp.pop %v2539
        %v2560 = vrcp.pop %v2542
        %v2561 = vrcp.pop %v2545
        %v2562 = vrcp.pop %v2548
        %v2563 = vrcp.pop %v2551
        %v2564 = vrcp.pop %v2554
        %v2565 = vrcp.pop %v2557
        %v2566 = vmul.f32 %v2519, %v2558
        %v2567 = vmul.f32 %v2521, %v2559
        %v2568 = vmul.f32 %v2523, %v2560
        %v2569 = vmul.f32 %v2525, %v2561
        %v2570 = vmul.f32 %v2527, %v2562
        %v2571 = vmul.f32 %v2529, %v2563
        %v2572 = vmul.f32 %v2531, %v2564
        %v2573 = vmul.f32 %v2533, %v2565
        %v2574 = vpack.c.bf16 %v2567, %v2566
        %v2575 = vpack.c.bf16 %v2569, %v2568
        %v2576 = vpack.c.bf16 %v2571, %v2570
        %v2577 = vpack.c.bf16 %v2573, %v2572
        %2578 = vrot.lane.b32.xlu0 %v1938, 64
        %v2579 = vpop.permute.xlu0 %2578
        %2580 = vrot.lane.b32.xlu0 %v1939, 64
        %v2581 = vpop.permute.xlu0 %2580
        %2582 = vrot.lane.b32.xlu0 %v1940, 64
        %v2583 = vpop.permute.xlu0 %2582
        %2584 = vrot.lane.b32.xlu0 %v1941, 64
        %v2585 = vpop.permute.xlu0 %2584
        %v2591 = vsel %vm2000, %v2574, 0
        %v2594 = vsel %vm2000, %v2575, 0
        %v2597 = vsel %vm2000, %v2576, 0
        %v2600 = vsel %vm2000, %v2577, 0
        %2602 = vmatpush.bf16.msra.mxu0 0
        %2603 = vmatpush.bf16.msra.mxu0 0
        %2604 = vmatpush.bf16.msra.mxu0 0
        %2605 = vmatpush.bf16.msra.mxu0 0
        %2606 = vmatpush.bf16.msra.mxu0 %v2585
        %2607 = vmatpush.bf16.msra.mxu0 %v2583
        %2608 = vmatpush.bf16.msra.mxu0 %v2581
        %2609 = vmatpush.bf16.msra.mxu0 %v2579
        %2610 = vmatmul.bf16.gmra.mxu0 %v2591
        %v2611 = vpop.f32.mrf.mxu0
        %v2612 = vadd.f32 0.0, %v2611
        %v2613 = vpop.f32.mrf.mxu0
        %v2614 = vadd.f32 0.0, %v2613
        %2615 = vmatmul.bf16.gmra.mxu0 %v2594
        %v2616 = vpop.f32.mrf.mxu0
        %v2617 = vadd.f32 0.0, %v2616
        %v2618 = vpop.f32.mrf.mxu0
        %v2619 = vadd.f32 0.0, %v2618
        %2620 = vmatmul.bf16.gmra.mxu0 %v2597
        %v2621 = vpop.f32.mrf.mxu0
        %v2622 = vadd.f32 0.0, %v2621
        %v2623 = vpop.f32.mrf.mxu0
        %v2624 = vadd.f32 0.0, %v2623
        %2625 = vmatmul.bf16.gmra.mxu0 %v2600
        %v2626 = vpop.f32.mrf.mxu0
        %v2627 = vadd.f32 0.0, %v2626
        %v2628 = vpop.f32.mrf.mxu0
        %v2629 = vadd.f32 0.0, %v2628
        %2630 = vdwg.mxu0
        %2639 = vrot.lane.b32.xlu0 %v2612, 64
        %v2640 = vpop.permute.xlu0 %2639
        %2641 = vrot.lane.b32.xlu0 %v2614, 64
        %v2642 = vpop.permute.xlu0 %2641
        %2643 = vrot.lane.b32.xlu0 %v2617, 64
        %v2644 = vpop.permute.xlu0 %2643
        %2645 = vrot.lane.b32.xlu0 %v2619, 64
        %v2646 = vpop.permute.xlu0 %2645
        %2647 = vrot.lane.b32.xlu0 %v2622, 64
        %v2648 = vpop.permute.xlu0 %2647
        %2649 = vrot.lane.b32.xlu0 %v2624, 64
        %v2650 = vpop.permute.xlu0 %2649
        %2651 = vrot.lane.b32.xlu0 %v2627, 64
        %v2652 = vpop.permute.xlu0 %2651
        %2653 = vrot.lane.b32.xlu0 %v2629, 64
        %v2654 = vpop.permute.xlu0 %2653
        %vm2663 = vcmask 785920
        %2664 = vst.msk [vmem:[#allocation2] sm:$0xff] %vm2663, %v2640
        %2665 = vst.msk [vmem:[#allocation2 + $0x8] sm:$0xff] %vm2663, %v2642
        %2666 = vst.msk [vmem:[#allocation2 + $0x10] sm:$0xff] %vm2663, %v2644
        %2667 = vst.msk [vmem:[#allocation2 + $0x18] sm:$0xff] %vm2663, %v2646
        %2668 = vst.msk [vmem:[#allocation2 + $0x20] sm:$0xff] %vm2663, %v2648
        %2669 = vst.msk [vmem:[#allocation2 + $0x28] sm:$0xff] %vm2663, %v2650
        %2670 = vst.msk [vmem:[#allocation2 + $0x30] sm:$0xff] %vm2663, %v2652
        %2671 = vst.msk [vmem:[#allocation2 + $0x38] sm:$0xff] %vm2663, %v2654
        %v2672 = vld [vmem:[%s19] sm:$0x1]
        %v2674 = vperm.slane %v2672, 0
        %2676 = vrot.lane.b32.xlu0 %v1914, 32
        %v2677 = vpop.permute.xlu0 %2676
        %2678 = vrot.lane.b32.xlu0 %v1915, 32
        %v2679 = vpop.permute.xlu0 %2678
        %2680 = vrot.lane.b32.xlu0 %v1916, 32
        %v2681 = vpop.permute.xlu0 %2680
        %2682 = vrot.lane.b32.xlu0 %v1917, 32
        %v2683 = vpop.permute.xlu0 %2682
        %2684 = vrot.lane.b32.xlu0 %v1926, 32
        %v2685 = vpop.permute.xlu0 %2684
        %2686 = vrot.lane.b32.xlu0 %v1927, 32
        %v2687 = vpop.permute.xlu0 %2686
        %2688 = vrot.lane.b32.xlu0 %v1928, 32
        %v2689 = vpop.permute.xlu0 %2688
        %2690 = vrot.lane.b32.xlu0 %v1929, 32
        %v2691 = vpop.permute.xlu0 %2690
        %v2693 = vsel %vm1946, %v2677, 0
        %v2696 = vsel %vm1946, %v2679, 0
        %v2699 = vsel %vm1946, %v2681, 0
        %v2702 = vsel %vm1946, %v2683, 0
        %v2705 = vsel %vm1946, %v2685, 0
        %v2708 = vsel %vm1946, %v2687, 0
        %v2711 = vsel %vm1946, %v2689, 0
        %v2714 = vsel %vm1946, %v2691, 0
        %2716 = vmatpush.bf16.xpose.msra.mxu0 0
        %2717 = vmatpush.bf16.xpose.msra.mxu0 0
        %2718 = vmatpush.bf16.xpose.msra.mxu0 0
        %2719 = vmatpush.bf16.xpose.msra.mxu0 0
        %2720 = vmatpush.bf16.xpose.msra.mxu0 %v2714
        %2721 = vmatpush.bf16.xpose.msra.mxu0 %v2711
        %2722 = vmatpush.bf16.xpose.msra.mxu0 %v2708
        %2723 = vmatpush.bf16.xpose.msra.mxu0 %v2705
        %2724 = vmatmul.bf16.gmra.mxu0 %v2693
        %v2725 = vpop.f32.mrf.mxu0
        %v2726 = vadd.f32 %v2674, %v2725
        %v2727 = vpop.f32.mrf.mxu0
        %v2728 = vadd.f32 %v2674, %v2727
        %2729 = vmatmul.bf16.gmra.mxu0 %v2696
        %v2730 = vpop.f32.mrf.mxu0
        %v2731 = vadd.f32 %v2674, %v2730
        %v2732 = vpop.f32.mrf.mxu0
        %v2733 = vadd.f32 %v2674, %v2732
        %2734 = vmatmul.bf16.gmra.mxu0 %v2699
        %v2735 = vpop.f32.mrf.mxu0
        %v2736 = vadd.f32 %v2674, %v2735
        %v2737 = vpop.f32.mrf.mxu0
        %v2738 = vadd.f32 %v2674, %v2737
        %2739 = vmatmul.bf16.gmra.mxu0 %v2702
        %v2740 = vpop.f32.mrf.mxu0
        %v2741 = vadd.f32 %v2674, %v2740
        %v2742 = vpop.f32.mrf.mxu0
        %v2743 = vadd.f32 %v2674, %v2742
        %2744 = vdwg.mxu0
        %v2745 = vsel %vm2000, %v2726, -inf
        %2746 = vmax.xlane.f32.xlu0 %v2745
        %v2747 = vpop.xlane.xlu0 %2746
        %v2748 = vsel %vm2000, %v2728, -inf
        %2749 = vmax.xlane.f32.xlu0 %v2748
        %v2750 = vpop.xlane.xlu0 %2749
        %v2751 = vsel %vm2000, %v2731, -inf
        %2752 = vmax.xlane.f32.xlu0 %v2751
        %v2753 = vpop.xlane.xlu0 %2752
        %v2754 = vsel %vm2000, %v2733, -inf
        %2755 = vmax.xlane.f32.xlu0 %v2754
        %v2756 = vpop.xlane.xlu0 %2755
        %v2757 = vsel %vm2000, %v2736, -inf
        %2758 = vmax.xlane.f32.xlu0 %v2757
        %v2759 = vpop.xlane.xlu0 %2758
        %v2760 = vsel %vm2000, %v2738, -inf
        %2761 = vmax.xlane.f32.xlu0 %v2760
        %v2762 = vpop.xlane.xlu0 %2761
        %v2763 = vsel %vm2000, %v2741, -inf
        %2764 = vmax.xlane.f32.xlu0 %v2763
        %v2765 = vpop.xlane.xlu0 %2764
        %v2766 = vsel %vm2000, %v2743, -inf
        %2767 = vmax.xlane.f32.xlu0 %v2766
        %v2768 = vpop.xlane.xlu0 %2767
        %v2769 = vsub.f32 %v2726, %v2747
        %v2770 = vsub.f32 %v2728, %v2750
        %v2771 = vsub.f32 %v2731, %v2753
        %v2772 = vsub.f32 %v2733, %v2756
        %v2773 = vsub.f32 %v2736, %v2759
        %v2774 = vsub.f32 %v2738, %v2762
        %v2775 = vsub.f32 %v2741, %v2765
        %v2776 = vsub.f32 %v2743, %v2768
        %v2777 = vmul.f32 %v2769, 1.442695
        %v2778 = vpow.pop %v2777
        %v2779 = vmul.f32 %v2770, 1.442695
        %v2780 = vpow.pop %v2779
        %v2781 = vmul.f32 %v2771, 1.442695
        %v2782 = vpow.pop %v2781
        %v2783 = vmul.f32 %v2772, 1.442695
        %v2784 = vpow.pop %v2783
        %v2785 = vmul.f32 %v2773, 1.442695
        %v2786 = vpow.pop %v2785
        %v2787 = vmul.f32 %v2774, 1.442695
        %v2788 = vpow.pop %v2787
        %v2789 = vmul.f32 %v2775, 1.442695
        %v2790 = vpow.pop %v2789
        %v2791 = vmul.f32 %v2776, 1.442695
        %v2792 = vpow.pop %v2791
        %v2793 = vsel %vm2000, %v2778, 0.0
        %2794 = vadd.xlane.f32.xlu0 %v2793
        %v2795 = vpop.xlane.xlu0 %2794
        %v2796 = vsel %vm2000, %v2780, 0.0
        %2797 = vadd.xlane.f32.xlu0 %v2796
        %v2798 = vpop.xlane.xlu0 %2797
        %v2799 = vsel %vm2000, %v2782, 0.0
        %2800 = vadd.xlane.f32.xlu0 %v2799
        %v2801 = vpop.xlane.xlu0 %2800
        %v2802 = vsel %vm2000, %v2784, 0.0
        %2803 = vadd.xlane.f32.xlu0 %v2802
        %v2804 = vpop.xlane.xlu0 %2803
        %v2805 = vsel %vm2000, %v2786, 0.0
        %2806 = vadd.xlane.f32.xlu0 %v2805
        %v2807 = vpop.xlane.xlu0 %2806
        %v2808 = vsel %vm2000, %v2788, 0.0
        %2809 = vadd.xlane.f32.xlu0 %v2808
        %v2810 = vpop.xlane.xlu0 %2809
        %v2811 = vsel %vm2000, %v2790, 0.0
        %2812 = vadd.xlane.f32.xlu0 %v2811
        %v2813 = vpop.xlane.xlu0 %2812
        %v2814 = vsel %vm2000, %v2792, 0.0
        %2815 = vadd.xlane.f32.xlu0 %v2814
        %v2816 = vpop.xlane.xlu0 %2815
        %v2817 = vrcp.pop %v2795
        %v2818 = vrcp.pop %v2798
        %v2819 = vrcp.pop %v2801
        %v2820 = vrcp.pop %v2804
        %v2821 = vrcp.pop %v2807
        %v2822 = vrcp.pop %v2810
        %v2823 = vrcp.pop %v2813
        %v2824 = vrcp.pop %v2816
        %v2825 = vmul.f32 %v2778, %v2817
        %v2826 = vmul.f32 %v2780, %v2818
        %v2827 = vmul.f32 %v2782, %v2819
        %v2828 = vmul.f32 %v2784, %v2820
        %v2829 = vmul.f32 %v2786, %v2821
        %v2830 = vmul.f32 %v2788, %v2822
        %v2831 = vmul.f32 %v2790, %v2823
        %v2832 = vmul.f32 %v2792, %v2824
        %v2833 = vpack.c.bf16 %v2826, %v2825
        %v2834 = vpack.c.bf16 %v2828, %v2827
        %v2835 = vpack.c.bf16 %v2830, %v2829
        %v2836 = vpack.c.bf16 %v2832, %v2831
        %2837 = vrot.lane.b32.xlu0 %v1938, 32
        %v2838 = vpop.permute.xlu0 %2837
        %2839 = vrot.lane.b32.xlu0 %v1939, 32
        %v2840 = vpop.permute.xlu0 %2839
        %2841 = vrot.lane.b32.xlu0 %v1940, 32
        %v2842 = vpop.permute.xlu0 %2841
        %2843 = vrot.lane.b32.xlu0 %v1941, 32
        %v2844 = vpop.permute.xlu0 %2843
        %v2850 = vsel %vm2000, %v2833, 0
        %v2853 = vsel %vm2000, %v2834, 0
        %v2856 = vsel %vm2000, %v2835, 0
        %v2859 = vsel %vm2000, %v2836, 0
        %2861 = vmatpush.bf16.msra.mxu0 0
        %2862 = vmatpush.bf16.msra.mxu0 0
        %2863 = vmatpush.bf16.msra.mxu0 0
        %2864 = vmatpush.bf16.msra.mxu0 0
        %2865 = vmatpush.bf16.msra.mxu0 %v2844
        %2866 = vmatpush.bf16.msra.mxu0 %v2842
        %2867 = vmatpush.bf16.msra.mxu0 %v2840
        %2868 = vmatpush.bf16.msra.mxu0 %v2838
        %2869 = vmatmul.bf16.gmra.mxu0 %v2850
        %v2870 = vpop.f32.mrf.mxu0
        %v2871 = vadd.f32 0.0, %v2870
        %v2872 = vpop.f32.mrf.mxu0
        %v2873 = vadd.f32 0.0, %v2872
        %2874 = vmatmul.bf16.gmra.mxu0 %v2853
        %v2875 = vpop.f32.mrf.mxu0
        %v2876 = vadd.f32 0.0, %v2875
        %v2877 = vpop.f32.mrf.mxu0
        %v2878 = vadd.f32 0.0, %v2877
        %2879 = vmatmul.bf16.gmra.mxu0 %v2856
        %v2880 = vpop.f32.mrf.mxu0
        %v2881 = vadd.f32 0.0, %v2880
        %v2882 = vpop.f32.mrf.mxu0
        %v2883 = vadd.f32 0.0, %v2882
        %2884 = vmatmul.bf16.gmra.mxu0 %v2859
        %v2885 = vpop.f32.mrf.mxu0
        %v2886 = vadd.f32 0.0, %v2885
        %v2887 = vpop.f32.mrf.mxu0
        %v2888 = vadd.f32 0.0, %v2887
        %2889 = vdwg.mxu0
        %2898 = vrot.lane.b32.xlu0 %v2871, 96
        %v2899 = vpop.permute.xlu0 %2898
        %2900 = vrot.lane.b32.xlu0 %v2873, 96
        %v2901 = vpop.permute.xlu0 %2900
        %2902 = vrot.lane.b32.xlu0 %v2876, 96
        %v2903 = vpop.permute.xlu0 %2902
        %2904 = vrot.lane.b32.xlu0 %v2878, 96
        %v2905 = vpop.permute.xlu0 %2904
        %2906 = vrot.lane.b32.xlu0 %v2881, 96
        %v2907 = vpop.permute.xlu0 %2906
        %2908 = vrot.lane.b32.xlu0 %v2883, 96
        %v2909 = vpop.permute.xlu0 %2908
        %2910 = vrot.lane.b32.xlu0 %v2886, 96
        %v2911 = vpop.permute.xlu0 %2910
        %2912 = vrot.lane.b32.xlu0 %v2888, 96
        %v2913 = vpop.permute.xlu0 %2912
        %vm2922 = vcmask 1048320
        %2923 = vst.msk [vmem:[#allocation2] sm:$0xff] %vm2922, %v2899
        %2924 = vst.msk [vmem:[#allocation2 + $0x8] sm:$0xff] %vm2922, %v2901
        %2925 = vst.msk [vmem:[#allocation2 + $0x10] sm:$0xff] %vm2922, %v2903
        %2926 = vst.msk [vmem:[#allocation2 + $0x18] sm:$0xff] %vm2922, %v2905
        %2927 = vst.msk [vmem:[#allocation2 + $0x20] sm:$0xff] %vm2922, %v2907
        %2928 = vst.msk [vmem:[#allocation2 + $0x28] sm:$0xff] %vm2922, %v2909
        %2929 = vst.msk [vmem:[#allocation2 + $0x30] sm:$0xff] %vm2922, %v2911
        %2930 = vst.msk [vmem:[#allocation2 + $0x38] sm:$0xff] %vm2922, %v2913
        %v2931 = vpack.c.bf16 %v1639, %v1637
        %v2932 = vpack.c.bf16 %v1644, %v1642
        %v2933 = vpack.c.bf16 %v1649, %v1647
        %v2934 = vpack.c.bf16 %v1654, %v1652
        %v2935 = vadd.f32 %v1750, %v1890
        %v2936 = vadd.f32 %v1752, %v1891
        %v2937 = vadd.f32 %v1755, %v1892
        %v2938 = vadd.f32 %v1757, %v1893
        %v2939 = vadd.f32 %v1760, %v1894
        %v2940 = vadd.f32 %v1762, %v1895
        %v2941 = vadd.f32 %v1765, %v1896
        %v2942 = vadd.f32 %v1767, %v1897
        %v2943 = vpack.c.bf16 %v2936, %v2935
        %v2944 = vpack.c.bf16 %v2938, %v2937
        %v2945 = vpack.c.bf16 %v2940, %v2939
        %v2946 = vpack.c.bf16 %v2942, %v2941
        %v2947 = vadd.f32 %v1863, %v1906
        %v2948 = vadd.f32 %v1865, %v1907
        %v2949 = vadd.f32 %v1868, %v1908
        %v2950 = vadd.f32 %v1870, %v1909
        %v2951 = vadd.f32 %v1873, %v1910
        %v2952 = vadd.f32 %v1875, %v1911
        %v2953 = vadd.f32 %v1878, %v1912
        %v2954 = vadd.f32 %v1880, %v1913
        %v2955 = vpack.c.bf16 %v2948, %v2947
        %v2956 = vpack.c.bf16 %v2950, %v2949
        %v2957 = vpack.c.bf16 %v2952, %v2951
        %v2958 = vpack.c.bf16 %v2954, %v2953
        %v2959 = vld [vmem:[%s19] sm:$0x1]
        %v2961 = vperm.slane %v2959, 0
        %v2964 = vsel %vm1946, %v2931, 0
        %v2967 = vsel %vm1946, %v2932, 0
        %v2970 = vsel %vm1946, %v2933, 0
        %v2973 = vsel %vm1946, %v2934, 0
        %v2976 = vsel %vm1946, %v2943, 0
        %v2979 = vsel %vm1946, %v2944, 0
        %v2982 = vsel %vm1946, %v2945, 0
        %v2985 = vsel %vm1946, %v2946, 0
        %2987 = vmatpush.bf16.xpose.msra.mxu0 0
        %2988 = vmatpush.bf16.xpose.msra.mxu0 0
        %2989 = vmatpush.bf16.xpose.msra.mxu0 0
        %2990 = vmatpush.bf16.xpose.msra.mxu0 0
        %2991 = vmatpush.bf16.xpose.msra.mxu0 %v2985
        %2992 = vmatpush.bf16.xpose.msra.mxu0 %v2982
        %2993 = vmatpush.bf16.xpose.msra.mxu0 %v2979
        %2994 = vmatpush.bf16.xpose.msra.mxu0 %v2976
        %2995 = vmatmul.bf16.gmra.mxu0 %v2964
        %v2996 = vpop.f32.mrf.mxu0
        %v2997 = vadd.f32 %v2961, %v2996
        %v2998 = vpop.f32.mrf.mxu0
        %v2999 = vadd.f32 %v2961, %v2998
        %3000 = vmatmul.bf16.gmra.mxu0 %v2967
        %v3001 = vpop.f32.mrf.mxu0
        %v3002 = vadd.f32 %v2961, %v3001
        %v3003 = vpop.f32.mrf.mxu0
        %v3004 = vadd.f32 %v2961, %v3003
        %3005 = vmatmul.bf16.gmra.mxu0 %v2970
        %v3006 = vpop.f32.mrf.mxu0
        %v3007 = vadd.f32 %v2961, %v3006
        %v3008 = vpop.f32.mrf.mxu0
        %v3009 = vadd.f32 %v2961, %v3008
        %3010 = vmatmul.bf16.gmra.mxu0 %v2973
        %v3011 = vpop.f32.mrf.mxu0
        %v3012 = vadd.f32 %v2961, %v3011
        %v3013 = vpop.f32.mrf.mxu0
        %v3014 = vadd.f32 %v2961, %v3013
        %3015 = vdwg.mxu0
        %v3016 = vsel %vm2000, %v2997, -inf
        %3017 = vmax.xlane.f32.xlu0 %v3016
        %v3018 = vpop.xlane.xlu0 %3017
        %v3019 = vsel %vm2000, %v2999, -inf
        %3020 = vmax.xlane.f32.xlu0 %v3019
        %v3021 = vpop.xlane.xlu0 %3020
        %v3022 = vsel %vm2000, %v3002, -inf
        %3023 = vmax.xlane.f32.xlu0 %v3022
        %v3024 = vpop.xlane.xlu0 %3023
        %v3025 = vsel %vm2000, %v3004, -inf
        %3026 = vmax.xlane.f32.xlu0 %v3025
        %v3027 = vpop.xlane.xlu0 %3026
        %v3028 = vsel %vm2000, %v3007, -inf
        %3029 = vmax.xlane.f32.xlu0 %v3028
        %v3030 = vpop.xlane.xlu0 %3029
        %v3031 = vsel %vm2000, %v3009, -inf
        %3032 = vmax.xlane.f32.xlu0 %v3031
        %v3033 = vpop.xlane.xlu0 %3032
        %v3034 = vsel %vm2000, %v3012, -inf
        %3035 = vmax.xlane.f32.xlu0 %v3034
        %v3036 = vpop.xlane.xlu0 %3035
        %v3037 = vsel %vm2000, %v3014, -inf
        %3038 = vmax.xlane.f32.xlu0 %v3037
        %v3039 = vpop.xlane.xlu0 %3038
        %v3040 = vsub.f32 %v2997, %v3018
        %v3041 = vsub.f32 %v2999, %v3021
        %v3042 = vsub.f32 %v3002, %v3024
        %v3043 = vsub.f32 %v3004, %v3027
        %v3044 = vsub.f32 %v3007, %v3030
        %v3045 = vsub.f32 %v3009, %v3033
        %v3046 = vsub.f32 %v3012, %v3036
        %v3047 = vsub.f32 %v3014, %v3039
        %v3048 = vmul.f32 %v3040, 1.442695
        %v3049 = vpow.pop %v3048
        %v3050 = vmul.f32 %v3041, 1.442695
        %v3051 = vpow.pop %v3050
        %v3052 = vmul.f32 %v3042, 1.442695
        %v3053 = vpow.pop %v3052
        %v3054 = vmul.f32 %v3043, 1.442695
        %v3055 = vpow.pop %v3054
        %v3056 = vmul.f32 %v3044, 1.442695
        %v3057 = vpow.pop %v3056
        %v3058 = vmul.f32 %v3045, 1.442695
        %v3059 = vpow.pop %v3058
        %v3060 = vmul.f32 %v3046, 1.442695
        %v3061 = vpow.pop %v3060
        %v3062 = vmul.f32 %v3047, 1.442695
        %v3063 = vpow.pop %v3062
        %v3064 = vsel %vm2000, %v3049, 0.0
        %3065 = vadd.xlane.f32.xlu0 %v3064
        %v3066 = vpop.xlane.xlu0 %3065
        %v3067 = vsel %vm2000, %v3051, 0.0
        %3068 = vadd.xlane.f32.xlu0 %v3067
        %v3069 = vpop.xlane.xlu0 %3068
        %v3070 = vsel %vm2000, %v3053, 0.0
        %3071 = vadd.xlane.f32.xlu0 %v3070
        %v3072 = vpop.xlane.xlu0 %3071
        %v3073 = vsel %vm2000, %v3055, 0.0
        %3074 = vadd.xlane.f32.xlu0 %v3073
        %v3075 = vpop.xlane.xlu0 %3074
        %v3076 = vsel %vm2000, %v3057, 0.0
        %3077 = vadd.xlane.f32.xlu0 %v3076
        %v3078 = vpop.xlane.xlu0 %3077
        %v3079 = vsel %vm2000, %v3059, 0.0
        %3080 = vadd.xlane.f32.xlu0 %v3079
        %v3081 = vpop.xlane.xlu0 %3080
        %v3082 = vsel %vm2000, %v3061, 0.0
        %3083 = vadd.xlane.f32.xlu0 %v3082
        %v3084 = vpop.xlane.xlu0 %3083
        %v3085 = vsel %vm2000, %v3063, 0.0
        %3086 = vadd.xlane.f32.xlu0 %v3085
        %v3087 = vpop.xlane.xlu0 %3086
        %v3088 = vrcp.pop %v3066
        %v3089 = vrcp.pop %v3069
        %v3090 = vrcp.pop %v3072
        %v3091 = vrcp.pop %v3075
        %v3092 = vrcp.pop %v3078
        %v3093 = vrcp.pop %v3081
        %v3094 = vrcp.pop %v3084
        %v3095 = vrcp.pop %v3087
        %v3096 = vmul.f32 %v3049, %v3088
        %v3097 = vmul.f32 %v3051, %v3089
        %v3098 = vmul.f32 %v3053, %v3090
        %v3099 = vmul.f32 %v3055, %v3091
        %v3100 = vmul.f32 %v3057, %v3092
        %v3101 = vmul.f32 %v3059, %v3093
        %v3102 = vmul.f32 %v3061, %v3094
        %v3103 = vmul.f32 %v3063, %v3095
        %v3104 = vpack.c.bf16 %v3097, %v3096
        %v3105 = vpack.c.bf16 %v3099, %v3098
        %v3106 = vpack.c.bf16 %v3101, %v3100
        %v3107 = vpack.c.bf16 %v3103, %v3102
        %v3109 = vsel %vm2000, %v3104, 0
        %v3112 = vsel %vm2000, %v3105, 0
        %v3115 = vsel %vm2000, %v3106, 0
        %v3118 = vsel %vm2000, %v3107, 0
        %3120 = vmatpush.bf16.msra.mxu0 0
        %3121 = vmatpush.bf16.msra.mxu0 0
        %3122 = vmatpush.bf16.msra.mxu0 0
        %3123 = vmatpush.bf16.msra.mxu0 0
        %3124 = vmatpush.bf16.msra.mxu0 %v2958
        %3125 = vmatpush.bf16.msra.mxu0 %v2957
        %3126 = vmatpush.bf16.msra.mxu0 %v2956
        %3127 = vmatpush.bf16.msra.mxu0 %v2955
        %3128 = vmatmul.bf16.gmra.mxu0 %v3109
        %v3129 = vpop.f32.mrf.mxu0
        %v3130 = vadd.f32 0.0, %v3129
        %v3131 = vpop.f32.mrf.mxu0
        %v3132 = vadd.f32 0.0, %v3131
        %3133 = vmatmul.bf16.gmra.mxu0 %v3112
        %v3134 = vpop.f32.mrf.mxu0
        %v3135 = vadd.f32 0.0, %v3134
        %v3136 = vpop.f32.mrf.mxu0
        %v3137 = vadd.f32 0.0, %v3136
        %3138 = vmatmul.bf16.gmra.mxu0 %v3115
        %v3139 = vpop.f32.mrf.mxu0
        %v3140 = vadd.f32 0.0, %v3139
        %v3141 = vpop.f32.mrf.mxu0
        %v3142 = vadd.f32 0.0, %v3141
        %3143 = vmatmul.bf16.gmra.mxu0 %v3118
        %v3144 = vpop.f32.mrf.mxu0
        %v3145 = vadd.f32 0.0, %v3144
        %v3146 = vpop.f32.mrf.mxu0
        %v3147 = vadd.f32 0.0, %v3146
        %3148 = vdwg.mxu0
        %3149 = vst.msk [vmem:[#allocation2 + $0x40] sm:$0xff] %vm1946, %v3130
        %3150 = vst.msk [vmem:[#allocation2 + $0x48] sm:$0xff] %vm1946, %v3132
        %3151 = vst.msk [vmem:[#allocation2 + $0x50] sm:$0xff] %vm1946, %v3135
        %3152 = vst.msk [vmem:[#allocation2 + $0x58] sm:$0xff] %vm1946, %v3137
        %3153 = vst.msk [vmem:[#allocation2 + $0x60] sm:$0xff] %vm1946, %v3140
        %3154 = vst.msk [vmem:[#allocation2 + $0x68] sm:$0xff] %vm1946, %v3142
        %3155 = vst.msk [vmem:[#allocation2 + $0x70] sm:$0xff] %vm1946, %v3145
        %3156 = vst.msk [vmem:[#allocation2 + $0x78] sm:$0xff] %vm1946, %v3147
        %v3157 = vld [vmem:[%s19] sm:$0x1]
        %v3159 = vperm.slane %v3157, 0
        %3165 = vrot.lane.b32.xlu0 %v2931, 96
        %v3166 = vpop.permute.xlu0 %3165
        %3167 = vrot.lane.b32.xlu0 %v2932, 96
        %v3168 = vpop.permute.xlu0 %3167
        %3169 = vrot.lane.b32.xlu0 %v2933, 96
        %v3170 = vpop.permute.xlu0 %3169
        %3171 = vrot.lane.b32.xlu0 %v2934, 96
        %v3172 = vpop.permute.xlu0 %3171
        %3177 = vrot.lane.b32.xlu0 %v2943, 96
        %v3178 = vpop.permute.xlu0 %3177
        %3179 = vrot.lane.b32.xlu0 %v2944, 96
        %v3180 = vpop.permute.xlu0 %3179
        %3181 = vrot.lane.b32.xlu0 %v2945, 96
        %v3182 = vpop.permute.xlu0 %3181
        %3183 = vrot.lane.b32.xlu0 %v2946, 96
        %v3184 = vpop.permute.xlu0 %3183
        %v3186 = vsel %vm1946, %v3166, 0
        %v3189 = vsel %vm1946, %v3168, 0
        %v3192 = vsel %vm1946, %v3170, 0
        %v3195 = vsel %vm1946, %v3172, 0
        %v3198 = vsel %vm1946, %v3178, 0
        %v3201 = vsel %vm1946, %v3180, 0
        %v3204 = vsel %vm1946, %v3182, 0
        %v3207 = vsel %vm1946, %v3184, 0
        %3209 = vmatpush.bf16.xpose.msra.mxu0 0
        %3210 = vmatpush.bf16.xpose.msra.mxu0 0
        %3211 = vmatpush.bf16.xpose.msra.mxu0 0
        %3212 = vmatpush.bf16.xpose.msra.mxu0 0
        %3213 = vmatpush.bf16.xpose.msra.mxu0 %v3207
        %3214 = vmatpush.bf16.xpose.msra.mxu0 %v3204
        %3215 = vmatpush.bf16.xpose.msra.mxu0 %v3201
        %3216 = vmatpush.bf16.xpose.msra.mxu0 %v3198
        %3217 = vmatmul.bf16.gmra.mxu0 %v3186
        %v3218 = vpop.f32.mrf.mxu0
        %v3219 = vadd.f32 %v3159, %v3218
        %v3220 = vpop.f32.mrf.mxu0
        %v3221 = vadd.f32 %v3159, %v3220
        %3222 = vmatmul.bf16.gmra.mxu0 %v3189
        %v3223 = vpop.f32.mrf.mxu0
        %v3224 = vadd.f32 %v3159, %v3223
        %v3225 = vpop.f32.mrf.mxu0
        %v3226 = vadd.f32 %v3159, %v3225
        %3227 = vmatmul.bf16.gmra.mxu0 %v3192
        %v3228 = vpop.f32.mrf.mxu0
        %v3229 = vadd.f32 %v3159, %v3228
        %v3230 = vpop.f32.mrf.mxu0
        %v3231 = vadd.f32 %v3159, %v3230
        %3232 = vmatmul.bf16.gmra.mxu0 %v3195
        %v3233 = vpop.f32.mrf.mxu0
        %v3234 = vadd.f32 %v3159, %v3233
        %v3235 = vpop.f32.mrf.mxu0
        %v3236 = vadd.f32 %v3159, %v3235
        %3237 = vdwg.mxu0
        %v3238 = vsel %vm2000, %v3219, -inf
        %3239 = vmax.xlane.f32.xlu0 %v3238
        %v3240 = vpop.xlane.xlu0 %3239
        %v3241 = vsel %vm2000, %v3221, -inf
        %3242 = vmax.xlane.f32.xlu0 %v3241
        %v3243 = vpop.xlane.xlu0 %3242
        %v3244 = vsel %vm2000, %v3224, -inf
        %3245 = vmax.xlane.f32.xlu0 %v3244
        %v3246 = vpop.xlane.xlu0 %3245
        %v3247 = vsel %vm2000, %v3226, -inf
        %3248 = vmax.xlane.f32.xlu0 %v3247
        %v3249 = vpop.xlane.xlu0 %3248
        %v3250 = vsel %vm2000, %v3229, -inf
        %3251 = vmax.xlane.f32.xlu0 %v3250
        %v3252 = vpop.xlane.xlu0 %3251
        %v3253 = vsel %vm2000, %v3231, -inf
        %3254 = vmax.xlane.f32.xlu0 %v3253
        %v3255 = vpop.xlane.xlu0 %3254
        %v3256 = vsel %vm2000, %v3234, -inf
        %3257 = vmax.xlane.f32.xlu0 %v3256
        %v3258 = vpop.xlane.xlu0 %3257
        %v3259 = vsel %vm2000, %v3236, -inf
        %3260 = vmax.xlane.f32.xlu0 %v3259
        %v3261 = vpop.xlane.xlu0 %3260
        %v3262 = vsub.f32 %v3219, %v3240
        %v3263 = vsub.f32 %v3221, %v3243
        %v3264 = vsub.f32 %v3224, %v3246
        %v3265 = vsub.f32 %v3226, %v3249
        %v3266 = vsub.f32 %v3229, %v3252
        %v3267 = vsub.f32 %v3231, %v3255
        %v3268 = vsub.f32 %v3234, %v3258
        %v3269 = vsub.f32 %v3236, %v3261
        %v3270 = vmul.f32 %v3262, 1.442695
        %v3271 = vpow.pop %v3270
        %v3272 = vmul.f32 %v3263, 1.442695
        %v3273 = vpow.pop %v3272
        %v3274 = vmul.f32 %v3264, 1.442695
        %v3275 = vpow.pop %v3274
        %v3276 = vmul.f32 %v3265, 1.442695
        %v3277 = vpow.pop %v3276
        %v3278 = vmul.f32 %v3266, 1.442695
        %v3279 = vpow.pop %v3278
        %v3280 = vmul.f32 %v3267, 1.442695
        %v3281 = vpow.pop %v3280
        %v3282 = vmul.f32 %v3268, 1.442695
        %v3283 = vpow.pop %v3282
        %v3284 = vmul.f32 %v3269, 1.442695
        %v3285 = vpow.pop %v3284
        %v3286 = vsel %vm2000, %v3271, 0.0
        %3287 = vadd.xlane.f32.xlu0 %v3286
        %v3288 = vpop.xlane.xlu0 %3287
        %v3289 = vsel %vm2000, %v3273, 0.0
        %3290 = vadd.xlane.f32.xlu0 %v3289
        %v3291 = vpop.xlane.xlu0 %3290
        %v3292 = vsel %vm2000, %v3275, 0.0
        %3293 = vadd.xlane.f32.xlu0 %v3292
        %v3294 = vpop.xlane.xlu0 %3293
        %v3295 = vsel %vm2000, %v3277, 0.0
        %3296 = vadd.xlane.f32.xlu0 %v3295
        %v3297 = vpop.xlane.xlu0 %3296
        %v3298 = vsel %vm2000, %v3279, 0.0
        %3299 = vadd.xlane.f32.xlu0 %v3298
        %v3300 = vpop.xlane.xlu0 %3299
        %v3301 = vsel %vm2000, %v3281, 0.0
        %3302 = vadd.xlane.f32.xlu0 %v3301
        %v3303 = vpop.xlane.xlu0 %3302
        %v3304 = vsel %vm2000, %v3283, 0.0
        %3305 = vadd.xlane.f32.xlu0 %v3304
        %v3306 = vpop.xlane.xlu0 %3305
        %v3307 = vsel %vm2000, %v3285, 0.0
        %3308 = vadd.xlane.f32.xlu0 %v3307
        %v3309 = vpop.xlane.xlu0 %3308
        %v3310 = vrcp.pop %v3288
        %v3311 = vrcp.pop %v3291
        %v3312 = vrcp.pop %v3294
        %v3313 = vrcp.pop %v3297
        %v3314 = vrcp.pop %v3300
        %v3315 = vrcp.pop %v3303
        %v3316 = vrcp.pop %v3306
        %v3317 = vrcp.pop %v3309
        %v3318 = vmul.f32 %v3271, %v3310
        %v3319 = vmul.f32 %v3273, %v3311
        %v3320 = vmul.f32 %v3275, %v3312
        %v3321 = vmul.f32 %v3277, %v3313
        %v3322 = vmul.f32 %v3279, %v3314
        %v3323 = vmul.f32 %v3281, %v3315
        %v3324 = vmul.f32 %v3283, %v3316
        %v3325 = vmul.f32 %v3285, %v3317
        %v3326 = vpack.c.bf16 %v3319, %v3318
        %v3327 = vpack.c.bf16 %v3321, %v3320
        %v3328 = vpack.c.bf16 %v3323, %v3322
        %v3329 = vpack.c.bf16 %v3325, %v3324
        %3334 = vrot.lane.b32.xlu0 %v2955, 96
        %v3335 = vpop.permute.xlu0 %3334
        %3336 = vrot.lane.b32.xlu0 %v2956, 96
        %v3337 = vpop.permute.xlu0 %3336
        %3338 = vrot.lane.b32.xlu0 %v2957, 96
        %v3339 = vpop.permute.xlu0 %3338
        %3340 = vrot.lane.b32.xlu0 %v2958, 96
        %v3341 = vpop.permute.xlu0 %3340
        %v3347 = vsel %vm2000, %v3326, 0
        %v3350 = vsel %vm2000, %v3327, 0
        %v3353 = vsel %vm2000, %v3328, 0
        %v3356 = vsel %vm2000, %v3329, 0
        %3358 = vmatpush.bf16.msra.mxu0 0
        %3359 = vmatpush.bf16.msra.mxu0 0
        %3360 = vmatpush.bf16.msra.mxu0 0
        %3361 = vmatpush.bf16.msra.mxu0 0
        %3362 = vmatpush.bf16.msra.mxu0 %v3341
        %3363 = vmatpush.bf16.msra.mxu0 %v3339
        %3364 = vmatpush.bf16.msra.mxu0 %v3337
        %3365 = vmatpush.bf16.msra.mxu0 %v3335
        %3366 = vmatmul.bf16.gmra.mxu0 %v3347
        %v3367 = vpop.f32.mrf.mxu0
        %v3368 = vadd.f32 0.0, %v3367
        %v3369 = vpop.f32.mrf.mxu0
        %v3370 = vadd.f32 0.0, %v3369
        %3371 = vmatmul.bf16.gmra.mxu0 %v3350
        %v3372 = vpop.f32.mrf.mxu0
        %v3373 = vadd.f32 0.0, %v3372
        %v3374 = vpop.f32.mrf.mxu0
        %v3375 = vadd.f32 0.0, %v3374
        %3376 = vmatmul.bf16.gmra.mxu0 %v3353
        %v3377 = vpop.f32.mrf.mxu0
        %v3378 = vadd.f32 0.0, %v3377
        %v3379 = vpop.f32.mrf.mxu0
        %v3380 = vadd.f32 0.0, %v3379
        %3381 = vmatmul.bf16.gmra.mxu0 %v3356
        %v3382 = vpop.f32.mrf.mxu0
        %v3383 = vadd.f32 0.0, %v3382
        %v3384 = vpop.f32.mrf.mxu0
        %v3385 = vadd.f32 0.0, %v3384
        %3386 = vdwg.mxu0
        %3395 = vrot.lane.b32.xlu0 %v3368, 32
        %v3396 = vpop.permute.xlu0 %3395
        %3397 = vrot.lane.b32.xlu0 %v3370, 32
        %v3398 = vpop.permute.xlu0 %3397
        %3399 = vrot.lane.b32.xlu0 %v3373, 32
        %v3400 = vpop.permute.xlu0 %3399
        %3401 = vrot.lane.b32.xlu0 %v3375, 32
        %v3402 = vpop.permute.xlu0 %3401
        %3403 = vrot.lane.b32.xlu0 %v3378, 32
        %v3404 = vpop.permute.xlu0 %3403
        %3405 = vrot.lane.b32.xlu0 %v3380, 32
        %v3406 = vpop.permute.xlu0 %3405
        %3407 = vrot.lane.b32.xlu0 %v3383, 32
        %v3408 = vpop.permute.xlu0 %3407
        %3409 = vrot.lane.b32.xlu0 %v3385, 32
        %v3410 = vpop.permute.xlu0 %3409
        %3419 = vst.msk [vmem:[#allocation2 + $0x40] sm:$0xff] %vm2404, %v3396
        %3420 = vst.msk [vmem:[#allocation2 + $0x48] sm:$0xff] %vm2404, %v3398
        %3421 = vst.msk [vmem:[#allocation2 + $0x50] sm:$0xff] %vm2404, %v3400
        %3422 = vst.msk [vmem:[#allocation2 + $0x58] sm:$0xff] %vm2404, %v3402
        %3423 = vst.msk [vmem:[#allocation2 + $0x60] sm:$0xff] %vm2404, %v3404
        %3424 = vst.msk [vmem:[#allocation2 + $0x68] sm:$0xff] %vm2404, %v3406
        %3425 = vst.msk [vmem:[#allocation2 + $0x70] sm:$0xff] %vm2404, %v3408
        %3426 = vst.msk [vmem:[#allocation2 + $0x78] sm:$0xff] %vm2404, %v3410
        %v3427 = vld [vmem:[%s19] sm:$0x1]
        %v3429 = vperm.slane %v3427, 0
        %3431 = vrot.lane.b32.xlu0 %v2931, 64
        %v3432 = vpop.permute.xlu0 %3431
        %3433 = vrot.lane.b32.xlu0 %v2932, 64
        %v3434 = vpop.permute.xlu0 %3433
        %3435 = vrot.lane.b32.xlu0 %v2933, 64
        %v3436 = vpop.permute.xlu0 %3435
        %3437 = vrot.lane.b32.xlu0 %v2934, 64
        %v3438 = vpop.permute.xlu0 %3437
        %3439 = vrot.lane.b32.xlu0 %v2943, 64
        %v3440 = vpop.permute.xlu0 %3439
        %3441 = vrot.lane.b32.xlu0 %v2944, 64
        %v3442 = vpop.permute.xlu0 %3441
        %3443 = vrot.lane.b32.xlu0 %v2945, 64
        %v3444 = vpop.permute.xlu0 %3443
        %3445 = vrot.lane.b32.xlu0 %v2946, 64
        %v3446 = vpop.permute.xlu0 %3445
        %v3448 = vsel %vm1946, %v3432, 0
        %v3451 = vsel %vm1946, %v3434, 0
        %v3454 = vsel %vm1946, %v3436, 0
        %v3457 = vsel %vm1946, %v3438, 0
        %v3460 = vsel %vm1946, %v3440, 0
        %v3463 = vsel %vm1946, %v3442, 0
        %v3466 = vsel %vm1946, %v3444, 0
        %v3469 = vsel %vm1946, %v3446, 0
        %3471 = vmatpush.bf16.xpose.msra.mxu0 0
        %3472 = vmatpush.bf16.xpose.msra.mxu0 0
        %3473 = vmatpush.bf16.xpose.msra.mxu0 0
        %3474 = vmatpush.bf16.xpose.msra.mxu0 0
        %3475 = vmatpush.bf16.xpose.msra.mxu0 %v3469
        %3476 = vmatpush.bf16.xpose.msra.mxu0 %v3466
        %3477 = vmatpush.bf16.xpose.msra.mxu0 %v3463
        %3478 = vmatpush.bf16.xpose.msra.mxu0 %v3460
        %3479 = vmatmul.bf16.gmra.mxu0 %v3448
        %v3480 = vpop.f32.mrf.mxu0
        %v3481 = vadd.f32 %v3429, %v3480
        %v3482 = vpop.f32.mrf.mxu0
        %v3483 = vadd.f32 %v3429, %v3482
        %3484 = vmatmul.bf16.gmra.mxu0 %v3451
        %v3485 = vpop.f32.mrf.mxu0
        %v3486 = vadd.f32 %v3429, %v3485
        %v3487 = vpop.f32.mrf.mxu0
        %v3488 = vadd.f32 %v3429, %v3487
        %3489 = vmatmul.bf16.gmra.mxu0 %v3454
        %v3490 = vpop.f32.mrf.mxu0
        %v3491 = vadd.f32 %v3429, %v3490
        %v3492 = vpop.f32.mrf.mxu0
        %v3493 = vadd.f32 %v3429, %v3492
        %3494 = vmatmul.bf16.gmra.mxu0 %v3457
        %v3495 = vpop.f32.mrf.mxu0
        %v3496 = vadd.f32 %v3429, %v3495
        %v3497 = vpop.f32.mrf.mxu0
        %v3498 = vadd.f32 %v3429, %v3497
        %3499 = vdwg.mxu0
        %v3500 = vsel %vm2000, %v3481, -inf
        %3501 = vmax.xlane.f32.xlu0 %v3500
        %v3502 = vpop.xlane.xlu0 %3501
        %v3503 = vsel %vm2000, %v3483, -inf
        %3504 = vmax.xlane.f32.xlu0 %v3503
        %v3505 = vpop.xlane.xlu0 %3504
        %v3506 = vsel %vm2000, %v3486, -inf
        %3507 = vmax.xlane.f32.xlu0 %v3506
        %v3508 = vpop.xlane.xlu0 %3507
        %v3509 = vsel %vm2000, %v3488, -inf
        %3510 = vmax.xlane.f32.xlu0 %v3509
        %v3511 = vpop.xlane.xlu0 %3510
        %v3512 = vsel %vm2000, %v3491, -inf
        %3513 = vmax.xlane.f32.xlu0 %v3512
        %v3514 = vpop.xlane.xlu0 %3513
        %v3515 = vsel %vm2000, %v3493, -inf
        %3516 = vmax.xlane.f32.xlu0 %v3515
        %v3517 = vpop.xlane.xlu0 %3516
        %v3518 = vsel %vm2000, %v3496, -inf
        %3519 = vmax.xlane.f32.xlu0 %v3518
        %v3520 = vpop.xlane.xlu0 %3519
        %v3521 = vsel %vm2000, %v3498, -inf
        %3522 = vmax.xlane.f32.xlu0 %v3521
        %v3523 = vpop.xlane.xlu0 %3522
        %v3524 = vsub.f32 %v3481, %v3502
        %v3525 = vsub.f32 %v3483, %v3505
        %v3526 = vsub.f32 %v3486, %v3508
        %v3527 = vsub.f32 %v3488, %v3511
        %v3528 = vsub.f32 %v3491, %v3514
        %v3529 = vsub.f32 %v3493, %v3517
        %v3530 = vsub.f32 %v3496, %v3520
        %v3531 = vsub.f32 %v3498, %v3523
        %v3532 = vmul.f32 %v3524, 1.442695
        %v3533 = vpow.pop %v3532
        %v3534 = vmul.f32 %v3525, 1.442695
        %v3535 = vpow.pop %v3534
        %v3536 = vmul.f32 %v3526, 1.442695
        %v3537 = vpow.pop %v3536
        %v3538 = vmul.f32 %v3527, 1.442695
        %v3539 = vpow.pop %v3538
        %v3540 = vmul.f32 %v3528, 1.442695
        %v3541 = vpow.pop %v3540
        %v3542 = vmul.f32 %v3529, 1.442695
        %v3543 = vpow.pop %v3542
        %v3544 = vmul.f32 %v3530, 1.442695
        %v3545 = vpow.pop %v3544
        %v3546 = vmul.f32 %v3531, 1.442695
        %v3547 = vpow.pop %v3546
        %v3548 = vsel %vm2000, %v3533, 0.0
        %3549 = vadd.xlane.f32.xlu0 %v3548
        %v3550 = vpop.xlane.xlu0 %3549
        %v3551 = vsel %vm2000, %v3535, 0.0
        %3552 = vadd.xlane.f32.xlu0 %v3551
        %v3553 = vpop.xlane.xlu0 %3552
        %v3554 = vsel %vm2000, %v3537, 0.0
        %3555 = vadd.xlane.f32.xlu0 %v3554
        %v3556 = vpop.xlane.xlu0 %3555
        %v3557 = vsel %vm2000, %v3539, 0.0
        %3558 = vadd.xlane.f32.xlu0 %v3557
        %v3559 = vpop.xlane.xlu0 %3558
        %v3560 = vsel %vm2000, %v3541, 0.0
        %3561 = vadd.xlane.f32.xlu0 %v3560
        %v3562 = vpop.xlane.xlu0 %3561
        %v3563 = vsel %vm2000, %v3543, 0.0
        %3564 = vadd.xlane.f32.xlu0 %v3563
        %v3565 = vpop.xlane.xlu0 %3564
        %v3566 = vsel %vm2000, %v3545, 0.0
        %3567 = vadd.xlane.f32.xlu0 %v3566
        %v3568 = vpop.xlane.xlu0 %3567
        %v3569 = vsel %vm2000, %v3547, 0.0
        %3570 = vadd.xlane.f32.xlu0 %v3569
        %v3571 = vpop.xlane.xlu0 %3570
        %v3572 = vrcp.pop %v3550
        %v3573 = vrcp.pop %v3553
        %v3574 = vrcp.pop %v3556
        %v3575 = vrcp.pop %v3559
        %v3576 = vrcp.pop %v3562
        %v3577 = vrcp.pop %v3565
        %v3578 = vrcp.pop %v3568
        %v3579 = vrcp.pop %v3571
        %v3580 = vmul.f32 %v3533, %v3572
        %v3581 = vmul.f32 %v3535, %v3573
        %v3582 = vmul.f32 %v3537, %v3574
        %v3583 = vmul.f32 %v3539, %v3575
        %v3584 = vmul.f32 %v3541, %v3576
        %v3585 = vmul.f32 %v3543, %v3577
        %v3586 = vmul.f32 %v3545, %v3578
        %v3587 = vmul.f32 %v3547, %v3579
        %v3588 = vpack.c.bf16 %v3581, %v3580
        %v3589 = vpack.c.bf16 %v3583, %v3582
        %v3590 = vpack.c.bf16 %v3585, %v3584
        %v3591 = vpack.c.bf16 %v3587, %v3586
        %3592 = vrot.lane.b32.xlu0 %v2955, 64
        %v3593 = vpop.permute.xlu0 %3592
        %3594 = vrot.lane.b32.xlu0 %v2956, 64
        %v3595 = vpop.permute.xlu0 %3594
        %3596 = vrot.lane.b32.xlu0 %v2957, 64
        %v3597 = vpop.permute.xlu0 %3596
        %3598 = vrot.lane.b32.xlu0 %v2958, 64
        %v3599 = vpop.permute.xlu0 %3598
        %v3605 = vsel %vm2000, %v3588, 0
        %v3608 = vsel %vm2000, %v3589, 0
        %v3611 = vsel %vm2000, %v3590, 0
        %v3614 = vsel %vm2000, %v3591, 0
        %3616 = vmatpush.bf16.msra.mxu0 0
        %3617 = vmatpush.bf16.msra.mxu0 0
        %3618 = vmatpush.bf16.msra.mxu0 0
        %3619 = vmatpush.bf16.msra.mxu0 0
        %3620 = vmatpush.bf16.msra.mxu0 %v3599
        %3621 = vmatpush.bf16.msra.mxu0 %v3597
        %3622 = vmatpush.bf16.msra.mxu0 %v3595
        %3623 = vmatpush.bf16.msra.mxu0 %v3593
        %3624 = vmatmul.bf16.gmra.mxu0 %v3605
        %v3625 = vpop.f32.mrf.mxu0
        %v3626 = vadd.f32 0.0, %v3625
        %v3627 = vpop.f32.mrf.mxu0
        %v3628 = vadd.f32 0.0, %v3627
        %3629 = vmatmul.bf16.gmra.mxu0 %v3608
        %v3630 = vpop.f32.mrf.mxu0
        %v3631 = vadd.f32 0.0, %v3630
        %v3632 = vpop.f32.mrf.mxu0
        %v3633 = vadd.f32 0.0, %v3632
        %3634 = vmatmul.bf16.gmra.mxu0 %v3611
        %v3635 = vpop.f32.mrf.mxu0
        %v3636 = vadd.f32 0.0, %v3635
        %v3637 = vpop.f32.mrf.mxu0
        %v3638 = vadd.f32 0.0, %v3637
        %3639 = vmatmul.bf16.gmra.mxu0 %v3614
        %v3640 = vpop.f32.mrf.mxu0
        %v3641 = vadd.f32 0.0, %v3640
        %v3642 = vpop.f32.mrf.mxu0
        %v3643 = vadd.f32 0.0, %v3642
        %3644 = vdwg.mxu0
        %3653 = vrot.lane.b32.xlu0 %v3626, 64
        %v3654 = vpop.permute.xlu0 %3653
        %3655 = vrot.lane.b32.xlu0 %v3628, 64
        %v3656 = vpop.permute.xlu0 %3655
        %3657 = vrot.lane.b32.xlu0 %v3631, 64
        %v3658 = vpop.permute.xlu0 %3657
        %3659 = vrot.lane.b32.xlu0 %v3633, 64
        %v3660 = vpop.permute.xlu0 %3659
        %3661 = vrot.lane.b32.xlu0 %v3636, 64
        %v3662 = vpop.permute.xlu0 %3661
        %3663 = vrot.lane.b32.xlu0 %v3638, 64
        %v3664 = vpop.permute.xlu0 %3663
        %3665 = vrot.lane.b32.xlu0 %v3641, 64
        %v3666 = vpop.permute.xlu0 %3665
        %3667 = vrot.lane.b32.xlu0 %v3643, 64
        %v3668 = vpop.permute.xlu0 %3667
        %3677 = vst.msk [vmem:[#allocation2 + $0x40] sm:$0xff] %vm2663, %v3654
        %3678 = vst.msk [vmem:[#allocation2 + $0x48] sm:$0xff] %vm2663, %v3656
        %3679 = vst.msk [vmem:[#allocation2 + $0x50] sm:$0xff] %vm2663, %v3658
        %3680 = vst.msk [vmem:[#allocation2 + $0x58] sm:$0xff] %vm2663, %v3660
        %3681 = vst.msk [vmem:[#allocation2 + $0x60] sm:$0xff] %vm2663, %v3662
        %3682 = vst.msk [vmem:[#allocation2 + $0x68] sm:$0xff] %vm2663, %v3664
        %3683 = vst.msk [vmem:[#allocation2 + $0x70] sm:$0xff] %vm2663, %v3666
        %3684 = vst.msk [vmem:[#allocation2 + $0x78] sm:$0xff] %vm2663, %v3668
        %v3685 = vld [vmem:[%s19] sm:$0x1]
        %v3687 = vperm.slane %v3685, 0
        %3689 = vrot.lane.b32.xlu0 %v2931, 32
        %v3690 = vpop.permute.xlu0 %3689
        %3691 = vrot.lane.b32.xlu0 %v2932, 32
        %v3692 = vpop.permute.xlu0 %3691
        %3693 = vrot.lane.b32.xlu0 %v2933, 32
        %v3694 = vpop.permute.xlu0 %3693
        %3695 = vrot.lane.b32.xlu0 %v2934, 32
        %v3696 = vpop.permute.xlu0 %3695
        %3697 = vrot.lane.b32.xlu0 %v2943, 32
        %v3698 = vpop.permute.xlu0 %3697
        %3699 = vrot.lane.b32.xlu0 %v2944, 32
        %v3700 = vpop.permute.xlu0 %3699
        %3701 = vrot.lane.b32.xlu0 %v2945, 32
        %v3702 = vpop.permute.xlu0 %3701
        %3703 = vrot.lane.b32.xlu0 %v2946, 32
        %v3704 = vpop.permute.xlu0 %3703
        %v3706 = vsel %vm1946, %v3690, 0
        %v3709 = vsel %vm1946, %v3692, 0
        %v3712 = vsel %vm1946, %v3694, 0
        %v3715 = vsel %vm1946, %v3696, 0
        %v3718 = vsel %vm1946, %v3698, 0
        %v3721 = vsel %vm1946, %v3700, 0
        %v3724 = vsel %vm1946, %v3702, 0
        %v3727 = vsel %vm1946, %v3704, 0
        %3729 = vmatpush.bf16.xpose.msra.mxu0 0
        %3730 = vmatpush.bf16.xpose.msra.mxu0 0
        %3731 = vmatpush.bf16.xpose.msra.mxu0 0
        %3732 = vmatpush.bf16.xpose.msra.mxu0 0
        %3733 = vmatpush.bf16.xpose.msra.mxu0 %v3727
        %3734 = vmatpush.bf16.xpose.msra.mxu0 %v3724
        %3735 = vmatpush.bf16.xpose.msra.mxu0 %v3721
        %3736 = vmatpush.bf16.xpose.msra.mxu0 %v3718
        %3737 = vmatmul.bf16.gmra.mxu0 %v3706
        %v3738 = vpop.f32.mrf.mxu0
        %v3739 = vadd.f32 %v3687, %v3738
        %v3740 = vpop.f32.mrf.mxu0
        %v3741 = vadd.f32 %v3687, %v3740
        %3742 = vmatmul.bf16.gmra.mxu0 %v3709
        %v3743 = vpop.f32.mrf.mxu0
        %v3744 = vadd.f32 %v3687, %v3743
        %v3745 = vpop.f32.mrf.mxu0
        %v3746 = vadd.f32 %v3687, %v3745
        %3747 = vmatmul.bf16.gmra.mxu0 %v3712
        %v3748 = vpop.f32.mrf.mxu0
        %v3749 = vadd.f32 %v3687, %v3748
        %v3750 = vpop.f32.mrf.mxu0
        %v3751 = vadd.f32 %v3687, %v3750
        %3752 = vmatmul.bf16.gmra.mxu0 %v3715
        %v3753 = vpop.f32.mrf.mxu0
        %v3754 = vadd.f32 %v3687, %v3753
        %v3755 = vpop.f32.mrf.mxu0
        %v3756 = vadd.f32 %v3687, %v3755
        %3757 = vdwg.mxu0
        %v3758 = vsel %vm2000, %v3739, -inf
        %3759 = vmax.xlane.f32.xlu0 %v3758
        %v3760 = vpop.xlane.xlu0 %3759
        %v3761 = vsel %vm2000, %v3741, -inf
        %3762 = vmax.xlane.f32.xlu0 %v3761
        %v3763 = vpop.xlane.xlu0 %3762
        %v3764 = vsel %vm2000, %v3744, -inf
        %3765 = vmax.xlane.f32.xlu0 %v3764
        %v3766 = vpop.xlane.xlu0 %3765
        %v3767 = vsel %vm2000, %v3746, -inf
        %3768 = vmax.xlane.f32.xlu0 %v3767
        %v3769 = vpop.xlane.xlu0 %3768
        %v3770 = vsel %vm2000, %v3749, -inf
        %3771 = vmax.xlane.f32.xlu0 %v3770
        %v3772 = vpop.xlane.xlu0 %3771
        %v3773 = vsel %vm2000, %v3751, -inf
        %3774 = vmax.xlane.f32.xlu0 %v3773
        %v3775 = vpop.xlane.xlu0 %3774
        %v3776 = vsel %vm2000, %v3754, -inf
        %3777 = vmax.xlane.f32.xlu0 %v3776
        %v3778 = vpop.xlane.xlu0 %3777
        %v3779 = vsel %vm2000, %v3756, -inf
        %3780 = vmax.xlane.f32.xlu0 %v3779
        %v3781 = vpop.xlane.xlu0 %3780
        %v3782 = vsub.f32 %v3739, %v3760
        %v3783 = vsub.f32 %v3741, %v3763
        %v3784 = vsub.f32 %v3744, %v3766
        %v3785 = vsub.f32 %v3746, %v3769
        %v3786 = vsub.f32 %v3749, %v3772
        %v3787 = vsub.f32 %v3751, %v3775
        %v3788 = vsub.f32 %v3754, %v3778
        %v3789 = vsub.f32 %v3756, %v3781
        %v3790 = vmul.f32 %v3782, 1.442695
        %v3791 = vpow.pop %v3790
        %v3792 = vmul.f32 %v3783, 1.442695
        %v3793 = vpow.pop %v3792
        %v3794 = vmul.f32 %v3784, 1.442695
        %v3795 = vpow.pop %v3794
        %v3796 = vmul.f32 %v3785, 1.442695
        %v3797 = vpow.pop %v3796
        %v3798 = vmul.f32 %v3786, 1.442695
        %v3799 = vpow.pop %v3798
        %v3800 = vmul.f32 %v3787, 1.442695
        %v3801 = vpow.pop %v3800
        %v3802 = vmul.f32 %v3788, 1.442695
        %v3803 = vpow.pop %v3802
        %v3804 = vmul.f32 %v3789, 1.442695
        %v3805 = vpow.pop %v3804
        %v3806 = vsel %vm2000, %v3791, 0.0
        %3807 = vadd.xlane.f32.xlu0 %v3806
        %v3808 = vpop.xlane.xlu0 %3807
        %v3809 = vsel %vm2000, %v3793, 0.0
        %3810 = vadd.xlane.f32.xlu0 %v3809
        %v3811 = vpop.xlane.xlu0 %3810
        %v3812 = vsel %vm2000, %v3795, 0.0
        %3813 = vadd.xlane.f32.xlu0 %v3812
        %v3814 = vpop.xlane.xlu0 %3813
        %v3815 = vsel %vm2000, %v3797, 0.0
        %3816 = vadd.xlane.f32.xlu0 %v3815
        %v3817 = vpop.xlane.xlu0 %3816
        %v3818 = vsel %vm2000, %v3799, 0.0
        %3819 = vadd.xlane.f32.xlu0 %v3818
        %v3820 = vpop.xlane.xlu0 %3819
        %v3821 = vsel %vm2000, %v3801, 0.0
        %3822 = vadd.xlane.f32.xlu0 %v3821
        %v3823 = vpop.xlane.xlu0 %3822
        %v3824 = vsel %vm2000, %v3803, 0.0
        %3825 = vadd.xlane.f32.xlu0 %v3824
        %v3826 = vpop.xlane.xlu0 %3825
        %v3827 = vsel %vm2000, %v3805, 0.0
        %3828 = vadd.xlane.f32.xlu0 %v3827
        %v3829 = vpop.xlane.xlu0 %3828
        %v3830 = vrcp.pop %v3808
        %v3831 = vrcp.pop %v3811
        %v3832 = vrcp.pop %v3814
        %v3833 = vrcp.pop %v3817
        %v3834 = vrcp.pop %v3820
        %v3835 = vrcp.pop %v3823
        %v3836 = vrcp.pop %v3826
        %v3837 = vrcp.pop %v3829
        %v3838 = vmul.f32 %v3791, %v3830
        %v3839 = vmul.f32 %v3793, %v3831
        %v3840 = vmul.f32 %v3795, %v3832
        %v3841 = vmul.f32 %v3797, %v3833
        %v3842 = vmul.f32 %v3799, %v3834
        %v3843 = vmul.f32 %v3801, %v3835
        %v3844 = vmul.f32 %v3803, %v3836
        %v3845 = vmul.f32 %v3805, %v3837
        %v3846 = vpack.c.bf16 %v3839, %v3838
        %v3847 = vpack.c.bf16 %v3841, %v3840
        %v3848 = vpack.c.bf16 %v3843, %v3842
        %v3849 = vpack.c.bf16 %v3845, %v3844
        %3850 = vrot.lane.b32.xlu0 %v2955, 32
        %v3851 = vpop.permute.xlu0 %3850
        %3852 = vrot.lane.b32.xlu0 %v2956, 32
        %v3853 = vpop.permute.xlu0 %3852
        %3854 = vrot.lane.b32.xlu0 %v2957, 32
        %v3855 = vpop.permute.xlu0 %3854
        %3856 = vrot.lane.b32.xlu0 %v2958, 32
        %v3857 = vpop.permute.xlu0 %3856
        %v3863 = vsel %vm2000, %v3846, 0
        %v3866 = vsel %vm2000, %v3847, 0
        %v3869 = vsel %vm2000, %v3848, 0
        %v3872 = vsel %vm2000, %v3849, 0
        %3874 = vmatpush.bf16.msra.mxu0 0
        %3875 = vmatpush.bf16.msra.mxu0 0
        %3876 = vmatpush.bf16.msra.mxu0 0
        %3877 = vmatpush.bf16.msra.mxu0 0
        %3878 = vmatpush.bf16.msra.mxu0 %v3857
        %3879 = vmatpush.bf16.msra.mxu0 %v3855
        %3880 = vmatpush.bf16.msra.mxu0 %v3853
        %3881 = vmatpush.bf16.msra.mxu0 %v3851
        %3882 = vmatmul.bf16.gmra.mxu0 %v3863
        %v3883 = vpop.f32.mrf.mxu0
        %v3884 = vadd.f32 0.0, %v3883
        %v3885 = vpop.f32.mrf.mxu0
        %v3886 = vadd.f32 0.0, %v3885
        %3887 = vmatmul.bf16.gmra.mxu0 %v3866
        %v3888 = vpop.f32.mrf.mxu0
        %v3889 = vadd.f32 0.0, %v3888
        %v3890 = vpop.f32.mrf.mxu0
        %v3891 = vadd.f32 0.0, %v3890
        %3892 = vmatmul.bf16.gmra.mxu0 %v3869
        %v3893 = vpop.f32.mrf.mxu0
        %v3894 = vadd.f32 0.0, %v3893
        %v3895 = vpop.f32.mrf.mxu0
        %v3896 = vadd.f32 0.0, %v3895
        %3897 = vmatmul.bf16.gmra.mxu0 %v3872
        %v3898 = vpop.f32.mrf.mxu0
        %v3899 = vadd.f32 0.0, %v3898
        %v3900 = vpop.f32.mrf.mxu0
        %v3901 = vadd.f32 0.0, %v3900
        %3902 = vdwg.mxu0
        %3911 = vrot.lane.b32.xlu0 %v3884, 96
        %v3912 = vpop.permute.xlu0 %3911
        %3913 = vrot.lane.b32.xlu0 %v3886, 96
        %v3914 = vpop.permute.xlu0 %3913
        %3915 = vrot.lane.b32.xlu0 %v3889, 96
        %v3916 = vpop.permute.xlu0 %3915
        %3917 = vrot.lane.b32.xlu0 %v3891, 96
        %v3918 = vpop.permute.xlu0 %3917
        %3919 = vrot.lane.b32.xlu0 %v3894, 96
        %v3920 = vpop.permute.xlu0 %3919
        %3921 = vrot.lane.b32.xlu0 %v3896, 96
        %v3922 = vpop.permute.xlu0 %3921
        %3923 = vrot.lane.b32.xlu0 %v3899, 96
        %v3924 = vpop.permute.xlu0 %3923
        %3925 = vrot.lane.b32.xlu0 %v3901, 96
        %v3926 = vpop.permute.xlu0 %3925
        %3935 = vst.msk [vmem:[#allocation2 + $0x40] sm:$0xff] %vm2922, %v3912
        %3936 = vst.msk [vmem:[#allocation2 + $0x48] sm:$0xff] %vm2922, %v3914
        %3937 = vst.msk [vmem:[#allocation2 + $0x50] sm:$0xff] %vm2922, %v3916
        %3938 = vst.msk [vmem:[#allocation2 + $0x58] sm:$0xff] %vm2922, %v3918
        %3939 = vst.msk [vmem:[#allocation2 + $0x60] sm:$0xff] %vm2922, %v3920
        %3940 = vst.msk [vmem:[#allocation2 + $0x68] sm:$0xff] %vm2922, %v3922
        %3941 = vst.msk [vmem:[#allocation2 + $0x70] sm:$0xff] %vm2922, %v3924
        %3942 = vst.msk [vmem:[#allocation2 + $0x78] sm:$0xff] %vm2922, %v3926
        %v3943 = vld [vmem:[#allocation2] sm:$0xff]
        %v3944 = vld [vmem:[#allocation2 + $0x8] sm:$0xff]
        %v3945 = vld [vmem:[#allocation2 + $0x10] sm:$0xff]
        %v3946 = vld [vmem:[#allocation2 + $0x18] sm:$0xff]
        %v3947 = vld [vmem:[#allocation2 + $0x20] sm:$0xff]
        %v3948 = vld [vmem:[#allocation2 + $0x28] sm:$0xff]
        %v3949 = vld [vmem:[#allocation2 + $0x30] sm:$0xff]
        %v3950 = vld [vmem:[#allocation2 + $0x38] sm:$0xff]
        %v3951 = vld [vmem:[#allocation2 + $0x40] sm:$0xff]
        %v3952 = vld [vmem:[#allocation2 + $0x48] sm:$0xff]
        %v3953 = vld [vmem:[#allocation2 + $0x50] sm:$0xff]
        %v3954 = vld [vmem:[#allocation2 + $0x58] sm:$0xff]
        %v3955 = vld [vmem:[#allocation2 + $0x60] sm:$0xff]
        %v3956 = vld [vmem:[#allocation2 + $0x68] sm:$0xff]
        %v3957 = vld [vmem:[#allocation2 + $0x70] sm:$0xff]
        %v3958 = vld [vmem:[#allocation2 + $0x78] sm:$0xff]
        %v3959 = vpack.c.bf16 %v3944, %v3943
        %v3960 = vpack.c.bf16 %v3946, %v3945
        %v3961 = vpack.c.bf16 %v3948, %v3947
        %v3962 = vpack.c.bf16 %v3950, %v3949
        %v3963 = vpack.c.bf16 %v3952, %v3951
        %v3964 = vpack.c.bf16 %v3954, %v3953
        %v3965 = vpack.c.bf16 %v3956, %v3955
        %v3966 = vpack.c.bf16 %v3958, %v3957
        %v3967 = vld [vmem:[%s939] sm:$0xf]
        %v3968 = vld [vmem:[%s939 + $0x4] sm:$0xf]
        %v3969 = vld [vmem:[%s939 + $0x8] sm:$0xf]
        %v3970 = vld [vmem:[%s939 + $0xc] sm:$0xf]
        %v3971 = vld [vmem:[%s939 + $0x10] sm:$0xf]
        %v3972 = vld [vmem:[%s939 + $0x14] sm:$0xf]
        %v3973 = vld [vmem:[%s939 + $0x18] sm:$0xf]
        %v3974 = vld [vmem:[%s939 + $0x1c] sm:$0xf]
        %v3975 = vld [vmem:[%s939 + $0x20] sm:$0xf]
        %v3976 = vld [vmem:[%s939 + $0x24] sm:$0xf]
        %v3977 = vld [vmem:[%s939 + $0x28] sm:$0xf]
        %v3978 = vld [vmem:[%s939 + $0x2c] sm:$0xf]
        %v3979 = vld [vmem:[%s939 + $0x30] sm:$0xf]
        %v3980 = vld [vmem:[%s939 + $0x34] sm:$0xf]
        %v3981 = vld [vmem:[%s939 + $0x38] sm:$0xf]
        %v3982 = vld [vmem:[%s939 + $0x3c] sm:$0xf]
        %v3999 = vunpack.c.l.b16 %v3967
        %v4000 = vunpack.c.l.b16 %v3968
        %v4001 = vunpack.c.l.b16 %v3969
        %v4002 = vunpack.c.l.b16 %v3970
        %v4003 = vunpack.c.l.b16 %v3971
        %v4004 = vunpack.c.l.b16 %v3972
        %v4005 = vunpack.c.l.b16 %v3973
        %v4006 = vunpack.c.l.b16 %v3974
        %v4007 = vunpack.c.l.b16 %v3975
        %v4008 = vunpack.c.l.b16 %v3976
        %v4009 = vunpack.c.l.b16 %v3977
        %v4010 = vunpack.c.l.b16 %v3978
        %v4011 = vunpack.c.l.b16 %v3979
        %v4012 = vunpack.c.l.b16 %v3980
        %v4013 = vunpack.c.l.b16 %v3981
        %v4014 = vunpack.c.l.b16 %v3982
        %v4015 = vpack.c.b16 %v4000, %v3999
        %v4016 = vpack.c.b16 %v4002, %v4001
        %v4017 = vpack.c.b16 %v4004, %v4003
        %v4018 = vpack.c.b16 %v4006, %v4005
        %v4019 = vpack.c.b16 %v4008, %v4007
        %v4020 = vpack.c.b16 %v4010, %v4009
        %v4021 = vpack.c.b16 %v4012, %v4011
        %v4022 = vpack.c.b16 %v4014, %v4013
        %4031 = vmatpush.bf16.msra.mxu0 %v4022
        %4032 = vmatpush.bf16.msra.mxu0 %v4021
        %4033 = vmatpush.bf16.msra.mxu0 %v4020
        %4034 = vmatpush.bf16.msra.mxu0 %v4019
        %4035 = vmatpush.bf16.msra.mxu0 %v4018
        %4036 = vmatpush.bf16.msra.mxu0 %v4017
        %4037 = vmatpush.bf16.msra.mxu0 %v4016
        %4038 = vmatpush.bf16.msra.mxu0 %v4015
        %4039 = vmatmul.bf16.gmra.mxu0 %v3959
        %v4040 = vpop.f32.mrf.mxu0
        %v4041 = vadd.f32 0.0, %v4040
        %v4042 = vpop.f32.mrf.mxu0
        %v4043 = vadd.f32 0.0, %v4042
        %4044 = vmatmul.bf16.gmra.mxu0 %v3960
        %v4045 = vpop.f32.mrf.mxu0
        %v4046 = vadd.f32 0.0, %v4045
        %v4047 = vpop.f32.mrf.mxu0
        %v4048 = vadd.f32 0.0, %v4047
        %4049 = vmatmul.bf16.gmra.mxu0 %v3961
        %v4050 = vpop.f32.mrf.mxu0
        %v4051 = vadd.f32 0.0, %v4050
        %v4052 = vpop.f32.mrf.mxu0
        %v4053 = vadd.f32 0.0, %v4052
        %4054 = vmatmul.bf16.gmra.mxu0 %v3962
        %v4055 = vpop.f32.mrf.mxu0
        %v4056 = vadd.f32 0.0, %v4055
        %v4057 = vpop.f32.mrf.mxu0
        %v4058 = vadd.f32 0.0, %v4057
        %4059 = vmatmul.bf16.gmra.mxu0 %v3963
        %v4060 = vpop.f32.mrf.mxu0
        %v4061 = vadd.f32 0.0, %v4060
        %v4062 = vpop.f32.mrf.mxu0
        %v4063 = vadd.f32 0.0, %v4062
        %4064 = vmatmul.bf16.gmra.mxu0 %v3964
        %v4065 = vpop.f32.mrf.mxu0
        %v4066 = vadd.f32 0.0, %v4065
        %v4067 = vpop.f32.mrf.mxu0
        %v4068 = vadd.f32 0.0, %v4067
        %4069 = vmatmul.bf16.gmra.mxu0 %v3965
        %v4070 = vpop.f32.mrf.mxu0
        %v4071 = vadd.f32 0.0, %v4070
        %v4072 = vpop.f32.mrf.mxu0
        %v4073 = vadd.f32 0.0, %v4072
        %4074 = vmatmul.bf16.gmra.mxu0 %v3966
        %v4075 = vpop.f32.mrf.mxu0
        %v4076 = vadd.f32 0.0, %v4075
        %v4077 = vpop.f32.mrf.mxu0
        %v4078 = vadd.f32 0.0, %v4077
        %4079 = vdwg.mxu0
        %v4080 = vadd.f32 %v1148, %v4041
        %v4081 = vadd.f32 %v1149, %v4043
        %v4082 = vadd.f32 %v1150, %v4046
        %v4083 = vadd.f32 %v1151, %v4048
        %v4084 = vadd.f32 %v1152, %v4051
        %v4085 = vadd.f32 %v1153, %v4053
        %v4086 = vadd.f32 %v1154, %v4056
        %v4087 = vadd.f32 %v1155, %v4058
        %v4088 = vadd.f32 %v1156, %v4061
        %v4089 = vadd.f32 %v1157, %v4063
        %v4090 = vadd.f32 %v1158, %v4066
        %v4091 = vadd.f32 %v1159, %v4068
        %v4092 = vadd.f32 %v1160, %v4071
        %v4093 = vadd.f32 %v1161, %v4073
        %v4094 = vadd.f32 %v1162, %v4076
        %v4095 = vadd.f32 %v1163, %v4078
        %v4096 = vld [vmem:[%s1098] sm:$0x1]
        %v4098 = vperm.slane %v4096, 0
        %v4100 = vadd.f32 %v4080, %v4098
        %v4101 = vadd.f32 %v4081, %v4098
        %v4102 = vadd.f32 %v4082, %v4098
        %v4103 = vadd.f32 %v4083, %v4098
        %v4104 = vadd.f32 %v4084, %v4098
        %v4105 = vadd.f32 %v4085, %v4098
        %v4106 = vadd.f32 %v4086, %v4098
        %v4107 = vadd.f32 %v4087, %v4098
        %v4108 = vadd.f32 %v4088, %v4098
        %v4109 = vadd.f32 %v4089, %v4098
        %v4110 = vadd.f32 %v4090, %v4098
        %v4111 = vadd.f32 %v4091, %v4098
        %v4112 = vadd.f32 %v4092, %v4098
        %v4113 = vadd.f32 %v4093, %v4098
        %v4114 = vadd.f32 %v4094, %v4098
        %v4115 = vadd.f32 %v4095, %v4098
        %v4116 = vld [vmem:[%s948] sm:$0x1]
        %v4117 = vld [vmem:[%s957] sm:$0x1]
        %4118 = vadd.xlane.f32.xlu0 %v4100
        %v4119 = vpop.xlane.xlu0 %4118
        %4120 = vadd.xlane.f32.xlu0 %v4101
        %v4121 = vpop.xlane.xlu0 %4120
        %4122 = vadd.xlane.f32.xlu0 %v4102
        %v4123 = vpop.xlane.xlu0 %4122
        %4124 = vadd.xlane.f32.xlu0 %v4103
        %v4125 = vpop.xlane.xlu0 %4124
        %4126 = vadd.xlane.f32.xlu0 %v4104
        %v4127 = vpop.xlane.xlu0 %4126
        %4128 = vadd.xlane.f32.xlu0 %v4105
        %v4129 = vpop.xlane.xlu0 %4128
        %4130 = vadd.xlane.f32.xlu0 %v4106
        %v4131 = vpop.xlane.xlu0 %4130
        %4132 = vadd.xlane.f32.xlu0 %v4107
        %v4133 = vpop.xlane.xlu0 %4132
        %4134 = vadd.xlane.f32.xlu0 %v4108
        %v4135 = vpop.xlane.xlu0 %4134
        %4136 = vadd.xlane.f32.xlu0 %v4109
        %v4137 = vpop.xlane.xlu0 %4136
        %4138 = vadd.xlane.f32.xlu0 %v4110
        %v4139 = vpop.xlane.xlu0 %4138
        %4140 = vadd.xlane.f32.xlu0 %v4111
        %v4141 = vpop.xlane.xlu0 %4140
        %4142 = vadd.xlane.f32.xlu0 %v4112
        %v4143 = vpop.xlane.xlu0 %4142
        %4144 = vadd.xlane.f32.xlu0 %v4113
        %v4145 = vpop.xlane.xlu0 %4144
        %4146 = vadd.xlane.f32.xlu0 %v4114
        %v4147 = vpop.xlane.xlu0 %4146
        %4148 = vadd.xlane.f32.xlu0 %v4115
        %v4149 = vpop.xlane.xlu0 %4148
        %v4150 = vmul.f32 %v4119, %v1204
        %v4151 = vmul.f32 %v4121, %v1204
        %v4152 = vmul.f32 %v4123, %v1204
        %v4153 = vmul.f32 %v4125, %v1204
        %v4154 = vmul.f32 %v4127, %v1204
        %v4155 = vmul.f32 %v4129, %v1204
        %v4156 = vmul.f32 %v4131, %v1204
        %v4157 = vmul.f32 %v4133, %v1204
        %v4158 = vmul.f32 %v4135, %v1204
        %v4159 = vmul.f32 %v4137, %v1204
        %v4160 = vmul.f32 %v4139, %v1204
        %v4161 = vmul.f32 %v4141, %v1204
        %v4162 = vmul.f32 %v4143, %v1204
        %v4163 = vmul.f32 %v4145, %v1204
        %v4164 = vmul.f32 %v4147, %v1204
        %v4165 = vmul.f32 %v4149, %v1204
        %v4166 = vsub.f32 %v4100, %v4150
        %v4167 = vsub.f32 %v4101, %v4151
        %v4168 = vsub.f32 %v4102, %v4152
        %v4169 = vsub.f32 %v4103, %v4153
        %v4170 = vsub.f32 %v4104, %v4154
        %v4171 = vsub.f32 %v4105, %v4155
        %v4172 = vsub.f32 %v4106, %v4156
        %v4173 = vsub.f32 %v4107, %v4157
        %v4174 = vsub.f32 %v4108, %v4158
        %v4175 = vsub.f32 %v4109, %v4159
        %v4176 = vsub.f32 %v4110, %v4160
        %v4177 = vsub.f32 %v4111, %v4161
        %v4178 = vsub.f32 %v4112, %v4162
        %v4179 = vsub.f32 %v4113, %v4163
        %v4180 = vsub.f32 %v4114, %v4164
        %v4181 = vsub.f32 %v4115, %v4165
        %v4182 = vmul.f32 %v4166, %v4166
        %v4183 = vmul.f32 %v4167, %v4167
        %v4184 = vmul.f32 %v4168, %v4168
        %v4185 = vmul.f32 %v4169, %v4169
        %v4186 = vmul.f32 %v4170, %v4170
        %v4187 = vmul.f32 %v4171, %v4171
        %v4188 = vmul.f32 %v4172, %v4172
        %v4189 = vmul.f32 %v4173, %v4173
        %v4190 = vmul.f32 %v4174, %v4174
        %v4191 = vmul.f32 %v4175, %v4175
        %v4192 = vmul.f32 %v4176, %v4176
        %v4193 = vmul.f32 %v4177, %v4177
        %v4194 = vmul.f32 %v4178, %v4178
        %v4195 = vmul.f32 %v4179, %v4179
        %v4196 = vmul.f32 %v4180, %v4180
        %v4197 = vmul.f32 %v4181, %v4181
        %4198 = vadd.xlane.f32.xlu0 %v4182
        %v4199 = vpop.xlane.xlu0 %4198
        %4200 = vadd.xlane.f32.xlu0 %v4183
        %v4201 = vpop.xlane.xlu0 %4200
        %4202 = vadd.xlane.f32.xlu0 %v4184
        %v4203 = vpop.xlane.xlu0 %4202
        %4204 = vadd.xlane.f32.xlu0 %v4185
        %v4205 = vpop.xlane.xlu0 %4204
        %4206 = vadd.xlane.f32.xlu0 %v4186
        %v4207 = vpop.xlane.xlu0 %4206
        %4208 = vadd.xlane.f32.xlu0 %v4187
        %v4209 = vpop.xlane.xlu0 %4208
        %4210 = vadd.xlane.f32.xlu0 %v4188
        %v4211 = vpop.xlane.xlu0 %4210
        %4212 = vadd.xlane.f32.xlu0 %v4189
        %v4213 = vpop.xlane.xlu0 %4212
        %4214 = vadd.xlane.f32.xlu0 %v4190
        %v4215 = vpop.xlane.xlu0 %4214
        %4216 = vadd.xlane.f32.xlu0 %v4191
        %v4217 = vpop.xlane.xlu0 %4216
        %4218 = vadd.xlane.f32.xlu0 %v4192
        %v4219 = vpop.xlane.xlu0 %4218
        %4220 = vadd.xlane.f32.xlu0 %v4193
        %v4221 = vpop.xlane.xlu0 %4220
        %4222 = vadd.xlane.f32.xlu0 %v4194
        %v4223 = vpop.xlane.xlu0 %4222
        %4224 = vadd.xlane.f32.xlu0 %v4195
        %v4225 = vpop.xlane.xlu0 %4224
        %4226 = vadd.xlane.f32.xlu0 %v4196
        %v4227 = vpop.xlane.xlu0 %4226
        %4228 = vadd.xlane.f32.xlu0 %v4197
        %v4229 = vpop.xlane.xlu0 %4228
        %v4230 = vmul.f32 %v4199, %v1204
        %v4231 = vmul.f32 %v4201, %v1204
        %v4232 = vmul.f32 %v4203, %v1204
        %v4233 = vmul.f32 %v4205, %v1204
        %v4234 = vmul.f32 %v4207, %v1204
        %v4235 = vmul.f32 %v4209, %v1204
        %v4236 = vmul.f32 %v4211, %v1204
        %v4237 = vmul.f32 %v4213, %v1204
        %v4238 = vmul.f32 %v4215, %v1204
        %v4239 = vmul.f32 %v4217, %v1204
        %v4240 = vmul.f32 %v4219, %v1204
        %v4241 = vmul.f32 %v4221, %v1204
        %v4242 = vmul.f32 %v4223, %v1204
        %v4243 = vmul.f32 %v4225, %v1204
        %v4244 = vmul.f32 %v4227, %v1204
        %v4245 = vmul.f32 %v4229, %v1204
        %v4246 = vadd.f32 %v4230, 1e-06
        %v4247 = vadd.f32 %v4231, 1e-06
        %v4248 = vadd.f32 %v4232, 1e-06
        %v4249 = vadd.f32 %v4233, 1e-06
        %v4250 = vadd.f32 %v4234, 1e-06
        %v4251 = vadd.f32 %v4235, 1e-06
        %v4252 = vadd.f32 %v4236, 1e-06
        %v4253 = vadd.f32 %v4237, 1e-06
        %v4254 = vadd.f32 %v4238, 1e-06
        %v4255 = vadd.f32 %v4239, 1e-06
        %v4256 = vadd.f32 %v4240, 1e-06
        %v4257 = vadd.f32 %v4241, 1e-06
        %v4258 = vadd.f32 %v4242, 1e-06
        %v4259 = vadd.f32 %v4243, 1e-06
        %v4260 = vadd.f32 %v4244, 1e-06
        %v4261 = vadd.f32 %v4245, 1e-06
        %v4262 = vrsqrt.pop %v4246
        %v4263 = vmul.f32 %v4262, %v4246
        %v4264 = vmul.f32 %v4263, %v4262
        %v4265 = vmul.f32 0.5, %v4264
        %v4266 = vsub.f32 1.5, %v4265
        %v4267 = vmul.f32 %v4262, %v4266
        %vm4268 = vweird.f32 %v4246
        %vm4269 = vweird.f32 %v4262
        %vm4270 = vmor %vm4268, %vm4269
        %v4271 = vsel %vm4270, %v4262, %v4267
        %v4272 = vrsqrt.pop %v4247
        %v4273 = vmul.f32 %v4272, %v4247
        %v4274 = vmul.f32 %v4273, %v4272
        %v4275 = vmul.f32 0.5, %v4274
        %v4276 = vsub.f32 1.5, %v4275
        %v4277 = vmul.f32 %v4272, %v4276
        %vm4278 = vweird.f32 %v4247
        %vm4279 = vweird.f32 %v4272
        %vm4280 = vmor %vm4278, %vm4279
        %v4281 = vsel %vm4280, %v4272, %v4277
        %v4282 = vrsqrt.pop %v4248
        %v4283 = vmul.f32 %v4282, %v4248
        %v4284 = vmul.f32 %v4283, %v4282
        %v4285 = vmul.f32 0.5, %v4284
        %v4286 = vsub.f32 1.5, %v4285
        %v4287 = vmul.f32 %v4282, %v4286
        %vm4288 = vweird.f32 %v4248
        %vm4289 = vweird.f32 %v4282
        %vm4290 = vmor %vm4288, %vm4289
        %v4291 = vsel %vm4290, %v4282, %v4287
        %v4292 = vrsqrt.pop %v4249
        %v4293 = vmul.f32 %v4292, %v4249
        %v4294 = vmul.f32 %v4293, %v4292
        %v4295 = vmul.f32 0.5, %v4294
        %v4296 = vsub.f32 1.5, %v4295
        %v4297 = vmul.f32 %v4292, %v4296
        %vm4298 = vweird.f32 %v4249
        %vm4299 = vweird.f32 %v4292
        %vm4300 = vmor %vm4298, %vm4299
        %v4301 = vsel %vm4300, %v4292, %v4297
        %v4302 = vrsqrt.pop %v4250
        %v4303 = vmul.f32 %v4302, %v4250
        %v4304 = vmul.f32 %v4303, %v4302
        %v4305 = vmul.f32 0.5, %v4304
        %v4306 = vsub.f32 1.5, %v4305
        %v4307 = vmul.f32 %v4302, %v4306
        %vm4308 = vweird.f32 %v4250
        %vm4309 = vweird.f32 %v4302
        %vm4310 = vmor %vm4308, %vm4309
        %v4311 = vsel %vm4310, %v4302, %v4307
        %v4312 = vrsqrt.pop %v4251
        %v4313 = vmul.f32 %v4312, %v4251
        %v4314 = vmul.f32 %v4313, %v4312
        %v4315 = vmul.f32 0.5, %v4314
        %v4316 = vsub.f32 1.5, %v4315
        %v4317 = vmul.f32 %v4312, %v4316
        %vm4318 = vweird.f32 %v4251
        %vm4319 = vweird.f32 %v4312
        %vm4320 = vmor %vm4318, %vm4319
        %v4321 = vsel %vm4320, %v4312, %v4317
        %v4322 = vrsqrt.pop %v4252
        %v4323 = vmul.f32 %v4322, %v4252
        %v4324 = vmul.f32 %v4323, %v4322
        %v4325 = vmul.f32 0.5, %v4324
        %v4326 = vsub.f32 1.5, %v4325
        %v4327 = vmul.f32 %v4322, %v4326
        %vm4328 = vweird.f32 %v4252
        %vm4329 = vweird.f32 %v4322
        %vm4330 = vmor %vm4328, %vm4329
        %v4331 = vsel %vm4330, %v4322, %v4327
        %v4332 = vrsqrt.pop %v4253
        %v4333 = vmul.f32 %v4332, %v4253
        %v4334 = vmul.f32 %v4333, %v4332
        %v4335 = vmul.f32 0.5, %v4334
        %v4336 = vsub.f32 1.5, %v4335
        %v4337 = vmul.f32 %v4332, %v4336
        %vm4338 = vweird.f32 %v4253
        %vm4339 = vweird.f32 %v4332
        %vm4340 = vmor %vm4338, %vm4339
        %v4341 = vsel %vm4340, %v4332, %v4337
        %v4342 = vrsqrt.pop %v4254
        %v4343 = vmul.f32 %v4342, %v4254
        %v4344 = vmul.f32 %v4343, %v4342
        %v4345 = vmul.f32 0.5, %v4344
        %v4346 = vsub.f32 1.5, %v4345
        %v4347 = vmul.f32 %v4342, %v4346
        %vm4348 = vweird.f32 %v4254
        %vm4349 = vweird.f32 %v4342
        %vm4350 = vmor %vm4348, %vm4349
        %v4351 = vsel %vm4350, %v4342, %v4347
        %v4352 = vrsqrt.pop %v4255
        %v4353 = vmul.f32 %v4352, %v4255
        %v4354 = vmul.f32 %v4353, %v4352
        %v4355 = vmul.f32 0.5, %v4354
        %v4356 = vsub.f32 1.5, %v4355
        %v4357 = vmul.f32 %v4352, %v4356
        %vm4358 = vweird.f32 %v4255
        %vm4359 = vweird.f32 %v4352
        %vm4360 = vmor %vm4358, %vm4359
        %v4361 = vsel %vm4360, %v4352, %v4357
        %v4362 = vrsqrt.pop %v4256
        %v4363 = vmul.f32 %v4362, %v4256
        %v4364 = vmul.f32 %v4363, %v4362
        %v4365 = vmul.f32 0.5, %v4364
        %v4366 = vsub.f32 1.5, %v4365
        %v4367 = vmul.f32 %v4362, %v4366
        %vm4368 = vweird.f32 %v4256
        %vm4369 = vweird.f32 %v4362
        %vm4370 = vmor %vm4368, %vm4369
        %v4371 = vsel %vm4370, %v4362, %v4367
        %v4372 = vrsqrt.pop %v4257
        %v4373 = vmul.f32 %v4372, %v4257
        %v4374 = vmul.f32 %v4373, %v4372
        %v4375 = vmul.f32 0.5, %v4374
        %v4376 = vsub.f32 1.5, %v4375
        %v4377 = vmul.f32 %v4372, %v4376
        %vm4378 = vweird.f32 %v4257
        %vm4379 = vweird.f32 %v4372
        %vm4380 = vmor %vm4378, %vm4379
        %v4381 = vsel %vm4380, %v4372, %v4377
        %v4382 = vrsqrt.pop %v4258
        %v4383 = vmul.f32 %v4382, %v4258
        %v4384 = vmul.f32 %v4383, %v4382
        %v4385 = vmul.f32 0.5, %v4384
        %v4386 = vsub.f32 1.5, %v4385
        %v4387 = vmul.f32 %v4382, %v4386
        %vm4388 = vweird.f32 %v4258
        %vm4389 = vweird.f32 %v4382
        %vm4390 = vmor %vm4388, %vm4389
        %v4391 = vsel %vm4390, %v4382, %v4387
        %v4392 = vrsqrt.pop %v4259
        %v4393 = vmul.f32 %v4392, %v4259
        %v4394 = vmul.f32 %v4393, %v4392
        %v4395 = vmul.f32 0.5, %v4394
        %v4396 = vsub.f32 1.5, %v4395
        %v4397 = vmul.f32 %v4392, %v4396
        %vm4398 = vweird.f32 %v4259
        %vm4399 = vweird.f32 %v4392
        %vm4400 = vmor %vm4398, %vm4399
        %v4401 = vsel %vm4400, %v4392, %v4397
        %v4402 = vrsqrt.pop %v4260
        %v4403 = vmul.f32 %v4402, %v4260
        %v4404 = vmul.f32 %v4403, %v4402
        %v4405 = vmul.f32 0.5, %v4404
        %v4406 = vsub.f32 1.5, %v4405
        %v4407 = vmul.f32 %v4402, %v4406
        %vm4408 = vweird.f32 %v4260
        %vm4409 = vweird.f32 %v4402
        %vm4410 = vmor %vm4408, %vm4409
        %v4411 = vsel %vm4410, %v4402, %v4407
        %v4412 = vrsqrt.pop %v4261
        %v4413 = vmul.f32 %v4412, %v4261
        %v4414 = vmul.f32 %v4413, %v4412
        %v4415 = vmul.f32 0.5, %v4414
        %v4416 = vsub.f32 1.5, %v4415
        %v4417 = vmul.f32 %v4412, %v4416
        %vm4418 = vweird.f32 %v4261
        %vm4419 = vweird.f32 %v4412
        %vm4420 = vmor %vm4418, %vm4419
        %v4421 = vsel %vm4420, %v4412, %v4417
        %v4422 = vmul.f32 %v4166, %v4271
        %v4423 = vmul.f32 %v4167, %v4281
        %v4424 = vmul.f32 %v4168, %v4291
        %v4425 = vmul.f32 %v4169, %v4301
        %v4426 = vmul.f32 %v4170, %v4311
        %v4427 = vmul.f32 %v4171, %v4321
        %v4428 = vmul.f32 %v4172, %v4331
        %v4429 = vmul.f32 %v4173, %v4341
        %v4430 = vmul.f32 %v4174, %v4351
        %v4431 = vmul.f32 %v4175, %v4361
        %v4432 = vmul.f32 %v4176, %v4371
        %v4433 = vmul.f32 %v4177, %v4381
        %v4434 = vmul.f32 %v4178, %v4391
        %v4435 = vmul.f32 %v4179, %v4401
        %v4436 = vmul.f32 %v4180, %v4411
        %v4437 = vmul.f32 %v4181, %v4421
        %v4439 = vperm.slane %v4116, 0
        %v4441 = vmul.f32 %v4422, %v4439
        %v4442 = vmul.f32 %v4423, %v4439
        %v4443 = vmul.f32 %v4424, %v4439
        %v4444 = vmul.f32 %v4425, %v4439
        %v4445 = vmul.f32 %v4426, %v4439
        %v4446 = vmul.f32 %v4427, %v4439
        %v4447 = vmul.f32 %v4428, %v4439
        %v4448 = vmul.f32 %v4429, %v4439
        %v4449 = vmul.f32 %v4430, %v4439
        %v4450 = vmul.f32 %v4431, %v4439
        %v4451 = vmul.f32 %v4432, %v4439
        %v4452 = vmul.f32 %v4433, %v4439
        %v4453 = vmul.f32 %v4434, %v4439
        %v4454 = vmul.f32 %v4435, %v4439
        %v4455 = vmul.f32 %v4436, %v4439
        %v4456 = vmul.f32 %v4437, %v4439
        %v4458 = vperm.slane %v4117, 0
        %v4460 = vadd.f32 %v4441, %v4458
        %v4461 = vadd.f32 %v4442, %v4458
        %v4462 = vadd.f32 %v4443, %v4458
        %v4463 = vadd.f32 %v4444, %v4458
        %v4464 = vadd.f32 %v4445, %v4458
        %v4465 = vadd.f32 %v4446, %v4458
        %v4466 = vadd.f32 %v4447, %v4458
        %v4467 = vadd.f32 %v4448, %v4458
        %v4468 = vadd.f32 %v4449, %v4458
        %v4469 = vadd.f32 %v4450, %v4458
        %v4470 = vadd.f32 %v4451, %v4458
        %v4471 = vadd.f32 %v4452, %v4458
        %v4472 = vadd.f32 %v4453, %v4458
        %v4473 = vadd.f32 %v4454, %v4458
        %v4474 = vadd.f32 %v4455, %v4458
        %v4475 = vadd.f32 %v4456, %v4458
        %v4476 = vpack.c.bf16 %v4461, %v4460
        %v4477 = vpack.c.bf16 %v4463, %v4462
        %v4478 = vpack.c.bf16 %v4465, %v4464
        %v4479 = vpack.c.bf16 %v4467, %v4466
        %v4480 = vpack.c.bf16 %v4469, %v4468
        %v4481 = vpack.c.bf16 %v4471, %v4470
        %v4482 = vpack.c.bf16 %v4473, %v4472
        %v4483 = vpack.c.bf16 %v4475, %v4474
        %v4484 = vld [vmem:[%s1103] sm:$0xff]
        %v4485 = vld [vmem:[%s1103 + $0x8] sm:$0xff]
        %v4486 = vld [vmem:[%s1103 + $0x10] sm:$0xff]
        %v4487 = vld [vmem:[%s1103 + $0x18] sm:$0xff]
        %v4488 = vld [vmem:[%s1103 + $0x20] sm:$0xff]
        %v4489 = vld [vmem:[%s1103 + $0x28] sm:$0xff]
        %v4490 = vld [vmem:[%s1103 + $0x30] sm:$0xff]
        %v4491 = vld [vmem:[%s1103 + $0x38] sm:$0xff]
        %v4492 = vld [vmem:[%s1103 + $0x40] sm:$0xff]
        %v4493 = vld [vmem:[%s1103 + $0x48] sm:$0xff]
        %v4494 = vld [vmem:[%s1103 + $0x50] sm:$0xff]
        %v4495 = vld [vmem:[%s1103 + $0x58] sm:$0xff]
        %v4496 = vld [vmem:[%s1103 + $0x60] sm:$0xff]
        %v4497 = vld [vmem:[%s1103 + $0x68] sm:$0xff]
        %v4498 = vld [vmem:[%s1103 + $0x70] sm:$0xff]
        %v4499 = vld [vmem:[%s1103 + $0x78] sm:$0xff]
        %v4500 = vld [vmem:[%s1107] sm:$0x3]
        %v4502 = vperm.slane %v4500, 0
        %v4503 = vperm.slane %v4500, 1
        %v4522 = vunpack.c.l.b16 %v4484
        %v4523 = vunpack.c.h.b16 %v4484
        %v4524 = vunpack.c.l.b16 %v4485
        %v4525 = vunpack.c.h.b16 %v4485
        %v4526 = vunpack.c.l.b16 %v4486
        %v4527 = vunpack.c.h.b16 %v4486
        %v4528 = vunpack.c.l.b16 %v4487
        %v4529 = vunpack.c.h.b16 %v4487
        %v4530 = vunpack.c.l.b16 %v4488
        %v4531 = vunpack.c.h.b16 %v4488
        %v4532 = vunpack.c.l.b16 %v4489
        %v4533 = vunpack.c.h.b16 %v4489
        %v4534 = vunpack.c.l.b16 %v4490
        %v4535 = vunpack.c.h.b16 %v4490
        %v4536 = vunpack.c.l.b16 %v4491
        %v4537 = vunpack.c.h.b16 %v4491
        %v4538 = vunpack.c.l.b16 %v4492
        %v4539 = vunpack.c.h.b16 %v4492
        %v4540 = vunpack.c.l.b16 %v4493
        %v4541 = vunpack.c.h.b16 %v4493
        %v4542 = vunpack.c.l.b16 %v4494
        %v4543 = vunpack.c.h.b16 %v4494
        %v4544 = vunpack.c.l.b16 %v4495
        %v4545 = vunpack.c.h.b16 %v4495
        %v4546 = vunpack.c.l.b16 %v4496
        %v4547 = vunpack.c.h.b16 %v4496
        %v4548 = vunpack.c.l.b16 %v4497
        %v4549 = vunpack.c.h.b16 %v4497
        %v4550 = vunpack.c.l.b16 %v4498
        %v4551 = vunpack.c.h.b16 %v4498
        %v4552 = vunpack.c.l.b16 %v4499
        %v4553 = vunpack.c.h.b16 %v4499
        %v4554 = vpack.c.b16 %v4524, %v4522
        %v4555 = vpack.c.b16 %v4525, %v4523
        %v4556 = vpack.c.b16 %v4528, %v4526
        %v4557 = vpack.c.b16 %v4529, %v4527
        %v4558 = vpack.c.b16 %v4532, %v4530
        %v4559 = vpack.c.b16 %v4533, %v4531
        %v4560 = vpack.c.b16 %v4536, %v4534
        %v4561 = vpack.c.b16 %v4537, %v4535
        %v4562 = vpack.c.b16 %v4540, %v4538
        %v4563 = vpack.c.b16 %v4541, %v4539
        %v4564 = vpack.c.b16 %v4544, %v4542
        %v4565 = vpack.c.b16 %v4545, %v4543
        %v4566 = vpack.c.b16 %v4548, %v4546
        %v4567 = vpack.c.b16 %v4549, %v4547
        %v4568 = vpack.c.b16 %v4552, %v4550
        %v4569 = vpack.c.b16 %v4553, %v4551
        %4586 = vmatpush.bf16.msra.mxu0 %v4568
        %4587 = vmatpush.bf16.msra.mxu0 %v4566
        %4588 = vmatpush.bf16.msra.mxu0 %v4564
        %4589 = vmatpush.bf16.msra.mxu0 %v4562
        %4590 = vmatpush.bf16.msra.mxu0 %v4560
        %4591 = vmatpush.bf16.msra.mxu0 %v4558
        %4592 = vmatpush.bf16.msra.mxu0 %v4556
        %4593 = vmatpush.bf16.msra.mxu0 %v4554
        %4594 = vmatmul.bf16.gmra.mxu0 %v4476
        %v4595 = vpop.f32.mrf.mxu0
        %v4596 = vadd.f32 %v4502, %v4595
        %v4597 = vpop.f32.mrf.mxu0
        %v4598 = vadd.f32 %v4502, %v4597
        %4599 = vmatmul.bf16.gmra.mxu0 %v4477
        %v4600 = vpop.f32.mrf.mxu0
        %v4601 = vadd.f32 %v4502, %v4600
        %v4602 = vpop.f32.mrf.mxu0
        %v4603 = vadd.f32 %v4502, %v4602
        %4604 = vmatmul.bf16.gmra.mxu0 %v4478
        %v4605 = vpop.f32.mrf.mxu0
        %v4606 = vadd.f32 %v4502, %v4605
        %v4607 = vpop.f32.mrf.mxu0
        %v4608 = vadd.f32 %v4502, %v4607
        %4609 = vmatmul.bf16.gmra.mxu0 %v4479
        %v4610 = vpop.f32.mrf.mxu0
        %v4611 = vadd.f32 %v4502, %v4610
        %v4612 = vpop.f32.mrf.mxu0
        %v4613 = vadd.f32 %v4502, %v4612
        %4614 = vmatmul.bf16.gmra.mxu0 %v4480
        %v4615 = vpop.f32.mrf.mxu0
        %v4616 = vadd.f32 %v4502, %v4615
        %v4617 = vpop.f32.mrf.mxu0
        %v4618 = vadd.f32 %v4502, %v4617
        %4619 = vmatmul.bf16.gmra.mxu0 %v4481
        %v4620 = vpop.f32.mrf.mxu0
        %v4621 = vadd.f32 %v4502, %v4620
        %v4622 = vpop.f32.mrf.mxu0
        %v4623 = vadd.f32 %v4502, %v4622
        %4624 = vmatmul.bf16.gmra.mxu0 %v4482
        %v4625 = vpop.f32.mrf.mxu0
        %v4626 = vadd.f32 %v4502, %v4625
        %v4627 = vpop.f32.mrf.mxu0
        %v4628 = vadd.f32 %v4502, %v4627
        %4629 = vmatmul.bf16.gmra.mxu0 %v4483
        %v4630 = vpop.f32.mrf.mxu0
        %v4631 = vadd.f32 %v4502, %v4630
        %v4632 = vpop.f32.mrf.mxu0
        %v4633 = vadd.f32 %v4502, %v4632
        %4634 = vdwg.mxu0
        %4635 = vmatpush.bf16.msra.mxu0 %v4569
        %4636 = vmatpush.bf16.msra.mxu0 %v4567
        %4637 = vmatpush.bf16.msra.mxu0 %v4565
        %4638 = vmatpush.bf16.msra.mxu0 %v4563
        %4639 = vmatpush.bf16.msra.mxu0 %v4561
        %4640 = vmatpush.bf16.msra.mxu0 %v4559
        %4641 = vmatpush.bf16.msra.mxu0 %v4557
        %4642 = vmatpush.bf16.msra.mxu0 %v4555
        %4643 = vmatmul.bf16.gmra.mxu0 %v4476
        %v4644 = vpop.f32.mrf.mxu0
        %v4645 = vadd.f32 %v4503, %v4644
        %v4646 = vpop.f32.mrf.mxu0
        %v4647 = vadd.f32 %v4503, %v4646
        %4648 = vmatmul.bf16.gmra.mxu0 %v4477
        %v4649 = vpop.f32.mrf.mxu0
        %v4650 = vadd.f32 %v4503, %v4649
        %v4651 = vpop.f32.mrf.mxu0
        %v4652 = vadd.f32 %v4503, %v4651
        %4653 = vmatmul.bf16.gmra.mxu0 %v4478
        %v4654 = vpop.f32.mrf.mxu0
        %v4655 = vadd.f32 %v4503, %v4654
        %v4656 = vpop.f32.mrf.mxu0
        %v4657 = vadd.f32 %v4503, %v4656
        %4658 = vmatmul.bf16.gmra.mxu0 %v4479
        %v4659 = vpop.f32.mrf.mxu0
        %v4660 = vadd.f32 %v4503, %v4659
        %v4661 = vpop.f32.mrf.mxu0
        %v4662 = vadd.f32 %v4503, %v4661
        %4663 = vmatmul.bf16.gmra.mxu0 %v4480
        %v4664 = vpop.f32.mrf.mxu0
        %v4665 = vadd.f32 %v4503, %v4664
        %v4666 = vpop.f32.mrf.mxu0
        %v4667 = vadd.f32 %v4503, %v4666
        %4668 = vmatmul.bf16.gmra.mxu0 %v4481
        %v4669 = vpop.f32.mrf.mxu0
        %v4670 = vadd.f32 %v4503, %v4669
        %v4671 = vpop.f32.mrf.mxu0
        %v4672 = vadd.f32 %v4503, %v4671
        %4673 = vmatmul.bf16.gmra.mxu0 %v4482
        %v4674 = vpop.f32.mrf.mxu0
        %v4675 = vadd.f32 %v4503, %v4674
        %v4676 = vpop.f32.mrf.mxu0
        %v4677 = vadd.f32 %v4503, %v4676
        %4678 = vmatmul.bf16.gmra.mxu0 %v4483
        %v4679 = vpop.f32.mrf.mxu0
        %v4680 = vadd.f32 %v4503, %v4679
        %v4681 = vpop.f32.mrf.mxu0
        %v4682 = vadd.f32 %v4503, %v4681
        %4683 = vdwg.mxu0
        %v4684 = vmul.f32 %v4596, 0.5
        %v4685 = vmul.f32 %v4645, 0.5
        %v4686 = vmul.f32 %v4598, 0.5
        %v4687 = vmul.f32 %v4647, 0.5
        %v4688 = vmul.f32 %v4601, 0.5
        %v4689 = vmul.f32 %v4650, 0.5
        %v4690 = vmul.f32 %v4603, 0.5
        %v4691 = vmul.f32 %v4652, 0.5
        %v4692 = vmul.f32 %v4606, 0.5
        %v4693 = vmul.f32 %v4655, 0.5
        %v4694 = vmul.f32 %v4608, 0.5
        %v4695 = vmul.f32 %v4657, 0.5
        %v4696 = vmul.f32 %v4611, 0.5
        %v4697 = vmul.f32 %v4660, 0.5
        %v4698 = vmul.f32 %v4613, 0.5
        %v4699 = vmul.f32 %v4662, 0.5
        %v4700 = vmul.f32 %v4616, 0.5
        %v4701 = vmul.f32 %v4665, 0.5
        %v4702 = vmul.f32 %v4618, 0.5
        %v4703 = vmul.f32 %v4667, 0.5
        %v4704 = vmul.f32 %v4621, 0.5
        %v4705 = vmul.f32 %v4670, 0.5
        %v4706 = vmul.f32 %v4623, 0.5
        %v4707 = vmul.f32 %v4672, 0.5
        %v4708 = vmul.f32 %v4626, 0.5
        %v4709 = vmul.f32 %v4675, 0.5
        %v4710 = vmul.f32 %v4628, 0.5
        %v4711 = vmul.f32 %v4677, 0.5
        %v4712 = vmul.f32 %v4631, 0.5
        %v4713 = vmul.f32 %v4680, 0.5
        %v4714 = vmul.f32 %v4633, 0.5
        %v4715 = vmul.f32 %v4682, 0.5
        %v4716 = vmul.f32 %v4596, %v4596
        %v4717 = vmul.f32 %v4645, %v4645
        %v4718 = vmul.f32 %v4598, %v4598
        %v4719 = vmul.f32 %v4647, %v4647
        %v4720 = vmul.f32 %v4601, %v4601
        %v4721 = vmul.f32 %v4650, %v4650
        %v4722 = vmul.f32 %v4603, %v4603
        %v4723 = vmul.f32 %v4652, %v4652
        %v4724 = vmul.f32 %v4606, %v4606
        %v4725 = vmul.f32 %v4655, %v4655
        %v4726 = vmul.f32 %v4608, %v4608
        %v4727 = vmul.f32 %v4657, %v4657
        %v4728 = vmul.f32 %v4611, %v4611
        %v4729 = vmul.f32 %v4660, %v4660
        %v4730 = vmul.f32 %v4613, %v4613
        %v4731 = vmul.f32 %v4662, %v4662
        %v4732 = vmul.f32 %v4616, %v4616
        %v4733 = vmul.f32 %v4665, %v4665
        %v4734 = vmul.f32 %v4618, %v4618
        %v4735 = vmul.f32 %v4667, %v4667
        %v4736 = vmul.f32 %v4621, %v4621
        %v4737 = vmul.f32 %v4670, %v4670
        %v4738 = vmul.f32 %v4623, %v4623
        %v4739 = vmul.f32 %v4672, %v4672
        %v4740 = vmul.f32 %v4626, %v4626
        %v4741 = vmul.f32 %v4675, %v4675
        %v4742 = vmul.f32 %v4628, %v4628
        %v4743 = vmul.f32 %v4677, %v4677
        %v4744 = vmul.f32 %v4631, %v4631
        %v4745 = vmul.f32 %v4680, %v4680
        %v4746 = vmul.f32 %v4633, %v4633
        %v4747 = vmul.f32 %v4682, %v4682
        %v4748 = vmul.f32 %v4716, %v4596
        %v4749 = vmul.f32 %v4717, %v4645
        %v4750 = vmul.f32 %v4718, %v4598
        %v4751 = vmul.f32 %v4719, %v4647
        %v4752 = vmul.f32 %v4720, %v4601
        %v4753 = vmul.f32 %v4721, %v4650
        %v4754 = vmul.f32 %v4722, %v4603
        %v4755 = vmul.f32 %v4723, %v4652
        %v4756 = vmul.f32 %v4724, %v4606
        %v4757 = vmul.f32 %v4725, %v4655
        %v4758 = vmul.f32 %v4726, %v4608
        %v4759 = vmul.f32 %v4727, %v4657
        %v4760 = vmul.f32 %v4728, %v4611
        %v4761 = vmul.f32 %v4729, %v4660
        %v4762 = vmul.f32 %v4730, %v4613
        %v4763 = vmul.f32 %v4731, %v4662
        %v4764 = vmul.f32 %v4732, %v4616
        %v4765 = vmul.f32 %v4733, %v4665
        %v4766 = vmul.f32 %v4734, %v4618
        %v4767 = vmul.f32 %v4735, %v4667
        %v4768 = vmul.f32 %v4736, %v4621
        %v4769 = vmul.f32 %v4737, %v4670
        %v4770 = vmul.f32 %v4738, %v4623
        %v4771 = vmul.f32 %v4739, %v4672
        %v4772 = vmul.f32 %v4740, %v4626
        %v4773 = vmul.f32 %v4741, %v4675
        %v4774 = vmul.f32 %v4742, %v4628
        %v4775 = vmul.f32 %v4743, %v4677
        %v4776 = vmul.f32 %v4744, %v4631
        %v4777 = vmul.f32 %v4745, %v4680
        %v4778 = vmul.f32 %v4746, %v4633
        %v4779 = vmul.f32 %v4747, %v4682
        %v4780 = vmul.f32 %v4748, 0.044715
        %v4781 = vmul.f32 %v4749, 0.044715
        %v4782 = vmul.f32 %v4750, 0.044715
        %v4783 = vmul.f32 %v4751, 0.044715
        %v4784 = vmul.f32 %v4752, 0.044715
        %v4785 = vmul.f32 %v4753, 0.044715
        %v4786 = vmul.f32 %v4754, 0.044715
        %v4787 = vmul.f32 %v4755, 0.044715
        %v4788 = vmul.f32 %v4756, 0.044715
        %v4789 = vmul.f32 %v4757, 0.044715
        %v4790 = vmul.f32 %v4758, 0.044715
        %v4791 = vmul.f32 %v4759, 0.044715
        %v4792 = vmul.f32 %v4760, 0.044715
        %v4793 = vmul.f32 %v4761, 0.044715
        %v4794 = vmul.f32 %v4762, 0.044715
        %v4795 = vmul.f32 %v4763, 0.044715
        %v4796 = vmul.f32 %v4764, 0.044715
        %v4797 = vmul.f32 %v4765, 0.044715
        %v4798 = vmul.f32 %v4766, 0.044715
        %v4799 = vmul.f32 %v4767, 0.044715
        %v4800 = vmul.f32 %v4768, 0.044715
        %v4801 = vmul.f32 %v4769, 0.044715
        %v4802 = vmul.f32 %v4770, 0.044715
        %v4803 = vmul.f32 %v4771, 0.044715
        %v4804 = vmul.f32 %v4772, 0.044715
        %v4805 = vmul.f32 %v4773, 0.044715
        %v4806 = vmul.f32 %v4774, 0.044715
        %v4807 = vmul.f32 %v4775, 0.044715
        %v4808 = vmul.f32 %v4776, 0.044715
        %v4809 = vmul.f32 %v4777, 0.044715
        %v4810 = vmul.f32 %v4778, 0.044715
        %v4811 = vmul.f32 %v4779, 0.044715
        %v4812 = vadd.f32 %v4596, %v4780
        %v4813 = vadd.f32 %v4645, %v4781
        %v4814 = vadd.f32 %v4598, %v4782
        %v4815 = vadd.f32 %v4647, %v4783
        %v4816 = vadd.f32 %v4601, %v4784
        %v4817 = vadd.f32 %v4650, %v4785
        %v4818 = vadd.f32 %v4603, %v4786
        %v4819 = vadd.f32 %v4652, %v4787
        %v4820 = vadd.f32 %v4606, %v4788
        %v4821 = vadd.f32 %v4655, %v4789
        %v4822 = vadd.f32 %v4608, %v4790
        %v4823 = vadd.f32 %v4657, %v4791
        %v4824 = vadd.f32 %v4611, %v4792
        %v4825 = vadd.f32 %v4660, %v4793
        %v4826 = vadd.f32 %v4613, %v4794
        %v4827 = vadd.f32 %v4662, %v4795
        %v4828 = vadd.f32 %v4616, %v4796
        %v4829 = vadd.f32 %v4665, %v4797
        %v4830 = vadd.f32 %v4618, %v4798
        %v4831 = vadd.f32 %v4667, %v4799
        %v4832 = vadd.f32 %v4621, %v4800
        %v4833 = vadd.f32 %v4670, %v4801
        %v4834 = vadd.f32 %v4623, %v4802
        %v4835 = vadd.f32 %v4672, %v4803
        %v4836 = vadd.f32 %v4626, %v4804
        %v4837 = vadd.f32 %v4675, %v4805
        %v4838 = vadd.f32 %v4628, %v4806
        %v4839 = vadd.f32 %v4677, %v4807
        %v4840 = vadd.f32 %v4631, %v4808
        %v4841 = vadd.f32 %v4680, %v4809
        %v4842 = vadd.f32 %v4633, %v4810
        %v4843 = vadd.f32 %v4682, %v4811
        %v4844 = vmul.f32 %v4812, 0.7978846
        %v4845 = vmul.f32 %v4813, 0.7978846
        %v4846 = vmul.f32 %v4814, 0.7978846
        %v4847 = vmul.f32 %v4815, 0.7978846
        %v4848 = vmul.f32 %v4816, 0.7978846
        %v4849 = vmul.f32 %v4817, 0.7978846
        %v4850 = vmul.f32 %v4818, 0.7978846
        %v4851 = vmul.f32 %v4819, 0.7978846
        %v4852 = vmul.f32 %v4820, 0.7978846
        %v4853 = vmul.f32 %v4821, 0.7978846
        %v4854 = vmul.f32 %v4822, 0.7978846
        %v4855 = vmul.f32 %v4823, 0.7978846
        %v4856 = vmul.f32 %v4824, 0.7978846
        %v4857 = vmul.f32 %v4825, 0.7978846
        %v4858 = vmul.f32 %v4826, 0.7978846
        %v4859 = vmul.f32 %v4827, 0.7978846
        %v4860 = vmul.f32 %v4828, 0.7978846
        %v4861 = vmul.f32 %v4829, 0.7978846
        %v4862 = vmul.f32 %v4830, 0.7978846
        %v4863 = vmul.f32 %v4831, 0.7978846
        %v4864 = vmul.f32 %v4832, 0.7978846
        %v4865 = vmul.f32 %v4833, 0.7978846
        %v4866 = vmul.f32 %v4834, 0.7978846
        %v4867 = vmul.f32 %v4835, 0.7978846
        %v4868 = vmul.f32 %v4836, 0.7978846
        %v4869 = vmul.f32 %v4837, 0.7978846
        %v4870 = vmul.f32 %v4838, 0.7978846
        %v4871 = vmul.f32 %v4839, 0.7978846
        %v4872 = vmul.f32 %v4840, 0.7978846
        %v4873 = vmul.f32 %v4841, 0.7978846
        %v4874 = vmul.f32 %v4842, 0.7978846
        %v4875 = vmul.f32 %v4843, 0.7978846
        %v4876 = vtanh.pop %v4844
        %v4877 = vtanh.pop %v4845
        %v4878 = vtanh.pop %v4846
        %v4879 = vtanh.pop %v4847
        %v4880 = vtanh.pop %v4848
        %v4881 = vtanh.pop %v4849
        %v4882 = vtanh.pop %v4850
        %v4883 = vtanh.pop %v4851
        %v4884 = vtanh.pop %v4852
        %v4885 = vtanh.pop %v4853
        %v4886 = vtanh.pop %v4854
        %v4887 = vtanh.pop %v4855
        %v4888 = vtanh.pop %v4856
        %v4889 = vtanh.pop %v4857
        %v4890 = vtanh.pop %v4858
        %v4891 = vtanh.pop %v4859
        %v4892 = vtanh.pop %v4860
        %v4893 = vtanh.pop %v4861
        %v4894 = vtanh.pop %v4862
        %v4895 = vtanh.pop %v4863
        %v4896 = vtanh.pop %v4864
        %v4897 = vtanh.pop %v4865
        %v4898 = vtanh.pop %v4866
        %v4899 = vtanh.pop %v4867
        %v4900 = vtanh.pop %v4868
        %v4901 = vtanh.pop %v4869
        %v4902 = vtanh.pop %v4870
        %v4903 = vtanh.pop %v4871
        %v4904 = vtanh.pop %v4872
        %v4905 = vtanh.pop %v4873
        %v4906 = vtanh.pop %v4874
        %v4907 = vtanh.pop %v4875
        %v4908 = vadd.f32 %v4876, 1.0
        %v4909 = vadd.f32 %v4877, 1.0
        %v4910 = vadd.f32 %v4878, 1.0
        %v4911 = vadd.f32 %v4879, 1.0
        %v4912 = vadd.f32 %v4880, 1.0
        %v4913 = vadd.f32 %v4881, 1.0
        %v4914 = vadd.f32 %v4882, 1.0
        %v4915 = vadd.f32 %v4883, 1.0
        %v4916 = vadd.f32 %v4884, 1.0
        %v4917 = vadd.f32 %v4885, 1.0
        %v4918 = vadd.f32 %v4886, 1.0
        %v4919 = vadd.f32 %v4887, 1.0
        %v4920 = vadd.f32 %v4888, 1.0
        %v4921 = vadd.f32 %v4889, 1.0
        %v4922 = vadd.f32 %v4890, 1.0
        %v4923 = vadd.f32 %v4891, 1.0
        %v4924 = vadd.f32 %v4892, 1.0
        %v4925 = vadd.f32 %v4893, 1.0
        %v4926 = vadd.f32 %v4894, 1.0
        %v4927 = vadd.f32 %v4895, 1.0
        %v4928 = vadd.f32 %v4896, 1.0
        %v4929 = vadd.f32 %v4897, 1.0
        %v4930 = vadd.f32 %v4898, 1.0
        %v4931 = vadd.f32 %v4899, 1.0
        %v4932 = vadd.f32 %v4900, 1.0
        %v4933 = vadd.f32 %v4901, 1.0
        %v4934 = vadd.f32 %v4902, 1.0
        %v4935 = vadd.f32 %v4903, 1.0
        %v4936 = vadd.f32 %v4904, 1.0
        %v4937 = vadd.f32 %v4905, 1.0
        %v4938 = vadd.f32 %v4906, 1.0
        %v4939 = vadd.f32 %v4907, 1.0
        %v4940 = vmul.f32 %v4684, %v4908
        %v4941 = vmul.f32 %v4685, %v4909
        %v4942 = vmul.f32 %v4686, %v4910
        %v4943 = vmul.f32 %v4687, %v4911
        %v4944 = vmul.f32 %v4688, %v4912
        %v4945 = vmul.f32 %v4689, %v4913
        %v4946 = vmul.f32 %v4690, %v4914
        %v4947 = vmul.f32 %v4691, %v4915
        %v4948 = vmul.f32 %v4692, %v4916
        %v4949 = vmul.f32 %v4693, %v4917
        %v4950 = vmul.f32 %v4694, %v4918
        %v4951 = vmul.f32 %v4695, %v4919
        %v4952 = vmul.f32 %v4696, %v4920
        %v4953 = vmul.f32 %v4697, %v4921
        %v4954 = vmul.f32 %v4698, %v4922
        %v4955 = vmul.f32 %v4699, %v4923
        %v4956 = vmul.f32 %v4700, %v4924
        %v4957 = vmul.f32 %v4701, %v4925
        %v4958 = vmul.f32 %v4702, %v4926
        %v4959 = vmul.f32 %v4703, %v4927
        %v4960 = vmul.f32 %v4704, %v4928
        %v4961 = vmul.f32 %v4705, %v4929
        %v4962 = vmul.f32 %v4706, %v4930
        %v4963 = vmul.f32 %v4707, %v4931
        %v4964 = vmul.f32 %v4708, %v4932
        %v4965 = vmul.f32 %v4709, %v4933
        %v4966 = vmul.f32 %v4710, %v4934
        %v4967 = vmul.f32 %v4711, %v4935
        %v4968 = vmul.f32 %v4712, %v4936
        %v4969 = vmul.f32 %v4713, %v4937
        %v4970 = vmul.f32 %v4714, %v4938
        %v4971 = vmul.f32 %v4715, %v4939
        %v4972 = vpack.c.bf16 %v4942, %v4940
        %v4973 = vpack.c.bf16 %v4943, %v4941
        %v4974 = vpack.c.bf16 %v4946, %v4944
        %v4975 = vpack.c.bf16 %v4947, %v4945
        %v4976 = vpack.c.bf16 %v4950, %v4948
        %v4977 = vpack.c.bf16 %v4951, %v4949
        %v4978 = vpack.c.bf16 %v4954, %v4952
        %v4979 = vpack.c.bf16 %v4955, %v4953
        %v4980 = vpack.c.bf16 %v4958, %v4956
        %v4981 = vpack.c.bf16 %v4959, %v4957
        %v4982 = vpack.c.bf16 %v4962, %v4960
        %v4983 = vpack.c.bf16 %v4963, %v4961
        %v4984 = vpack.c.bf16 %v4966, %v4964
        %v4985 = vpack.c.bf16 %v4967, %v4965
        %v4986 = vpack.c.bf16 %v4970, %v4968
        %v4987 = vpack.c.bf16 %v4971, %v4969
        %v4988 = vld [vmem:[%s967] sm:$0xf]
        %v4989 = vld [vmem:[%s967 + $0x4] sm:$0xf]
        %v4990 = vld [vmem:[%s967 + $0x8] sm:$0xf]
        %v4991 = vld [vmem:[%s967 + $0xc] sm:$0xf]
        %v4992 = vld [vmem:[%s967 + $0x10] sm:$0xf]
        %v4993 = vld [vmem:[%s967 + $0x14] sm:$0xf]
        %v4994 = vld [vmem:[%s967 + $0x18] sm:$0xf]
        %v4995 = vld [vmem:[%s967 + $0x1c] sm:$0xf]
        %v4996 = vld [vmem:[%s967 + $0x20] sm:$0xf]
        %v4997 = vld [vmem:[%s967 + $0x24] sm:$0xf]
        %v4998 = vld [vmem:[%s967 + $0x28] sm:$0xf]
        %v4999 = vld [vmem:[%s967 + $0x2c] sm:$0xf]
        %v5000 = vld [vmem:[%s967 + $0x30] sm:$0xf]
        %v5001 = vld [vmem:[%s967 + $0x34] sm:$0xf]
        %v5002 = vld [vmem:[%s967 + $0x38] sm:$0xf]
        %v5003 = vld [vmem:[%s967 + $0x3c] sm:$0xf]
        %v5004 = vld [vmem:[%s967 + $0x40] sm:$0xf]
        %v5005 = vld [vmem:[%s967 + $0x44] sm:$0xf]
        %v5006 = vld [vmem:[%s967 + $0x48] sm:$0xf]
        %v5007 = vld [vmem:[%s967 + $0x4c] sm:$0xf]
        %v5008 = vld [vmem:[%s967 + $0x50] sm:$0xf]
        %v5009 = vld [vmem:[%s967 + $0x54] sm:$0xf]
        %v5010 = vld [vmem:[%s967 + $0x58] sm:$0xf]
        %v5011 = vld [vmem:[%s967 + $0x5c] sm:$0xf]
        %v5012 = vld [vmem:[%s967 + $0x60] sm:$0xf]
        %v5013 = vld [vmem:[%s967 + $0x64] sm:$0xf]
        %v5014 = vld [vmem:[%s967 + $0x68] sm:$0xf]
        %v5015 = vld [vmem:[%s967 + $0x6c] sm:$0xf]
        %v5016 = vld [vmem:[%s967 + $0x70] sm:$0xf]
        %v5017 = vld [vmem:[%s967 + $0x74] sm:$0xf]
        %v5018 = vld [vmem:[%s967 + $0x78] sm:$0xf]
        %v5019 = vld [vmem:[%s967 + $0x7c] sm:$0xf]
        %v5052 = vunpack.c.l.b16 %v4988
        %v5053 = vunpack.c.l.b16 %v4989
        %v5054 = vunpack.c.l.b16 %v4990
        %v5055 = vunpack.c.l.b16 %v4991
        %v5056 = vunpack.c.l.b16 %v4992
        %v5057 = vunpack.c.l.b16 %v4993
        %v5058 = vunpack.c.l.b16 %v4994
        %v5059 = vunpack.c.l.b16 %v4995
        %v5060 = vunpack.c.l.b16 %v4996
        %v5061 = vunpack.c.l.b16 %v4997
        %v5062 = vunpack.c.l.b16 %v4998
        %v5063 = vunpack.c.l.b16 %v4999
        %v5064 = vunpack.c.l.b16 %v5000
        %v5065 = vunpack.c.l.b16 %v5001
        %v5066 = vunpack.c.l.b16 %v5002
        %v5067 = vunpack.c.l.b16 %v5003
        %v5068 = vunpack.c.l.b16 %v5004
        %v5069 = vunpack.c.l.b16 %v5005
        %v5070 = vunpack.c.l.b16 %v5006
        %v5071 = vunpack.c.l.b16 %v5007
        %v5072 = vunpack.c.l.b16 %v5008
        %v5073 = vunpack.c.l.b16 %v5009
        %v5074 = vunpack.c.l.b16 %v5010
        %v5075 = vunpack.c.l.b16 %v5011
        %v5076 = vunpack.c.l.b16 %v5012
        %v5077 = vunpack.c.l.b16 %v5013
        %v5078 = vunpack.c.l.b16 %v5014
        %v5079 = vunpack.c.l.b16 %v5015
        %v5080 = vunpack.c.l.b16 %v5016
        %v5081 = vunpack.c.l.b16 %v5017
        %v5082 = vunpack.c.l.b16 %v5018
        %v5083 = vunpack.c.l.b16 %v5019
        %v5084 = vpack.c.b16 %v5053, %v5052
        %v5085 = vpack.c.b16 %v5055, %v5054
        %v5086 = vpack.c.b16 %v5057, %v5056
        %v5087 = vpack.c.b16 %v5059, %v5058
        %v5088 = vpack.c.b16 %v5061, %v5060
        %v5089 = vpack.c.b16 %v5063, %v5062
        %v5090 = vpack.c.b16 %v5065, %v5064
        %v5091 = vpack.c.b16 %v5067, %v5066
        %v5092 = vpack.c.b16 %v5069, %v5068
        %v5093 = vpack.c.b16 %v5071, %v5070
        %v5094 = vpack.c.b16 %v5073, %v5072
        %v5095 = vpack.c.b16 %v5075, %v5074
        %v5096 = vpack.c.b16 %v5077, %v5076
        %v5097 = vpack.c.b16 %v5079, %v5078
        %v5098 = vpack.c.b16 %v5081, %v5080
        %v5099 = vpack.c.b16 %v5083, %v5082
        %5116 = vmatpush.bf16.msra.mxu0 %v5091
        %5117 = vmatpush.bf16.msra.mxu0 %v5090
        %5118 = vmatpush.bf16.msra.mxu0 %v5089
        %5119 = vmatpush.bf16.msra.mxu0 %v5088
        %5120 = vmatpush.bf16.msra.mxu0 %v5087
        %5121 = vmatpush.bf16.msra.mxu0 %v5086
        %5122 = vmatpush.bf16.msra.mxu0 %v5085
        %5123 = vmatpush.bf16.msra.mxu0 %v5084
        %5124 = vmatmul.bf16.gmra.mxu0 %v4972
        %v5125 = vpop.f32.mrf.mxu0
        %v5126 = vadd.f32 0.0, %v5125
        %v5127 = vpop.f32.mrf.mxu0
        %v5128 = vadd.f32 0.0, %v5127
        %5129 = vmatmul.bf16.gmra.mxu0 %v4974
        %v5130 = vpop.f32.mrf.mxu0
        %v5131 = vadd.f32 0.0, %v5130
        %v5132 = vpop.f32.mrf.mxu0
        %v5133 = vadd.f32 0.0, %v5132
        %5134 = vmatmul.bf16.gmra.mxu0 %v4976
        %v5135 = vpop.f32.mrf.mxu0
        %v5136 = vadd.f32 0.0, %v5135
        %v5137 = vpop.f32.mrf.mxu0
        %v5138 = vadd.f32 0.0, %v5137
        %5139 = vmatmul.bf16.gmra.mxu0 %v4978
        %v5140 = vpop.f32.mrf.mxu0
        %v5141 = vadd.f32 0.0, %v5140
        %v5142 = vpop.f32.mrf.mxu0
        %v5143 = vadd.f32 0.0, %v5142
        %5144 = vmatmul.bf16.gmra.mxu0 %v4980
        %v5145 = vpop.f32.mrf.mxu0
        %v5146 = vadd.f32 0.0, %v5145
        %v5147 = vpop.f32.mrf.mxu0
        %v5148 = vadd.f32 0.0, %v5147
        %5149 = vmatmul.bf16.gmra.mxu0 %v4982
        %v5150 = vpop.f32.mrf.mxu0
        %v5151 = vadd.f32 0.0, %v5150
        %v5152 = vpop.f32.mrf.mxu0
        %v5153 = vadd.f32 0.0, %v5152
        %5154 = vmatmul.bf16.gmra.mxu0 %v4984
        %v5155 = vpop.f32.mrf.mxu0
        %v5156 = vadd.f32 0.0, %v5155
        %v5157 = vpop.f32.mrf.mxu0
        %v5158 = vadd.f32 0.0, %v5157
        %5159 = vmatmul.bf16.gmra.mxu0 %v4986
        %v5160 = vpop.f32.mrf.mxu0
        %v5161 = vadd.f32 0.0, %v5160
        %v5162 = vpop.f32.mrf.mxu0
        %v5163 = vadd.f32 0.0, %v5162
        %5164 = vdwg.mxu0
        %5165 = vmatpush.bf16.msra.mxu0 %v5099
        %5166 = vmatpush.bf16.msra.mxu0 %v5098
        %5167 = vmatpush.bf16.msra.mxu0 %v5097
        %5168 = vmatpush.bf16.msra.mxu0 %v5096
        %5169 = vmatpush.bf16.msra.mxu0 %v5095
        %5170 = vmatpush.bf16.msra.mxu0 %v5094
        %5171 = vmatpush.bf16.msra.mxu0 %v5093
        %5172 = vmatpush.bf16.msra.mxu0 %v5092
        %5173 = vmatmul.bf16.gmra.mxu0 %v4973
        %v5174 = vpop.f32.mrf.mxu0
        %v5175 = vadd.f32 %v5126, %v5174
        %v5176 = vpop.f32.mrf.mxu0
        %v5177 = vadd.f32 %v5128, %v5176
        %5178 = vmatmul.bf16.gmra.mxu0 %v4975
        %v5179 = vpop.f32.mrf.mxu0
        %v5180 = vadd.f32 %v5131, %v5179
        %v5181 = vpop.f32.mrf.mxu0
        %v5182 = vadd.f32 %v5133, %v5181
        %5183 = vmatmul.bf16.gmra.mxu0 %v4977
        %v5184 = vpop.f32.mrf.mxu0
        %v5185 = vadd.f32 %v5136, %v5184
        %v5186 = vpop.f32.mrf.mxu0
        %v5187 = vadd.f32 %v5138, %v5186
        %5188 = vmatmul.bf16.gmra.mxu0 %v4979
        %v5189 = vpop.f32.mrf.mxu0
        %v5190 = vadd.f32 %v5141, %v5189
        %v5191 = vpop.f32.mrf.mxu0
        %v5192 = vadd.f32 %v5143, %v5191
        %5193 = vmatmul.bf16.gmra.mxu0 %v4981
        %v5194 = vpop.f32.mrf.mxu0
        %v5195 = vadd.f32 %v5146, %v5194
        %v5196 = vpop.f32.mrf.mxu0
        %v5197 = vadd.f32 %v5148, %v5196
        %5198 = vmatmul.bf16.gmra.mxu0 %v4983
        %v5199 = vpop.f32.mrf.mxu0
        %v5200 = vadd.f32 %v5151, %v5199
        %v5201 = vpop.f32.mrf.mxu0
        %v5202 = vadd.f32 %v5153, %v5201
        %5203 = vmatmul.bf16.gmra.mxu0 %v4985
        %v5204 = vpop.f32.mrf.mxu0
        %v5205 = vadd.f32 %v5156, %v5204
        %v5206 = vpop.f32.mrf.mxu0
        %v5207 = vadd.f32 %v5158, %v5206
        %5208 = vmatmul.bf16.gmra.mxu0 %v4987
        %v5209 = vpop.f32.mrf.mxu0
        %v5210 = vadd.f32 %v5161, %v5209
        %v5211 = vpop.f32.mrf.mxu0
        %v5212 = vadd.f32 %v5163, %v5211
        %5213 = vdwg.mxu0
        %v5214 = vadd.f32 %v4100, %v5175
        %v5215 = vadd.f32 %v4101, %v5177
        %v5216 = vadd.f32 %v4102, %v5180
        %v5217 = vadd.f32 %v4103, %v5182
        %v5218 = vadd.f32 %v4104, %v5185
        %v5219 = vadd.f32 %v4105, %v5187
        %v5220 = vadd.f32 %v4106, %v5190
        %v5221 = vadd.f32 %v4107, %v5192
        %v5222 = vadd.f32 %v4108, %v5195
        %v5223 = vadd.f32 %v4109, %v5197
        %v5224 = vadd.f32 %v4110, %v5200
        %v5225 = vadd.f32 %v4111, %v5202
        %v5226 = vadd.f32 %v4112, %v5205
        %v5227 = vadd.f32 %v4113, %v5207
        %v5228 = vadd.f32 %v4114, %v5210
        %v5229 = vadd.f32 %v4115, %v5212
        %v5230 = vld [vmem:[%s1110] sm:$0x1]
        %v5232 = vperm.slane %v5230, 0
        %v5234 = vadd.f32 %v5214, %v5232
        %v5235 = vadd.f32 %v5215, %v5232
        %v5236 = vadd.f32 %v5216, %v5232
        %v5237 = vadd.f32 %v5217, %v5232
        %v5238 = vadd.f32 %v5218, %v5232
        %v5239 = vadd.f32 %v5219, %v5232
        %v5240 = vadd.f32 %v5220, %v5232
        %v5241 = vadd.f32 %v5221, %v5232
        %v5242 = vadd.f32 %v5222, %v5232
        %v5243 = vadd.f32 %v5223, %v5232
        %v5244 = vadd.f32 %v5224, %v5232
        %v5245 = vadd.f32 %v5225, %v5232
        %v5246 = vadd.f32 %v5226, %v5232
        %v5247 = vadd.f32 %v5227, %v5232
        %v5248 = vadd.f32 %v5228, %v5232
        %v5249 = vadd.f32 %v5229, %v5232
        %5250 = vst [vmem:[#allocation21] sm:$0xff] %v5234
        %5251 = vst [vmem:[#allocation21 + $0x8] sm:$0xff] %v5235
        %5252 = vst [vmem:[#allocation21 + $0x10] sm:$0xff] %v5236
        %5253 = vst [vmem:[#allocation21 + $0x18] sm:$0xff] %v5237
        %5254 = vst [vmem:[#allocation21 + $0x20] sm:$0xff] %v5238
        %5255 = vst [vmem:[#allocation21 + $0x28] sm:$0xff] %v5239
        %5256 = vst [vmem:[#allocation21 + $0x30] sm:$0xff] %v5240
        %5257 = vst [vmem:[#allocation21 + $0x38] sm:$0xff] %v5241
        %5258 = vst [vmem:[#allocation21 + $0x40] sm:$0xff] %v5242
        %5259 = vst [vmem:[#allocation21 + $0x48] sm:$0xff] %v5243
        %5260 = vst [vmem:[#allocation21 + $0x50] sm:$0xff] %v5244
        %5261 = vst [vmem:[#allocation21 + $0x58] sm:$0xff] %v5245
        %5262 = vst [vmem:[#allocation21 + $0x60] sm:$0xff] %v5246
        %5263 = vst [vmem:[#allocation21 + $0x68] sm:$0xff] %v5247
        %5264 = vst [vmem:[#allocation21 + $0x70] sm:$0xff] %v5248
        %5265 = vst [vmem:[#allocation21 + $0x78] sm:$0xff] %v5249
        %p5266 = scmp.eq.s32.totalorder %s53, 1
        // Predicated region
        $region149: #{tpu_custom_call.1} parent=99 // pred_check
          %p5267 = pneg %p5266
        $region150: #{tpu_custom_call.1} parent=99 // pred_check_branch
          %5269 = sbr.rel (%p5267) target = $region152
        $region151: #{tpu_custom_call.1} parent=99 // pred_region
          %v5270 = vld [vmem:[#allocation20] sm:$0x1]
          %v5271 = vld [vmem:[%s18] sm:$0x1]
          %5272 = vadd.xlane.f32.xlu0 %v5234
          %v5273 = vpop.xlane.xlu0 %5272
          %5274 = vadd.xlane.f32.xlu0 %v5235
          %v5275 = vpop.xlane.xlu0 %5274
          %5276 = vadd.xlane.f32.xlu0 %v5236
          %v5277 = vpop.xlane.xlu0 %5276
          %5278 = vadd.xlane.f32.xlu0 %v5237
          %v5279 = vpop.xlane.xlu0 %5278
          %5280 = vadd.xlane.f32.xlu0 %v5238
          %v5281 = vpop.xlane.xlu0 %5280
          %5282 = vadd.xlane.f32.xlu0 %v5239
          %v5283 = vpop.xlane.xlu0 %5282
          %5284 = vadd.xlane.f32.xlu0 %v5240
          %v5285 = vpop.xlane.xlu0 %5284
          %5286 = vadd.xlane.f32.xlu0 %v5241
          %v5287 = vpop.xlane.xlu0 %5286
          %5288 = vadd.xlane.f32.xlu0 %v5242
          %v5289 = vpop.xlane.xlu0 %5288
          %5290 = vadd.xlane.f32.xlu0 %v5243
          %v5291 = vpop.xlane.xlu0 %5290
          %5292 = vadd.xlane.f32.xlu0 %v5244
          %v5293 = vpop.xlane.xlu0 %5292
          %5294 = vadd.xlane.f32.xlu0 %v5245
          %v5295 = vpop.xlane.xlu0 %5294
          %5296 = vadd.xlane.f32.xlu0 %v5246
          %v5297 = vpop.xlane.xlu0 %5296
          %5298 = vadd.xlane.f32.xlu0 %v5247
          %v5299 = vpop.xlane.xlu0 %5298
          %5300 = vadd.xlane.f32.xlu0 %v5248
          %v5301 = vpop.xlane.xlu0 %5300
          %5302 = vadd.xlane.f32.xlu0 %v5249
          %v5303 = vpop.xlane.xlu0 %5302
          %v5304 = vmul.f32 %v5273, %v1204
          %v5305 = vmul.f32 %v5275, %v1204
          %v5306 = vmul.f32 %v5277, %v1204
          %v5307 = vmul.f32 %v5279, %v1204
          %v5308 = vmul.f32 %v5281, %v1204
          %v5309 = vmul.f32 %v5283, %v1204
          %v5310 = vmul.f32 %v5285, %v1204
          %v5311 = vmul.f32 %v5287, %v1204
          %v5312 = vmul.f32 %v5289, %v1204
          %v5313 = vmul.f32 %v5291, %v1204
          %v5314 = vmul.f32 %v5293, %v1204
          %v5315 = vmul.f32 %v5295, %v1204
          %v5316 = vmul.f32 %v5297, %v1204
          %v5317 = vmul.f32 %v5299, %v1204
          %v5318 = vmul.f32 %v5301, %v1204
          %v5319 = vmul.f32 %v5303, %v1204
          %v5320 = vsub.f32 %v5234, %v5304
          %v5321 = vsub.f32 %v5235, %v5305
          %v5322 = vsub.f32 %v5236, %v5306
          %v5323 = vsub.f32 %v5237, %v5307
          %v5324 = vsub.f32 %v5238, %v5308
          %v5325 = vsub.f32 %v5239, %v5309
          %v5326 = vsub.f32 %v5240, %v5310
          %v5327 = vsub.f32 %v5241, %v5311
          %v5328 = vsub.f32 %v5242, %v5312
          %v5329 = vsub.f32 %v5243, %v5313
          %v5330 = vsub.f32 %v5244, %v5314
          %v5331 = vsub.f32 %v5245, %v5315
          %v5332 = vsub.f32 %v5246, %v5316
          %v5333 = vsub.f32 %v5247, %v5317
          %v5334 = vsub.f32 %v5248, %v5318
          %v5335 = vsub.f32 %v5249, %v5319
          %v5336 = vmul.f32 %v5320, %v5320
          %v5337 = vmul.f32 %v5321, %v5321
          %v5338 = vmul.f32 %v5322, %v5322
          %v5339 = vmul.f32 %v5323, %v5323
          %v5340 = vmul.f32 %v5324, %v5324
          %v5341 = vmul.f32 %v5325, %v5325
          %v5342 = vmul.f32 %v5326, %v5326
          %v5343 = vmul.f32 %v5327, %v5327
          %v5344 = vmul.f32 %v5328, %v5328
          %v5345 = vmul.f32 %v5329, %v5329
          %v5346 = vmul.f32 %v5330, %v5330
          %v5347 = vmul.f32 %v5331, %v5331
          %v5348 = vmul.f32 %v5332, %v5332
          %v5349 = vmul.f32 %v5333, %v5333
          %v5350 = vmul.f32 %v5334, %v5334
          %v5351 = vmul.f32 %v5335, %v5335
          %5352 = vadd.xlane.f32.xlu0 %v5336
          %v5353 = vpop.xlane.xlu0 %5352
          %5354 = vadd.xlane.f32.xlu0 %v5337
          %v5355 = vpop.xlane.xlu0 %5354
          %5356 = vadd.xlane.f32.xlu0 %v5338
          %v5357 = vpop.xlane.xlu0 %5356
          %5358 = vadd.xlane.f32.xlu0 %v5339
          %v5359 = vpop.xlane.xlu0 %5358
          %5360 = vadd.xlane.f32.xlu0 %v5340
          %v5361 = vpop.xlane.xlu0 %5360
          %5362 = vadd.xlane.f32.xlu0 %v5341
          %v5363 = vpop.xlane.xlu0 %5362
          %5364 = vadd.xlane.f32.xlu0 %v5342
          %v5365 = vpop.xlane.xlu0 %5364
          %5366 = vadd.xlane.f32.xlu0 %v5343
          %v5367 = vpop.xlane.xlu0 %5366
          %5368 = vadd.xlane.f32.xlu0 %v5344
          %v5369 = vpop.xlane.xlu0 %5368
          %5370 = vadd.xlane.f32.xlu0 %v5345
          %v5371 = vpop.xlane.xlu0 %5370
          %5372 = vadd.xlane.f32.xlu0 %v5346
          %v5373 = vpop.xlane.xlu0 %5372
          %5374 = vadd.xlane.f32.xlu0 %v5347
          %v5375 = vpop.xlane.xlu0 %5374
          %5376 = vadd.xlane.f32.xlu0 %v5348
          %v5377 = vpop.xlane.xlu0 %5376
          %5378 = vadd.xlane.f32.xlu0 %v5349
          %v5379 = vpop.xlane.xlu0 %5378
          %5380 = vadd.xlane.f32.xlu0 %v5350
          %v5381 = vpop.xlane.xlu0 %5380
          %5382 = vadd.xlane.f32.xlu0 %v5351
          %v5383 = vpop.xlane.xlu0 %5382
          %v5384 = vmul.f32 %v5353, %v1204
          %v5385 = vmul.f32 %v5355, %v1204
          %v5386 = vmul.f32 %v5357, %v1204
          %v5387 = vmul.f32 %v5359, %v1204
          %v5388 = vmul.f32 %v5361, %v1204
          %v5389 = vmul.f32 %v5363, %v1204
          %v5390 = vmul.f32 %v5365, %v1204
          %v5391 = vmul.f32 %v5367, %v1204
          %v5392 = vmul.f32 %v5369, %v1204
          %v5393 = vmul.f32 %v5371, %v1204
          %v5394 = vmul.f32 %v5373, %v1204
          %v5395 = vmul.f32 %v5375, %v1204
          %v5396 = vmul.f32 %v5377, %v1204
          %v5397 = vmul.f32 %v5379, %v1204
          %v5398 = vmul.f32 %v5381, %v1204
          %v5399 = vmul.f32 %v5383, %v1204
          %v5400 = vadd.f32 %v5384, 1e-06
          %v5401 = vadd.f32 %v5385, 1e-06
          %v5402 = vadd.f32 %v5386, 1e-06
          %v5403 = vadd.f32 %v5387, 1e-06
          %v5404 = vadd.f32 %v5388, 1e-06
          %v5405 = vadd.f32 %v5389, 1e-06
          %v5406 = vadd.f32 %v5390, 1e-06
          %v5407 = vadd.f32 %v5391, 1e-06
          %v5408 = vadd.f32 %v5392, 1e-06
          %v5409 = vadd.f32 %v5393, 1e-06
          %v5410 = vadd.f32 %v5394, 1e-06
          %v5411 = vadd.f32 %v5395, 1e-06
          %v5412 = vadd.f32 %v5396, 1e-06
          %v5413 = vadd.f32 %v5397, 1e-06
          %v5414 = vadd.f32 %v5398, 1e-06
          %v5415 = vadd.f32 %v5399, 1e-06
          %v5416 = vrsqrt.pop %v5400
          %v5417 = vmul.f32 %v5416, %v5400
          %v5418 = vmul.f32 %v5417, %v5416
          %v5419 = vmul.f32 0.5, %v5418
          %v5420 = vsub.f32 1.5, %v5419
          %v5421 = vmul.f32 %v5416, %v5420
          %vm5422 = vweird.f32 %v5400
          %vm5423 = vweird.f32 %v5416
          %vm5424 = vmor %vm5422, %vm5423
          %v5425 = vsel %vm5424, %v5416, %v5421
          %v5426 = vrsqrt.pop %v5401
          %v5427 = vmul.f32 %v5426, %v5401
          %v5428 = vmul.f32 %v5427, %v5426
          %v5429 = vmul.f32 0.5, %v5428
          %v5430 = vsub.f32 1.5, %v5429
          %v5431 = vmul.f32 %v5426, %v5430
          %vm5432 = vweird.f32 %v5401
          %vm5433 = vweird.f32 %v5426
          %vm5434 = vmor %vm5432, %vm5433
          %v5435 = vsel %vm5434, %v5426, %v5431
          %v5436 = vrsqrt.pop %v5402
          %v5437 = vmul.f32 %v5436, %v5402
          %v5438 = vmul.f32 %v5437, %v5436
          %v5439 = vmul.f32 0.5, %v5438
          %v5440 = vsub.f32 1.5, %v5439
          %v5441 = vmul.f32 %v5436, %v5440
          %vm5442 = vweird.f32 %v5402
          %vm5443 = vweird.f32 %v5436
          %vm5444 = vmor %vm5442, %vm5443
          %v5445 = vsel %vm5444, %v5436, %v5441
          %v5446 = vrsqrt.pop %v5403
          %v5447 = vmul.f32 %v5446, %v5403
          %v5448 = vmul.f32 %v5447, %v5446
          %v5449 = vmul.f32 0.5, %v5448
          %v5450 = vsub.f32 1.5, %v5449
          %v5451 = vmul.f32 %v5446, %v5450
          %vm5452 = vweird.f32 %v5403
          %vm5453 = vweird.f32 %v5446
          %vm5454 = vmor %vm5452, %vm5453
          %v5455 = vsel %vm5454, %v5446, %v5451
          %v5456 = vrsqrt.pop %v5404
          %v5457 = vmul.f32 %v5456, %v5404
          %v5458 = vmul.f32 %v5457, %v5456
          %v5459 = vmul.f32 0.5, %v5458
          %v5460 = vsub.f32 1.5, %v5459
          %v5461 = vmul.f32 %v5456, %v5460
          %vm5462 = vweird.f32 %v5404
          %vm5463 = vweird.f32 %v5456
          %vm5464 = vmor %vm5462, %vm5463
          %v5465 = vsel %vm5464, %v5456, %v5461
          %v5466 = vrsqrt.pop %v5405
          %v5467 = vmul.f32 %v5466, %v5405
          %v5468 = vmul.f32 %v5467, %v5466
          %v5469 = vmul.f32 0.5, %v5468
          %v5470 = vsub.f32 1.5, %v5469
          %v5471 = vmul.f32 %v5466, %v5470
          %vm5472 = vweird.f32 %v5405
          %vm5473 = vweird.f32 %v5466
          %vm5474 = vmor %vm5472, %vm5473
          %v5475 = vsel %vm5474, %v5466, %v5471
          %v5476 = vrsqrt.pop %v5406
          %v5477 = vmul.f32 %v5476, %v5406
          %v5478 = vmul.f32 %v5477, %v5476
          %v5479 = vmul.f32 0.5, %v5478
          %v5480 = vsub.f32 1.5, %v5479
          %v5481 = vmul.f32 %v5476, %v5480
          %vm5482 = vweird.f32 %v5406
          %vm5483 = vweird.f32 %v5476
          %vm5484 = vmor %vm5482, %vm5483
          %v5485 = vsel %vm5484, %v5476, %v5481
          %v5486 = vrsqrt.pop %v5407
          %v5487 = vmul.f32 %v5486, %v5407
          %v5488 = vmul.f32 %v5487, %v5486
          %v5489 = vmul.f32 0.5, %v5488
          %v5490 = vsub.f32 1.5, %v5489
          %v5491 = vmul.f32 %v5486, %v5490
          %vm5492 = vweird.f32 %v5407
          %vm5493 = vweird.f32 %v5486
          %vm5494 = vmor %vm5492, %vm5493
          %v5495 = vsel %vm5494, %v5486, %v5491
          %v5496 = vrsqrt.pop %v5408
          %v5497 = vmul.f32 %v5496, %v5408
          %v5498 = vmul.f32 %v5497, %v5496
          %v5499 = vmul.f32 0.5, %v5498
          %v5500 = vsub.f32 1.5, %v5499
          %v5501 = vmul.f32 %v5496, %v5500
          %vm5502 = vweird.f32 %v5408
          %vm5503 = vweird.f32 %v5496
          %vm5504 = vmor %vm5502, %vm5503
          %v5505 = vsel %vm5504, %v5496, %v5501
          %v5506 = vrsqrt.pop %v5409
          %v5507 = vmul.f32 %v5506, %v5409
          %v5508 = vmul.f32 %v5507, %v5506
          %v5509 = vmul.f32 0.5, %v5508
          %v5510 = vsub.f32 1.5, %v5509
          %v5511 = vmul.f32 %v5506, %v5510
          %vm5512 = vweird.f32 %v5409
          %vm5513 = vweird.f32 %v5506
          %vm5514 = vmor %vm5512, %vm5513
          %v5515 = vsel %vm5514, %v5506, %v5511
          %v5516 = vrsqrt.pop %v5410
          %v5517 = vmul.f32 %v5516, %v5410
          %v5518 = vmul.f32 %v5517, %v5516
          %v5519 = vmul.f32 0.5, %v5518
          %v5520 = vsub.f32 1.5, %v5519
          %v5521 = vmul.f32 %v5516, %v5520
          %vm5522 = vweird.f32 %v5410
          %vm5523 = vweird.f32 %v5516
          %vm5524 = vmor %vm5522, %vm5523
          %v5525 = vsel %vm5524, %v5516, %v5521
          %v5526 = vrsqrt.pop %v5411
          %v5527 = vmul.f32 %v5526, %v5411
          %v5528 = vmul.f32 %v5527, %v5526
          %v5529 = vmul.f32 0.5, %v5528
          %v5530 = vsub.f32 1.5, %v5529
          %v5531 = vmul.f32 %v5526, %v5530
          %vm5532 = vweird.f32 %v5411
          %vm5533 = vweird.f32 %v5526
          %vm5534 = vmor %vm5532, %vm5533
          %v5535 = vsel %vm5534, %v5526, %v5531
          %v5536 = vrsqrt.pop %v5412
          %v5537 = vmul.f32 %v5536, %v5412
          %v5538 = vmul.f32 %v5537, %v5536
          %v5539 = vmul.f32 0.5, %v5538
          %v5540 = vsub.f32 1.5, %v5539
          %v5541 = vmul.f32 %v5536, %v5540
          %vm5542 = vweird.f32 %v5412
          %vm5543 = vweird.f32 %v5536
          %vm5544 = vmor %vm5542, %vm5543
          %v5545 = vsel %vm5544, %v5536, %v5541
          %v5546 = vrsqrt.pop %v5413
          %v5547 = vmul.f32 %v5546, %v5413
          %v5548 = vmul.f32 %v5547, %v5546
          %v5549 = vmul.f32 0.5, %v5548
          %v5550 = vsub.f32 1.5, %v5549
          %v5551 = vmul.f32 %v5546, %v5550
          %vm5552 = vweird.f32 %v5413
          %vm5553 = vweird.f32 %v5546
          %vm5554 = vmor %vm5552, %vm5553
          %v5555 = vsel %vm5554, %v5546, %v5551
          %v5556 = vrsqrt.pop %v5414
          %v5557 = vmul.f32 %v5556, %v5414
          %v5558 = vmul.f32 %v5557, %v5556
          %v5559 = vmul.f32 0.5, %v5558
          %v5560 = vsub.f32 1.5, %v5559
          %v5561 = vmul.f32 %v5556, %v5560
          %vm5562 = vweird.f32 %v5414
          %vm5563 = vweird.f32 %v5556
          %vm5564 = vmor %vm5562, %vm5563
          %v5565 = vsel %vm5564, %v5556, %v5561
          %v5566 = vrsqrt.pop %v5415
          %v5567 = vmul.f32 %v5566, %v5415
          %v5568 = vmul.f32 %v5567, %v5566
          %v5569 = vmul.f32 0.5, %v5568
          %v5570 = vsub.f32 1.5, %v5569
          %v5571 = vmul.f32 %v5566, %v5570
          %vm5572 = vweird.f32 %v5415
          %vm5573 = vweird.f32 %v5566
          %vm5574 = vmor %vm5572, %vm5573
          %v5575 = vsel %vm5574, %v5566, %v5571
          %v5576 = vmul.f32 %v5320, %v5425
          %v5577 = vmul.f32 %v5321, %v5435
          %v5578 = vmul.f32 %v5322, %v5445
          %v5579 = vmul.f32 %v5323, %v5455
          %v5580 = vmul.f32 %v5324, %v5465
          %v5581 = vmul.f32 %v5325, %v5475
          %v5582 = vmul.f32 %v5326, %v5485
          %v5583 = vmul.f32 %v5327, %v5495
          %v5584 = vmul.f32 %v5328, %v5505
          %v5585 = vmul.f32 %v5329, %v5515
          %v5586 = vmul.f32 %v5330, %v5525
          %v5587 = vmul.f32 %v5331, %v5535
          %v5588 = vmul.f32 %v5332, %v5545
          %v5589 = vmul.f32 %v5333, %v5555
          %v5590 = vmul.f32 %v5334, %v5565
          %v5591 = vmul.f32 %v5335, %v5575
          %v5593 = vperm.slane %v5270, 0
          %v5595 = vmul.f32 %v5576, %v5593
          %v5596 = vmul.f32 %v5577, %v5593
          %v5597 = vmul.f32 %v5578, %v5593
          %v5598 = vmul.f32 %v5579, %v5593
          %v5599 = vmul.f32 %v5580, %v5593
          %v5600 = vmul.f32 %v5581, %v5593
          %v5601 = vmul.f32 %v5582, %v5593
          %v5602 = vmul.f32 %v5583, %v5593
          %v5603 = vmul.f32 %v5584, %v5593
          %v5604 = vmul.f32 %v5585, %v5593
          %v5605 = vmul.f32 %v5586, %v5593
          %v5606 = vmul.f32 %v5587, %v5593
          %v5607 = vmul.f32 %v5588, %v5593
          %v5608 = vmul.f32 %v5589, %v5593
          %v5609 = vmul.f32 %v5590, %v5593
          %v5610 = vmul.f32 %v5591, %v5593
          %v5612 = vperm.slane %v5271, 0
          %v5614 = vadd.f32 %v5595, %v5612
          %v5615 = vadd.f32 %v5596, %v5612
          %v5616 = vadd.f32 %v5597, %v5612
          %v5617 = vadd.f32 %v5598, %v5612
          %v5618 = vadd.f32 %v5599, %v5612
          %v5619 = vadd.f32 %v5600, %v5612
          %v5620 = vadd.f32 %v5601, %v5612
          %v5621 = vadd.f32 %v5602, %v5612
          %v5622 = vadd.f32 %v5603, %v5612
          %v5623 = vadd.f32 %v5604, %v5612
          %v5624 = vadd.f32 %v5605, %v5612
          %v5625 = vadd.f32 %v5606, %v5612
          %v5626 = vadd.f32 %v5607, %v5612
          %v5627 = vadd.f32 %v5608, %v5612
          %v5628 = vadd.f32 %v5609, %v5612
          %v5629 = vadd.f32 %v5610, %v5612
          %5630 = vst [vmem:[#allocation21] sm:$0xff] %v5614
          %5631 = vst [vmem:[#allocation21 + $0x8] sm:$0xff] %v5615
          %5632 = vst [vmem:[#allocation21 + $0x10] sm:$0xff] %v5616
          %5633 = vst [vmem:[#allocation21 + $0x18] sm:$0xff] %v5617
          %5634 = vst [vmem:[#allocation21 + $0x20] sm:$0xff] %v5618
          %5635 = vst [vmem:[#allocation21 + $0x28] sm:$0xff] %v5619
          %5636 = vst [vmem:[#allocation21 + $0x30] sm:$0xff] %v5620
          %5637 = vst [vmem:[#allocation21 + $0x38] sm:$0xff] %v5621
          %5638 = vst [vmem:[#allocation21 + $0x40] sm:$0xff] %v5622
          %5639 = vst [vmem:[#allocation21 + $0x48] sm:$0xff] %v5623
          %5640 = vst [vmem:[#allocation21 + $0x50] sm:$0xff] %v5624
          %5641 = vst [vmem:[#allocation21 + $0x58] sm:$0xff] %v5625
          %5642 = vst [vmem:[#allocation21 + $0x60] sm:$0xff] %v5626
          %5643 = vst [vmem:[#allocation21 + $0x68] sm:$0xff] %v5627
          %5644 = vst [vmem:[#allocation21 + $0x70] sm:$0xff] %v5628
          %5645 = vst [vmem:[#allocation21 + $0x78] sm:$0xff] %v5629
        $region152: #{tpu_custom_call.1} parent=99 // pred_fallthru
          _
        // Predicated region
        $region153: #{tpu_custom_call.1} parent=99 // pred_check
          %p5646 = pneg %p583
        $region154: #{tpu_custom_call.1} parent=99 // pred_check_branch
          %5648 = sbr.rel (%p5646) target = $region156
        $region155: #{tpu_custom_call.1} parent=99 // pred_region
          %5650 = vsyncadd [#allocation5], 0
          %s5651 = smul.addr %s52, 16
          %s5652 = smul.addr %s5651, 8
          %s5653 = scalar_lea.hbm %s20, %s5652
          %s5654 = sshll.u32 [#allocation21], 4
          %s5655 = int_to_ptr.vmem [resolvable:$true] %s5654
          %s5656 = sshll.u32 %s5653, 4
          %s5657 = int_to_ptr.hbm [resolvable:$true] %s5656
          %5662 = dma.vmem_to_hbm [thread:$0]  %s5655, 2048, %s5657, [#allocation5], 128, 128, 8
        $region156: #{tpu_custom_call.1} parent=99 // pred_fallthru
          _
        // Predicated region
        $region157: #{tpu_custom_call.1} parent=99 // pred_check
          %p5663 = pneg %p583
        $region158: #{tpu_custom_call.1} parent=99 // pred_check_branch
          %5665 = sbr.rel (%p5663) target = $region160
        $region159: #{tpu_custom_call.1} parent=99 // pred_region
          %5667 = dma.done [#allocation5], 2048
        $region160: #{tpu_custom_call.1} parent=99 // pred_fallthru
          _
      $region100: #{tpu_custom_call.1} parent=5 // pred_fallthru
        _
      %p5668 = scmp.le.s32.totalorder 2, %s43
      // Predicated region
      $region161: #{tpu_custom_call.1} parent=5 // pred_check
        %p5669 = pneg %p5668
      $region162: #{tpu_custom_call.1} parent=5 // pred_check_branch
        %5671 = sbr.rel (%p5669) target = $region164
      $region163: #{tpu_custom_call.1} parent=5 // pred_region
        %s5672 = ssub.s32 %s43, 2
      $region164: #{tpu_custom_call.1} parent=5 // pred_fallthru
        _
    $region6: #{tpu_custom_call.1} parent=1 // loop_footer
      %s47 = sadd.s32 1, %s43
    $region7: #{tpu_custom_call.1} parent=1 // loop_footer_branch
      %42 = sbr.rel target = $region3
    $region8: #{tpu_custom_call.1} parent=1 // loop_exit
      _
    %5673 = vsyncpa [#allocation4], 1
    %s5674 = scalar_lea.sflag [#allocation4], 1
    %5675 = vsyncpa %s5674, 1
    %5676 = vsyncpa [#allocation7], 1
    %s5677 = scalar_lea.sflag [#allocation7], 1
    %5678 = vsyncpa %s5677, 1
    %5679 = vsyncpa [#allocation10], 1
    %s5680 = scalar_lea.sflag [#allocation10], 1
    %5681 = vsyncpa %s5680, 1
    %5682 = vsyncpa [#allocation13], 1
    %s5683 = scalar_lea.sflag [#allocation13], 1
    %5684 = vsyncpa %s5683, 1
    %5685 = vsyncpa [#allocation16], 1
    %s5686 = scalar_lea.sflag [#allocation16], 1
    %5687 = vsyncpa %s5686, 1
    %5688 = vsyncpa [#allocation19], 1
    %s5689 = scalar_lea.sflag [#allocation19], 1
    %5690 = vsyncpa %s5689, 1
    %5691 = vsyncpa [#allocation5], 1
    %s5692 = scalar_lea.sflag [#allocation5], 1
    %5693 = vsyncpa %s5692, 1

</llo_original>
